<compile_context>
chip_gen: v5e
topology: v5e:2x2
jax: 0.10.0
libtpu: 0.0.40
codegen_flags: <defaults>
</compile_context>

<pallas_src>
import math

import jax
import jax.numpy as jnp
from jax.experimental import pallas as pl
from jax.experimental.pallas import tpu as pltpu


# ----------------------------------------------------------------------------
# Kernel
# ----------------------------------------------------------------------------
def _pad_hw1(x):
    """Zero-pad a (H, W, C) value by 1 on each spatial side -> (H+2, W+2, C)."""
    H, W, C = x.shape
    zr = jnp.zeros((1, W, C), x.dtype)
    xp = jnp.concatenate([zr, x, zr], axis=0)          # pad H (major dim, cheap)
    zc = jnp.zeros((H + 2, 1, C), x.dtype)
    return jnp.concatenate([zc, xp, zc], axis=1)       # pad W


def _conv3x3_bn_relu(xp, w_ref, sb_ref):
    """3x3 conv (stride 1) + folded BN affine + ReLU on a padded tile.

    xp:     (H+2, W+2, C)  bf16, spatially pre-padded
    w_ref:  (9*C, Cout)    bf16, tap-major weights (tap = dy*3 + dx)
    sb_ref: (2, Cout)      f32, row 0 = scale, row 1 = bias
    returns (H*W, Cout)    f32
    """
    Hp, Wp, C = xp.shape
    H, W = Hp - 2, Wp - 2
    M = H * W
    Cout = w_ref.shape[-1]
    taps = [(dy, dx) for dy in range(3) for dx in range(3)]

    if C < 128:
        # Fold the 9 taps into the contraction (K = 9*C) -> one MXU matmul.
        cols = [xp[dy:dy + H, dx:dx + W, :].reshape(M, C) for dy, dx in taps]
        patch = jnp.concatenate(cols, axis=-1)                       # (M, 9*C)
        acc = jnp.dot(patch, w_ref[...], preferred_element_type=jnp.float32)
    else:
        # Per-tap K >= 128 already keeps the MXU fed; accumulate in f32.
        acc = jnp.zeros((M, Cout), jnp.float32)
        for t, (dy, dx) in enumerate(taps):
            patch = xp[dy:dy + H, dx:dx + W, :].reshape(M, C)
            acc = acc + jnp.dot(patch, w_ref[t * C:(t + 1) * C, :],
                                preferred_element_type=jnp.float32)

    sb = sb_ref[...]
    y = acc * sb[0:1, :] + sb[1:2, :]        # folded BatchNorm (eval mode), f32
    return jnp.maximum(y, 0.0)               # ReLU (f32 epilogue; v5e-safe)


def _make_block_kernel(H, W, Cin, Cout, with_pool):
    """Fused VGG block: conv-bn-relu x2 (+ optional 2x2 maxpool) per image."""

    def kernel(x_ref, w1_ref, sb1_ref, w2_ref, sb2_ref, *out_refs):
        o_ref = out_refs[0]

        # conv1: pad inside the kernel (no HBM round-trip for padding).
        xp1 = _pad_hw1(x_ref[0])                               # (H+2, W+2, Cin) bf16
        y1 = _conv3x3_bn_relu(xp1, w1_ref, sb1_ref)            # (H*W, Cout) f32

        # conv2: intermediate stays in VMEM, cast to bf16 for the MXU.
        xp2 = _pad_hw1(y1.astype(jnp.bfloat16).reshape(H, W, Cout))
        y2 = _conv3x3_bn_relu(xp2, w2_ref, sb2_ref)            # (H*W, Cout) f32

        o_ref[...] = y2.reshape(1, H, W, Cout).astype(o_ref.dtype)

        if with_pool:
            p_ref = out_refs[1]
            # 2x2 maxpool, stride 2: reshape + pairwise max (lane-dense stores).
            y4 = y2.reshape(H // 2, 2, W, Cout)
            a = jnp.maximum(y4[:, 0, :, :], y4[:, 1, :, :])    # pool H
            b = a.reshape(H // 2, W // 2, 2, Cout)
            pooled = jnp.maximum(b[:, :, 0, :], b[:, :, 1, :])  # pool W
            p_ref[...] = pooled.reshape(1, H // 2, W // 2, Cout).astype(p_ref.dtype)

    return kernel


# ----------------------------------------------------------------------------
# Wrapper
# ----------------------------------------------------------------------------
def vgg_block(x_nhwc, conv_a, conv_b, with_pool):
    """One VGG block: (conv+BN+ReLU) x2, optionally followed by 2x2 maxpool.

    x_nhwc: (B, H, W, Cin) bf16
    returns y (B, H, W, Cout) f32   [xlist entry]
            and, if with_pool, pooled (B, H/2, W/2, Cout) bf16.
    """
    B, H, W, Cin = x_nhwc.shape
    w1, sb1 = conv_a
    w2, sb2 = conv_b
    Cout = w1.shape[-1]

    kernel = _make_block_kernel(H, W, Cin, Cout, with_pool)

    out_shape = [jax.ShapeDtypeStruct((B, H, W, Cout), jnp.float32)]
    out_specs = [pl.BlockSpec((1, H, W, Cout), lambda b: (b, 0, 0, 0))]
    if with_pool:
        out_shape.append(
            jax.ShapeDtypeStruct((B, H // 2, W // 2, Cout), jnp.bfloat16))
        out_specs.append(
            pl.BlockSpec((1, H // 2, W // 2, Cout), lambda b: (b, 0, 0, 0)))

    outs = pl.pallas_call(
        kernel,
        out_shape=tuple(out_shape),
        grid=(B,),
        in_specs=[
            pl.BlockSpec((1, H, W, Cin), lambda b: (b, 0, 0, 0)),
            pl.BlockSpec(w1.shape, lambda b: (0, 0)),   # weights stay resident
            pl.BlockSpec(sb1.shape, lambda b: (0, 0)),
            pl.BlockSpec(w2.shape, lambda b: (0, 0)),
            pl.BlockSpec(sb2.shape, lambda b: (0, 0)),
        ],
        out_specs=tuple(out_specs),
        compiler_params=pltpu.CompilerParams(
            dimension_semantics=("parallel",),          # batch steps independent
            vmem_limit_bytes=48 * 1024 * 1024,          # <= v7x 64 MiB physical
        ),
    )(x_nhwc, w1, sb1, w2, sb2)

    if with_pool:
        return outs[0], outs[1]
    return outs[0]


# ----------------------------------------------------------------------------
# Parameter init (deterministic, mirrors nn.Conv2d / nn.BatchNorm2d shapes)
# ----------------------------------------------------------------------------
def init_vgg_params(key, input_channel):
    layers = [64, 128, 256, 512]
    eps = 1e-5
    params = []
    cin = input_channel
    for cout in layers:
        convs = []
        for _ in range(2):  # _conv() builds 2x (Conv2d + BN + ReLU)
            key, k1, k2, k3, k4, k5 = jax.random.split(key, 6)
            # PyTorch conv weight shape (Cout, Cin, 3, 3), bias=False.
            w = jax.random.normal(k1, (cout, cin, 3, 3), jnp.float32)
            w = w * (1.0 / math.sqrt(cin * 9))
            gamma = 1.0 + 0.1 * jax.random.normal(k2, (cout,), jnp.float32)
            beta = 0.1 * jax.random.normal(k3, (cout,), jnp.float32)
            rmean = 0.1 * jax.random.normal(k4, (cout,), jnp.float32)
            rvar = 1.0 + 0.1 * jax.random.uniform(k5, (cout,), jnp.float32)
            scale = gamma / jnp.sqrt(rvar + eps)
            bias = beta - rmean * scale
            # Tap-major weights (9*Cin, Cout), bf16 for the MXU.
            wk = jnp.transpose(w, (2, 3, 1, 0)).reshape(9 * cin, cout)
            wk = wk.astype(jnp.bfloat16)
            sb = jnp.stack([scale, bias], axis=0)        # (2, Cout) f32
            convs.append((wk, sb))
            cin = cout
        params.append(tuple(convs))
    return params


# ----------------------------------------------------------------------------
# Forward (mirrors VGGnet.forward: returns xlist of 5 NCHW tensors)
# ----------------------------------------------------------------------------
def vggnet_forward(x_nchw, params):
    x = jnp.transpose(x_nchw, (0, 2, 3, 1)).astype(jnp.bfloat16)  # NCHW -> NHWC
    xlist = [x_nchw]
    last = len(params) - 1
    for bi, (conv_a, conv_b) in enumerate(params):
        if bi < last:                                   # maxp4 is unused in forward
            y, x = vgg_block(x, conv_a, conv_b, with_pool=True)
        else:
            y = vgg_block(x, conv_a, conv_b, with_pool=False)
        xlist.append(jnp.transpose(y, (0, 3, 1, 2)))    # NHWC -> NCHW
    return xlist


if __name__ == "__main__":
    key = jax.random.PRNGKey(0)
    k_x, k_p = jax.random.split(key)

    B, C, HW = 2, 4, 16
    x = jax.random.normal(k_x, (B, C, HW, HW), jnp.float32)
    params = init_vgg_params(k_p, input_channel=C)

    outs = vggnet_forward(x, params)
    for o in outs:
        jax.block_until_ready(o)

    # sanity: shapes match the PyTorch module's xlist
    expected = [(2, 4, 16, 16), (2, 64, 16, 16), (2, 128, 8, 8),
                (2, 256, 4, 4), (2, 512, 2, 2)]
    assert [tuple(o.shape) for o in outs] == expected
    assert all(bool(jnp.all(jnp.isfinite(o))) for o in outs)

    print("KERNEL_OK")
</pallas_src>

<mosaic_0001>
module attributes {stable_mosaic.version = 11 : i64} {
  func.func @kernel(%arg0: i32, %arg1: memref<1x16x16x4xbf16, #tpu.memory_space<vmem>>, %arg2: memref<36x64xbf16, #tpu.memory_space<vmem>>, %arg3: memref<2x64xf32, #tpu.memory_space<vmem>>, %arg4: memref<576x64xbf16, #tpu.memory_space<vmem>>, %arg5: memref<2x64xf32, #tpu.memory_space<vmem>>, %arg6: memref<1x16x16x64xf32, #tpu.memory_space<vmem>>, %arg7: memref<1x8x8x64xbf16, #tpu.memory_space<vmem>>) attributes {dimension_semantics = [#tpu.dimension_semantics<parallel>], iteration_bounds = array<i64: 2>, scalar_prefetch = 0 : i64, scratch_operands = 0 : i64, tpu.core_type = #tpu.core_type<tc>, window_params = [{transform_indices = @transform_0, window_bounds = array<i64: 1, 16, 16, 4>}, {pipeline_mode = #tpu.pipeline_mode<synchronous>, transform_indices = @transform_1, window_bounds = array<i64: 36, 64>}, {pipeline_mode = #tpu.pipeline_mode<synchronous>, transform_indices = @transform_2, window_bounds = array<i64: 2, 64>}, {pipeline_mode = #tpu.pipeline_mode<synchronous>, transform_indices = @transform_3, window_bounds = array<i64: 576, 64>}, {pipeline_mode = #tpu.pipeline_mode<synchronous>, transform_indices = @transform_4, window_bounds = array<i64: 2, 64>}, {transform_indices = @transform_5, window_bounds = array<i64: 1, 16, 16, 64>}, {transform_indices = @transform_6, window_bounds = array<i64: 1, 8, 8, 64>}]} {
    %c0 = arith.constant 0 : index
    %c0_0 = arith.constant 0 : index
    %c0_1 = arith.constant 0 : index
    %c0_2 = arith.constant 0 : index
    %0 = vector.load %arg1[%c0, %c0_0, %c0_1, %c0_2] : memref<1x16x16x4xbf16, #tpu.memory_space<vmem>>, vector<1x16x16x4xbf16>
    %1 = vector.shape_cast %0 : vector<1x16x16x4xbf16> to vector<16x16x4xbf16>
    %cst = arith.constant 0.000000e+00 : bf16
    %2 = vector.broadcast %cst : bf16 to vector<1x16x4xbf16>
    %3 = tpu.concatenate %2, %1, %2 in 0 : vector<1x16x4xbf16>, vector<16x16x4xbf16>, vector<1x16x4xbf16> -> vector<18x16x4xbf16>
    %cst_3 = arith.constant 0.000000e+00 : bf16
    %4 = vector.broadcast %cst_3 : bf16 to vector<18x1x4xbf16>
    %5 = tpu.concatenate %4, %3, %4 in 1 : vector<18x1x4xbf16>, vector<18x16x4xbf16>, vector<18x1x4xbf16> -> vector<18x18x4xbf16>
    %6 = vector.extract_strided_slice %5 {offsets = [0, 0, 0], sizes = [16, 16, 4], strides = [1, 1, 1]} : vector<18x18x4xbf16> to vector<16x16x4xbf16>
    %7 = vector.shape_cast %6 : vector<16x16x4xbf16> to vector<256x4xbf16>
    %8 = vector.extract_strided_slice %5 {offsets = [0, 1, 0], sizes = [16, 16, 4], strides = [1, 1, 1]} : vector<18x18x4xbf16> to vector<16x16x4xbf16>
    %9 = vector.shape_cast %8 : vector<16x16x4xbf16> to vector<256x4xbf16>
    %10 = vector.extract_strided_slice %5 {offsets = [0, 2, 0], sizes = [16, 16, 4], strides = [1, 1, 1]} : vector<18x18x4xbf16> to vector<16x16x4xbf16>
    %11 = vector.shape_cast %10 : vector<16x16x4xbf16> to vector<256x4xbf16>
    %12 = vector.extract_strided_slice %5 {offsets = [1, 0, 0], sizes = [16, 16, 4], strides = [1, 1, 1]} : vector<18x18x4xbf16> to vector<16x16x4xbf16>
    %13 = vector.shape_cast %12 : vector<16x16x4xbf16> to vector<256x4xbf16>
    %14 = vector.extract_strided_slice %5 {offsets = [1, 1, 0], sizes = [16, 16, 4], strides = [1, 1, 1]} : vector<18x18x4xbf16> to vector<16x16x4xbf16>
    %15 = vector.shape_cast %14 : vector<16x16x4xbf16> to vector<256x4xbf16>
    %16 = vector.extract_strided_slice %5 {offsets = [1, 2, 0], sizes = [16, 16, 4], strides = [1, 1, 1]} : vector<18x18x4xbf16> to vector<16x16x4xbf16>
    %17 = vector.shape_cast %16 : vector<16x16x4xbf16> to vector<256x4xbf16>
    %18 = vector.extract_strided_slice %5 {offsets = [2, 0, 0], sizes = [16, 16, 4], strides = [1, 1, 1]} : vector<18x18x4xbf16> to vector<16x16x4xbf16>
    %19 = vector.shape_cast %18 : vector<16x16x4xbf16> to vector<256x4xbf16>
    %20 = vector.extract_strided_slice %5 {offsets = [2, 1, 0], sizes = [16, 16, 4], strides = [1, 1, 1]} : vector<18x18x4xbf16> to vector<16x16x4xbf16>
    %21 = vector.shape_cast %20 : vector<16x16x4xbf16> to vector<256x4xbf16>
    %22 = vector.extract_strided_slice %5 {offsets = [2, 2, 0], sizes = [16, 16, 4], strides = [1, 1, 1]} : vector<18x18x4xbf16> to vector<16x16x4xbf16>
    %23 = vector.shape_cast %22 : vector<16x16x4xbf16> to vector<256x4xbf16>
    %24 = tpu.concatenate %7, %9, %11, %13, %15, %17, %19, %21, %23 in 1 : vector<256x4xbf16>, vector<256x4xbf16>, vector<256x4xbf16>, vector<256x4xbf16>, vector<256x4xbf16>, vector<256x4xbf16>, vector<256x4xbf16>, vector<256x4xbf16>, vector<256x4xbf16> -> vector<256x36xbf16>
    %c0_4 = arith.constant 0 : index
    %c0_5 = arith.constant 0 : index
    %25 = vector.load %arg2[%c0_4, %c0_5] : memref<36x64xbf16, #tpu.memory_space<vmem>>, vector<36x64xbf16>
    %cst_6 = arith.constant dense<0.000000e+00> : vector<256x64xf32>
    %26 = tpu.matmul %24, %25, %cst_6 {dimension_numbers = #tpu.dot_dimension_numbers<[1], [0], [0], [1], [0, 0, 1, 1], [], []>} : vector<256x36xbf16>, vector<36x64xbf16>, vector<256x64xf32> -> vector<256x64xf32>
    %c0_7 = arith.constant 0 : index
    %c0_8 = arith.constant 0 : index
    %27 = vector.load %arg3[%c0_7, %c0_8] : memref<2x64xf32, #tpu.memory_space<vmem>>, vector<2x64xf32>
    %28 = vector.extract_strided_slice %27 {offsets = [0, 0], sizes = [1, 64], strides = [1, 1]} : vector<2x64xf32> to vector<1x64xf32>
    %29 = vector.broadcast %28 : vector<1x64xf32> to vector<256x64xf32>
    %30 = arith.mulf %26, %29 : vector<256x64xf32>
    %31 = vector.extract_strided_slice %27 {offsets = [1, 0], sizes = [1, 64], strides = [1, 1]} : vector<2x64xf32> to vector<1x64xf32>
    %32 = vector.broadcast %31 : vector<1x64xf32> to vector<256x64xf32>
    %33 = arith.addf %30, %32 : vector<256x64xf32>
    %cst_9 = arith.constant 0.000000e+00 : f32
    %34 = vector.broadcast %cst_9 : f32 to vector<256x64xf32>
    %35 = arith.maximumf %33, %34 : vector<256x64xf32>
    %36 = arith.truncf %35 : vector<256x64xf32> to vector<256x64xbf16>
    %37 = vector.shape_cast %36 : vector<256x64xbf16> to vector<16x16x64xbf16>
    %cst_10 = arith.constant 0.000000e+00 : bf16
    %38 = vector.broadcast %cst_10 : bf16 to vector<1x16x64xbf16>
    %39 = tpu.concatenate %38, %37, %38 in 0 : vector<1x16x64xbf16>, vector<16x16x64xbf16>, vector<1x16x64xbf16> -> vector<18x16x64xbf16>
    %cst_11 = arith.constant 0.000000e+00 : bf16
    %40 = vector.broadcast %cst_11 : bf16 to vector<18x1x64xbf16>
    %41 = tpu.concatenate %40, %39, %40 in 1 : vector<18x1x64xbf16>, vector<18x16x64xbf16>, vector<18x1x64xbf16> -> vector<18x18x64xbf16>
    %42 = vector.extract_strided_slice %41 {offsets = [0, 0, 0], sizes = [16, 16, 64], strides = [1, 1, 1]} : vector<18x18x64xbf16> to vector<16x16x64xbf16>
    %43 = vector.shape_cast %42 : vector<16x16x64xbf16> to vector<256x64xbf16>
    %44 = vector.extract_strided_slice %41 {offsets = [0, 1, 0], sizes = [16, 16, 64], strides = [1, 1, 1]} : vector<18x18x64xbf16> to vector<16x16x64xbf16>
    %45 = vector.shape_cast %44 : vector<16x16x64xbf16> to vector<256x64xbf16>
    %46 = vector.extract_strided_slice %41 {offsets = [0, 2, 0], sizes = [16, 16, 64], strides = [1, 1, 1]} : vector<18x18x64xbf16> to vector<16x16x64xbf16>
    %47 = vector.shape_cast %46 : vector<16x16x64xbf16> to vector<256x64xbf16>
    %48 = vector.extract_strided_slice %41 {offsets = [1, 0, 0], sizes = [16, 16, 64], strides = [1, 1, 1]} : vector<18x18x64xbf16> to vector<16x16x64xbf16>
    %49 = vector.shape_cast %48 : vector<16x16x64xbf16> to vector<256x64xbf16>
    %50 = vector.extract_strided_slice %41 {offsets = [1, 1, 0], sizes = [16, 16, 64], strides = [1, 1, 1]} : vector<18x18x64xbf16> to vector<16x16x64xbf16>
    %51 = vector.shape_cast %50 : vector<16x16x64xbf16> to vector<256x64xbf16>
    %52 = vector.extract_strided_slice %41 {offsets = [1, 2, 0], sizes = [16, 16, 64], strides = [1, 1, 1]} : vector<18x18x64xbf16> to vector<16x16x64xbf16>
    %53 = vector.shape_cast %52 : vector<16x16x64xbf16> to vector<256x64xbf16>
    %54 = vector.extract_strided_slice %41 {offsets = [2, 0, 0], sizes = [16, 16, 64], strides = [1, 1, 1]} : vector<18x18x64xbf16> to vector<16x16x64xbf16>
    %55 = vector.shape_cast %54 : vector<16x16x64xbf16> to vector<256x64xbf16>
    %56 = vector.extract_strided_slice %41 {offsets = [2, 1, 0], sizes = [16, 16, 64], strides = [1, 1, 1]} : vector<18x18x64xbf16> to vector<16x16x64xbf16>
    %57 = vector.shape_cast %56 : vector<16x16x64xbf16> to vector<256x64xbf16>
    %58 = vector.extract_strided_slice %41 {offsets = [2, 2, 0], sizes = [16, 16, 64], strides = [1, 1, 1]} : vector<18x18x64xbf16> to vector<16x16x64xbf16>
    %59 = vector.shape_cast %58 : vector<16x16x64xbf16> to vector<256x64xbf16>
    %60 = tpu.concatenate %43, %45, %47, %49, %51, %53, %55, %57, %59 in 1 : vector<256x64xbf16>, vector<256x64xbf16>, vector<256x64xbf16>, vector<256x64xbf16>, vector<256x64xbf16>, vector<256x64xbf16>, vector<256x64xbf16>, vector<256x64xbf16>, vector<256x64xbf16> -> vector<256x576xbf16>
    %c0_12 = arith.constant 0 : index
    %c0_13 = arith.constant 0 : index
    %61 = vector.load %arg4[%c0_12, %c0_13] : memref<576x64xbf16, #tpu.memory_space<vmem>>, vector<576x64xbf16>
    %cst_14 = arith.constant dense<0.000000e+00> : vector<256x64xf32>
    %62 = tpu.matmul %60, %61, %cst_14 {dimension_numbers = #tpu.dot_dimension_numbers<[1], [0], [0], [1], [0, 0, 1, 1], [], []>} : vector<256x576xbf16>, vector<576x64xbf16>, vector<256x64xf32> -> vector<256x64xf32>
    %c0_15 = arith.constant 0 : index
    %c0_16 = arith.constant 0 : index
    %63 = vector.load %arg5[%c0_15, %c0_16] : memref<2x64xf32, #tpu.memory_space<vmem>>, vector<2x64xf32>
    %64 = vector.extract_strided_slice %63 {offsets = [0, 0], sizes = [1, 64], strides = [1, 1]} : vector<2x64xf32> to vector<1x64xf32>
    %65 = vector.broadcast %64 : vector<1x64xf32> to vector<256x64xf32>
    %66 = arith.mulf %62, %65 : vector<256x64xf32>
    %67 = vector.extract_strided_slice %63 {offsets = [1, 0], sizes = [1, 64], strides = [1, 1]} : vector<2x64xf32> to vector<1x64xf32>
    %68 = vector.broadcast %67 : vector<1x64xf32> to vector<256x64xf32>
    %69 = arith.addf %66, %68 : vector<256x64xf32>
    %cst_17 = arith.constant 0.000000e+00 : f32
    %70 = vector.broadcast %cst_17 : f32 to vector<256x64xf32>
    %71 = arith.maximumf %69, %70 : vector<256x64xf32>
    %72 = vector.shape_cast %71 : vector<256x64xf32> to vector<1x16x16x64xf32>
    %c0_18 = arith.constant 0 : index
    %c0_19 = arith.constant 0 : index
    %c0_20 = arith.constant 0 : index
    %c0_21 = arith.constant 0 : index
    %73 = vector.load %arg6[%c0_18, %c0_19, %c0_20, %c0_21] : memref<1x16x16x64xf32, #tpu.memory_space<vmem>>, vector<1x16x16x64xf32>
    tpu.vector_store %arg6[%c0_18, %c0_19, %c0_20, %c0_21], %72 {strides = array<i32>} : memref<1x16x16x64xf32, #tpu.memory_space<vmem>>, vector<1x16x16x64xf32>,
    %74 = vector.shape_cast %71 : vector<256x64xf32> to vector<8x2x16x64xf32>
    %75 = vector.extract_strided_slice %74 {offsets = [0, 0, 0, 0], sizes = [8, 1, 16, 64], strides = [1, 1, 1, 1]} : vector<8x2x16x64xf32> to vector<8x1x16x64xf32>
    %76 = vector.shape_cast %75 : vector<8x1x16x64xf32> to vector<8x16x64xf32>
    %77 = vector.extract_strided_slice %74 {offsets = [0, 1, 0, 0], sizes = [8, 1, 16, 64], strides = [1, 1, 1, 1]} : vector<8x2x16x64xf32> to vector<8x1x16x64xf32>
    %78 = vector.shape_cast %77 : vector<8x1x16x64xf32> to vector<8x16x64xf32>
    %79 = arith.maximumf %76, %78 : vector<8x16x64xf32>
    %80 = vector.shape_cast %79 : vector<8x16x64xf32> to vector<8x8x2x64xf32>
    %81 = vector.extract_strided_slice %80 {offsets = [0, 0, 0, 0], sizes = [8, 8, 1, 64], strides = [1, 1, 1, 1]} : vector<8x8x2x64xf32> to vector<8x8x1x64xf32>
    %82 = vector.shape_cast %81 : vector<8x8x1x64xf32> to vector<8x8x64xf32>
    %83 = vector.extract_strided_slice %80 {offsets = [0, 0, 1, 0], sizes = [8, 8, 1, 64], strides = [1, 1, 1, 1]} : vector<8x8x2x64xf32> to vector<8x8x1x64xf32>
    %84 = vector.shape_cast %83 : vector<8x8x1x64xf32> to vector<8x8x64xf32>
    %85 = arith.maximumf %82, %84 : vector<8x8x64xf32>
    %86 = vector.shape_cast %85 : vector<8x8x64xf32> to vector<1x8x8x64xf32>
    %87 = arith.truncf %86 : vector<1x8x8x64xf32> to vector<1x8x8x64xbf16>
    %c0_22 = arith.constant 0 : index
    %c0_23 = arith.constant 0 : index
    %c0_24 = arith.constant 0 : index
    %c0_25 = arith.constant 0 : index
    %88 = vector.load %arg7[%c0_22, %c0_23, %c0_24, %c0_25] : memref<1x8x8x64xbf16, #tpu.memory_space<vmem>>, vector<1x8x8x64xbf16>
    tpu.vector_store %arg7[%c0_22, %c0_23, %c0_24, %c0_25], %87 {strides = array<i32>} : memref<1x8x8x64xbf16, #tpu.memory_space<vmem>>, vector<1x8x8x64xbf16>,
    return
  }
  func.func @transform_0(%arg0: i32) -> (i32, i32, i32, i32) {
    %c0_i32 = arith.constant 0 : i32
    %c0_i32_0 = arith.constant 0 : i32
    %c0_i32_1 = arith.constant 0 : i32
    %c0_i32_2 = arith.constant 0 : i32
    return %arg0, %c0_i32, %c0_i32_0, %c0_i32_1 : i32, i32, i32, i32
  }
  func.func @transform_1(%arg0: i32) -> (i32, i32) {
    %c0_i32 = arith.constant 0 : i32
    %c0_i32_0 = arith.constant 0 : i32
    %c0_i32_1 = arith.constant 0 : i32
    return %c0_i32, %c0_i32_0 : i32, i32
  }
  func.func @transform_2(%arg0: i32) -> (i32, i32) {
    %c0_i32 = arith.constant 0 : i32
    %c0_i32_0 = arith.constant 0 : i32
    %c0_i32_1 = arith.constant 0 : i32
    return %c0_i32, %c0_i32_0 : i32, i32
  }
  func.func @transform_3(%arg0: i32) -> (i32, i32) {
    %c0_i32 = arith.constant 0 : i32
    %c0_i32_0 = arith.constant 0 : i32
    %c0_i32_1 = arith.constant 0 : i32
    return %c0_i32, %c0_i32_0 : i32, i32
  }
  func.func @transform_4(%arg0: i32) -> (i32, i32) {
    %c0_i32 = arith.constant 0 : i32
    %c0_i32_0 = arith.constant 0 : i32
    %c0_i32_1 = arith.constant 0 : i32
    return %c0_i32, %c0_i32_0 : i32, i32
  }
  func.func @transform_5(%arg0: i32) -> (i32, i32, i32, i32) {
    %c0_i32 = arith.constant 0 : i32
    %c0_i32_0 = arith.constant 0 : i32
    %c0_i32_1 = arith.constant 0 : i32
    %c0_i32_2 = arith.constant 0 : i32
    return %arg0, %c0_i32, %c0_i32_0, %c0_i32_1 : i32, i32, i32, i32
  }
  func.func @transform_6(%arg0: i32) -> (i32, i32, i32, i32) {
    %c0_i32 = arith.constant 0 : i32
    %c0_i32_0 = arith.constant 0 : i32
    %c0_i32_1 = arith.constant 0 : i32
    %c0_i32_2 = arith.constant 0 : i32
    return %arg0, %c0_i32, %c0_i32_0, %c0_i32_1 : i32, i32, i32, i32
  }
}

</mosaic_0001>

<llo_original>
// kernel: tpu_custom_call.1
$region0: #{tpu_custom_call.1}
  #allocation0 [shape = 'u32[]', space=smem, size = 0x4, offset = 0x4, fixed_abs, tag = 'smem constant byte address 0x4 - core index']
  #allocation1 [shape = 'u32[72,128]{1,0:T(1,128)}', space=vmem, size = 0x9000, scoped, tag = 'internal scratch']
  %s0 = inlined_call_operand.vmem [shape: bf16[2,16,16,4], index: 0, kind: input, shape index: {}]
  %s1 = inlined_call_operand.vmem [shape: bf16[36,64], index: 1, kind: input, shape index: {}]
  %s2 = inlined_call_operand.vmem [shape: f32[2,64], index: 2, kind: input, shape index: {}]
  %s3 = inlined_call_operand.vmem [shape: bf16[576,64], index: 3, kind: input, shape index: {}]
  %s4 = inlined_call_operand.vmem [shape: f32[2,64], index: 4, kind: input, shape index: {}]
  %s5 = inlined_call_operand.hbm [shape: f32[2,16,16,64], index: 5, kind: output, shape index: {0}]
  %s6 = inlined_call_operand.hbm [shape: bf16[2,8,8,64], index: 6, kind: output, shape index: {1}]
  %7 = xla_tuple %s5, %s6
  %s8 = sld [smem:[#allocation0]]
  $region61: #{tpu_custom_call.1} parent=0
    _
  %s10 = ssub.s32 1, %s8
  %s11 = scalar_select 0, %s10, %s8
  $region1: #{tpu_custom_call.1} parent=0
    #allocation2 [shape = 'u8[262144]{0}', space=vmem, size = 0x40000, scoped, tag = 'output window, operand 0']
    #allocation3 [shape = 's32[2]{0}', space=sflag, size = 0x8, scoped, tag = 'scoped memory for tpu_custom_call.1']
    #allocation4 [shape = 'u8[32768]{0}', space=vmem, size = 0x8000, scoped, tag = 'output window, operand 1']
    #allocation5 [shape = 's32[2]{0}', space=sflag, size = 0x8, scoped, tag = 'scoped memory for tpu_custom_call.1']
    %12 = vsyncpa [#allocation3], 0
    %s13 = scalar_lea.sflag [#allocation3], 1
    %14 = vsyncpa %s13, 0
    %15 = vsyncpa [#allocation5], 0
    %s16 = scalar_lea.sflag [#allocation5], 1
    %17 = vsyncpa %s16, 0
    loop: start=0, step=1, limit=4
    $region2: #{tpu_custom_call.1} parent=1 // loop_pre_header
      _
    $region3: #{tpu_custom_call.1} parent=1 // loop_header
      %s19 = sphi 0, %s23
      %p20 = scmp.ge.s32.totalorder %s19, 4
      %s29 = sphi 0, %s31
      %s32 = sphi 0, %s29
      %s33 = sphi 0, %s32
      %s49 = sphi 0, %s33
      %s53 = sphi 0, %s53
      %s55 = sphi 0, %s53
      %s56 = sphi 0, %s55
      %s70 = sphi 0, %s56
      %s74 = sphi 0, %s74
      %s76 = sphi 0, %s74
      %s77 = sphi 0, %s76
      %s91 = sphi 0, %s77
      %s95 = sphi 0, %s95
      %s97 = sphi 0, %s95
      %s98 = sphi 0, %s97
      %s112 = sphi 0, %s98
      %s116 = sphi 0, %s116
      %s118 = sphi 0, %s116
      %s119 = sphi 0, %s118
      %s133 = sphi 0, %s119
      %s139 = sphi 0, %s141
      %s142 = sphi 0, %s139
      %s143 = sphi 0, %s142
      %s159 = sphi 0, %s143
      %s165 = sphi 0, %s167
      %s168 = sphi 0, %s165
      %s169 = sphi 0, %s168
      %s185 = sphi 0, %s169
    $region4: #{tpu_custom_call.1} parent=1 // loop_header_branch
      %22 = sbr.rel (%p20) target = $region8
    $region5: #{tpu_custom_call.1} parent=1 // loop_body
      %s24 = ssub.s32 %s19, 1
      %s25 = ssub.s32 %s19, 2
      %s26 = sadd.s32 %s19, 1
      %s27 = ssub.s32 %s19, %s26
      %p28 = scmp.eq.s32.totalorder %s27, 0
      %s30 = sadd.s32 %s29, 1
      %s31 = scalar_select %p28, %s29, %s30
      %p34 = pneg %p28
      %p35 = scmp.eq.s32.totalorder %s19, 1
      %p36 = por %p34, %p35
      %p37 = scmp.ne.s32.totalorder %s29, %s32
      %p38 = scmp.eq.s32.totalorder %s19, 0
      %p39 = por %p37, %p38
      %p40 = scmp.ne.s32.totalorder %s29, %s32
      %p41 = scmp.eq.s32.totalorder %s24, 1
      %p42 = por %p40, %p41
      %p43 = scmp.ne.s32.totalorder %s32, %s33
      %p44 = scmp.eq.s32.totalorder %s24, 0
      %p45 = por %p43, %p44
      %p46 = scmp.ne.s32.totalorder %s32, %s33
      %p47 = scmp.eq.s32.totalorder %s25, 1
      %p48 = por %p46, %p47
      %p50 = scmp.ne.s32.totalorder %s33, %s49
      %p51 = scmp.eq.s32.totalorder %s25, 0
      %p52 = por %p50, %p51
      %s54 = sadd.s32 %s53, 1
      %p57 = scmp.eq.s32.totalorder %s19, 1
      %p58 = scmp.ne.s32.totalorder %s53, %s55
      %p59 = scmp.eq.s32.totalorder %s19, 0
      %p60 = por %p58, %p59
      %p61 = scmp.ne.s32.totalorder %s53, %s55
      %p62 = scmp.eq.s32.totalorder %s24, 1
      %p63 = por %p61, %p62
      %p64 = scmp.ne.s32.totalorder %s55, %s56
      %p65 = scmp.eq.s32.totalorder %s24, 0
      %p66 = por %p64, %p65
      %p67 = scmp.ne.s32.totalorder %s55, %s56
      %p68 = scmp.eq.s32.totalorder %s25, 1
      %p69 = por %p67, %p68
      %p71 = scmp.ne.s32.totalorder %s56, %s70
      %p72 = scmp.eq.s32.totalorder %s25, 0
      %p73 = por %p71, %p72
      %s75 = sadd.s32 %s74, 1
      %p78 = scmp.eq.s32.totalorder %s19, 1
      %p79 = scmp.ne.s32.totalorder %s74, %s76
      %p80 = scmp.eq.s32.totalorder %s19, 0
      %p81 = por %p79, %p80
      %p82 = scmp.ne.s32.totalorder %s74, %s76
      %p83 = scmp.eq.s32.totalorder %s24, 1
      %p84 = por %p82, %p83
      %p85 = scmp.ne.s32.totalorder %s76, %s77
      %p86 = scmp.eq.s32.totalorder %s24, 0
      %p87 = por %p85, %p86
      %p88 = scmp.ne.s32.totalorder %s76, %s77
      %p89 = scmp.eq.s32.totalorder %s25, 1
      %p90 = por %p88, %p89
      %p92 = scmp.ne.s32.totalorder %s77, %s91
      %p93 = scmp.eq.s32.totalorder %s25, 0
      %p94 = por %p92, %p93
      %s96 = sadd.s32 %s95, 1
      %p99 = scmp.eq.s32.totalorder %s19, 1
      %p100 = scmp.ne.s32.totalorder %s95, %s97
      %p101 = scmp.eq.s32.totalorder %s19, 0
      %p102 = por %p100, %p101
      %p103 = scmp.ne.s32.totalorder %s95, %s97
      %p104 = scmp.eq.s32.totalorder %s24, 1
      %p105 = por %p103, %p104
      %p106 = scmp.ne.s32.totalorder %s97, %s98
      %p107 = scmp.eq.s32.totalorder %s24, 0
      %p108 = por %p106, %p107
      %p109 = scmp.ne.s32.totalorder %s97, %s98
      %p110 = scmp.eq.s32.totalorder %s25, 1
      %p111 = por %p109, %p110
      %p113 = scmp.ne.s32.totalorder %s98, %s112
      %p114 = scmp.eq.s32.totalorder %s25, 0
      %p115 = por %p113, %p114
      %s117 = sadd.s32 %s116, 1
      %p120 = scmp.eq.s32.totalorder %s19, 1
      %p121 = scmp.ne.s32.totalorder %s116, %s118
      %p122 = scmp.eq.s32.totalorder %s19, 0
      %p123 = por %p121, %p122
      %p124 = scmp.ne.s32.totalorder %s116, %s118
      %p125 = scmp.eq.s32.totalorder %s24, 1
      %p126 = por %p124, %p125
      %p127 = scmp.ne.s32.totalorder %s118, %s119
      %p128 = scmp.eq.s32.totalorder %s24, 0
      %p129 = por %p127, %p128
      %p130 = scmp.ne.s32.totalorder %s118, %s119
      %p131 = scmp.eq.s32.totalorder %s25, 1
      %p132 = por %p130, %p131
      %p134 = scmp.ne.s32.totalorder %s119, %s133
      %p135 = scmp.eq.s32.totalorder %s25, 0
      %p136 = por %p134, %p135
      %s137 = ssub.s32 %s19, %s26
      %p138 = scmp.eq.s32.totalorder %s137, 0
      %s140 = sadd.s32 %s139, 1
      %s141 = scalar_select %p138, %s139, %s140
      %p144 = pneg %p138
      %p145 = scmp.eq.s32.totalorder %s19, 1
      %p146 = por %p144, %p145
      %p147 = scmp.ne.s32.totalorder %s139, %s142
      %p148 = scmp.eq.s32.totalorder %s19, 0
      %p149 = por %p147, %p148
      %p150 = scmp.ne.s32.totalorder %s139, %s142
      %p151 = scmp.eq.s32.totalorder %s24, 1
      %p152 = por %p150, %p151
      %p153 = scmp.ne.s32.totalorder %s142, %s143
      %p154 = scmp.eq.s32.totalorder %s24, 0
      %p155 = por %p153, %p154
      %p156 = scmp.ne.s32.totalorder %s142, %s143
      %p157 = scmp.eq.s32.totalorder %s25, 1
      %p158 = por %p156, %p157
      %p160 = scmp.ne.s32.totalorder %s143, %s159
      %p161 = scmp.eq.s32.totalorder %s25, 0
      %p162 = por %p160, %p161
      %s163 = ssub.s32 %s19, %s26
      %p164 = scmp.eq.s32.totalorder %s163, 0
      %s166 = sadd.s32 %s165, 1
      %s167 = scalar_select %p164, %s165, %s166
      %p170 = pneg %p164
      %p171 = scmp.eq.s32.totalorder %s19, 1
      %p172 = por %p170, %p171
      %p173 = scmp.ne.s32.totalorder %s165, %s168
      %p174 = scmp.eq.s32.totalorder %s19, 0
      %p175 = por %p173, %p174
      %p176 = scmp.ne.s32.totalorder %s165, %s168
      %p177 = scmp.eq.s32.totalorder %s24, 1
      %p178 = por %p176, %p177
      %p179 = scmp.ne.s32.totalorder %s168, %s169
      %p180 = scmp.eq.s32.totalorder %s24, 0
      %p181 = por %p179, %p180
      %p182 = scmp.ne.s32.totalorder %s168, %s169
      %p183 = scmp.eq.s32.totalorder %s25, 1
      %p184 = por %p182, %p183
      %p186 = scmp.ne.s32.totalorder %s169, %s185
      %p187 = scmp.eq.s32.totalorder %s25, 0
      %p188 = por %p186, %p187
      %p189 = scmp.le.s32.totalorder 1, %s19
      %p190 = scmp.lt.s32.totalorder %s19, 3
      %p191 = pnand %p189, %p190
      %p192 = pneg %p191
      // Predicated region
      $region9: #{tpu_custom_call.1} parent=5 // pred_check
        _
      $region10: #{tpu_custom_call.1} parent=5 // pred_check_branch
        %194 = sbr.rel (%p191) target = $region12
      $region11: #{tpu_custom_call.1} parent=5 // pred_region
        %s195 = ssub.s32 %s19, 1
        // Predicated region
        $region13: #{tpu_custom_call.1} parent=11 // pred_check
          %p196 = pneg %p66
        $region14: #{tpu_custom_call.1} parent=11 // pred_check_branch
          %198 = sbr.rel (%p196) target = $region16
        $region15: #{tpu_custom_call.1} parent=11 // pred_region
          _
        $region16: #{tpu_custom_call.1} parent=11 // pred_fallthru
          _
        // Predicated region
        $region17: #{tpu_custom_call.1} parent=11 // pred_check
          %p199 = pneg %p87
        $region18: #{tpu_custom_call.1} parent=11 // pred_check_branch
          %201 = sbr.rel (%p199) target = $region20
        $region19: #{tpu_custom_call.1} parent=11 // pred_region
          _
        $region20: #{tpu_custom_call.1} parent=11 // pred_fallthru
          _
        // Predicated region
        $region21: #{tpu_custom_call.1} parent=11 // pred_check
          %p202 = pneg %p108
        $region22: #{tpu_custom_call.1} parent=11 // pred_check_branch
          %204 = sbr.rel (%p202) target = $region24
        $region23: #{tpu_custom_call.1} parent=11 // pred_region
          _
        $region24: #{tpu_custom_call.1} parent=11 // pred_fallthru
          _
        // Predicated region
        $region25: #{tpu_custom_call.1} parent=11 // pred_check
          %p205 = pneg %p129
        $region26: #{tpu_custom_call.1} parent=11 // pred_check_branch
          %207 = sbr.rel (%p205) target = $region28
        $region27: #{tpu_custom_call.1} parent=11 // pred_region
          _
        $region28: #{tpu_custom_call.1} parent=11 // pred_fallthru
          _
      $region12: #{tpu_custom_call.1} parent=5 // pred_fallthru
        _
      %p208 = scmp.lt.s32.totalorder %s19, 2
      // Predicated region
      $region29: #{tpu_custom_call.1} parent=5 // pred_check
        %p209 = pneg %p208
      $region30: #{tpu_custom_call.1} parent=5 // pred_check_branch
        %211 = sbr.rel (%p209) target = $region32
      $region31: #{tpu_custom_call.1} parent=5 // pred_region
        // Predicated region
        $region33: #{tpu_custom_call.1} parent=31 // pred_check
          %p212 = pneg %p39
        $region34: #{tpu_custom_call.1} parent=31 // pred_check_branch
          %214 = sbr.rel (%p212) target = $region36
        $region35: #{tpu_custom_call.1} parent=31 // pred_region
          %p215 = scmp.lt.s32.totalorder %s19, 1
          %s216 = scalar_select %p215, %s19, 1
          %s217 = smul.addr %s216, 32
          %s218 = smul.addr %s217, 4
          %s219 = scalar_lea.vmem %s0, %s218
        $region36: #{tpu_custom_call.1} parent=31 // pred_fallthru
          _
      $region32: #{tpu_custom_call.1} parent=5 // pred_fallthru
        _
      %p220 = scmp.le.s32.totalorder 1, %s19
      %p221 = scmp.lt.s32.totalorder %s19, 3
      %p222 = pnand %p220, %p221
      %p223 = pneg %p222
      // Predicated region
      $region37: #{tpu_custom_call.1} parent=5 // pred_check
        _
      $region38: #{tpu_custom_call.1} parent=5 // pred_check_branch
        %225 = sbr.rel (%p222) target = $region40
      $region39: #{tpu_custom_call.1} parent=5 // pred_region
        %s226 = ssub.s32 %s19, 1
        %p227 = scmp.lt.s32.totalorder %s24, 1
        %s228 = scalar_select %p227, %s24, 1
        %s229 = smul.addr %s228, 32
        %s230 = smul.addr %s229, 4
        %s231 = scalar_lea.vmem %s0, %s230
        %p232 = pneg %p45
        %p233 = pneg %p42
        %p234 = pneg %p66
        %p235 = pneg %p63
        %p236 = pneg %p87
        %p237 = pneg %p84
        %p238 = pneg %p108
        %p239 = pneg %p105
        %p240 = pneg %p129
        %p241 = pneg %p126
        %p242 = pneg %p155
        %p243 = pneg %p152
        %s244 = sand.u32 %s142, 1
        %s245 = scalar_lea.sflag [#allocation3], %s244
        %s246 = sand.u32 %s142, 1
        %s247 = smul.addr %s246, 256
        %s248 = scalar_lea.vmem [#allocation2], %s247
        %p249 = pneg %p181
        %p250 = pneg %p178
        %s251 = sand.u32 %s168, 1
        %s252 = scalar_lea.sflag [#allocation5], %s251
        %s253 = sand.u32 %s168, 1
        %s254 = smul.addr %s253, 32
        %s255 = scalar_lea.vmem [#allocation4], %s254
        %p256 = scmp.lt.s32.totalorder %s24, 1
        %s257 = scalar_select %p256, %s24, 1
        %s258 = smul.addr %s257, 32
        %s259 = smul.addr %s258, 4
        %s260 = scalar_lea.vmem %s0, %s259
        %v262 = vld [vmem:[%s260] sm:$0xf]
        %v263 = vld [vmem:[%s260 + $0x4] sm:$0xf]
        %v264 = vld [vmem:[%s260 + $0x8] sm:$0xf]
        %v265 = vld [vmem:[%s260 + $0xc] sm:$0xf]
        %v266 = vld [vmem:[%s260 + $0x10] sm:$0xf]
        %v267 = vld [vmem:[%s260 + $0x14] sm:$0xf]
        %v268 = vld [vmem:[%s260 + $0x18] sm:$0xf]
        %v269 = vld [vmem:[%s260 + $0x1c] sm:$0xf]
        %v270 = vld [vmem:[%s260 + $0x20] sm:$0xf]
        %v271 = vld [vmem:[%s260 + $0x24] sm:$0xf]
        %v272 = vld [vmem:[%s260 + $0x28] sm:$0xf]
        %v273 = vld [vmem:[%s260 + $0x2c] sm:$0xf]
        %v274 = vld [vmem:[%s260 + $0x30] sm:$0xf]
        %v275 = vld [vmem:[%s260 + $0x34] sm:$0xf]
        %v276 = vld [vmem:[%s260 + $0x38] sm:$0xf]
        %v277 = vld [vmem:[%s260 + $0x3c] sm:$0xf]
        %v278 = vld [vmem:[%s260 + $0x40] sm:$0xf]
        %v279 = vld [vmem:[%s260 + $0x44] sm:$0xf]
        %v280 = vld [vmem:[%s260 + $0x48] sm:$0xf]
        %v281 = vld [vmem:[%s260 + $0x4c] sm:$0xf]
        %v282 = vld [vmem:[%s260 + $0x50] sm:$0xf]
        %v283 = vld [vmem:[%s260 + $0x54] sm:$0xf]
        %v284 = vld [vmem:[%s260 + $0x58] sm:$0xf]
        %v285 = vld [vmem:[%s260 + $0x5c] sm:$0xf]
        %v286 = vld [vmem:[%s260 + $0x60] sm:$0xf]
        %v287 = vld [vmem:[%s260 + $0x64] sm:$0xf]
        %v288 = vld [vmem:[%s260 + $0x68] sm:$0xf]
        %v289 = vld [vmem:[%s260 + $0x6c] sm:$0xf]
        %v290 = vld [vmem:[%s260 + $0x70] sm:$0xf]
        %v291 = vld [vmem:[%s260 + $0x74] sm:$0xf]
        %v292 = vld [vmem:[%s260 + $0x78] sm:$0xf]
        %v293 = vld [vmem:[%s260 + $0x7c] sm:$0xf]
        %v326 = vunpack.c.l.b16 %v262
        %v327 = vunpack.c.l.b16 %v263
        %v328 = vunpack.c.l.b16 %v264
        %v329 = vunpack.c.l.b16 %v265
        %v330 = vunpack.c.l.b16 %v266
        %v331 = vunpack.c.l.b16 %v267
        %v332 = vunpack.c.l.b16 %v268
        %v333 = vunpack.c.l.b16 %v269
        %v334 = vunpack.c.l.b16 %v270
        %v335 = vunpack.c.l.b16 %v271
        %v336 = vunpack.c.l.b16 %v272
        %v337 = vunpack.c.l.b16 %v273
        %v338 = vunpack.c.l.b16 %v274
        %v339 = vunpack.c.l.b16 %v275
        %v340 = vunpack.c.l.b16 %v276
        %v341 = vunpack.c.l.b16 %v277
        %v342 = vunpack.c.l.b16 %v278
        %v343 = vunpack.c.l.b16 %v279
        %v344 = vunpack.c.l.b16 %v280
        %v345 = vunpack.c.l.b16 %v281
        %v346 = vunpack.c.l.b16 %v282
        %v347 = vunpack.c.l.b16 %v283
        %v348 = vunpack.c.l.b16 %v284
        %v349 = vunpack.c.l.b16 %v285
        %v350 = vunpack.c.l.b16 %v286
        %v351 = vunpack.c.l.b16 %v287
        %v352 = vunpack.c.l.b16 %v288
        %v353 = vunpack.c.l.b16 %v289
        %v354 = vunpack.c.l.b16 %v290
        %v355 = vunpack.c.l.b16 %v291
        %v356 = vunpack.c.l.b16 %v292
        %v357 = vunpack.c.l.b16 %v293
        %v358 = vpack.c.b16 %v327, %v326
        %v359 = vpack.c.b16 %v329, %v328
        %v360 = vpack.c.b16 %v331, %v330
        %v361 = vpack.c.b16 %v333, %v332
        %v362 = vpack.c.b16 %v335, %v334
        %v363 = vpack.c.b16 %v337, %v336
        %v364 = vpack.c.b16 %v339, %v338
        %v365 = vpack.c.b16 %v341, %v340
        %v366 = vpack.c.b16 %v343, %v342
        %v367 = vpack.c.b16 %v345, %v344
        %v368 = vpack.c.b16 %v347, %v346
        %v369 = vpack.c.b16 %v349, %v348
        %v370 = vpack.c.b16 %v351, %v350
        %v371 = vpack.c.b16 %v353, %v352
        %v372 = vpack.c.b16 %v355, %v354
        %v373 = vpack.c.b16 %v357, %v356
        %v375 = vshrl.u32 0, 16
        %v377 = vrot.slane %v375, 7
        %v378 = vshll.u32 0, 16
        %v380 = vor.u32 %v377, %v378
        %v382 = vshrl.u32 %v358, 16
        %v384 = vrot.slane %v382, 7
        %v385 = vshll.u32 %v358, 16
        %v387 = vor.u32 %v384, %v385
        %v389 = vshrl.u32 %v359, 16
        %v391 = vrot.slane %v389, 7
        %v392 = vshll.u32 %v359, 16
        %v394 = vor.u32 %v391, %v392
        %v396 = vshrl.u32 %v360, 16
        %v398 = vrot.slane %v396, 7
        %v399 = vshll.u32 %v360, 16
        %v401 = vor.u32 %v398, %v399
        %v403 = vshrl.u32 %v361, 16
        %v405 = vrot.slane %v403, 7
        %v406 = vshll.u32 %v361, 16
        %v408 = vor.u32 %v405, %v406
        %v410 = vshrl.u32 %v362, 16
        %v412 = vrot.slane %v410, 7
        %v413 = vshll.u32 %v362, 16
        %v415 = vor.u32 %v412, %v413
        %v417 = vshrl.u32 %v363, 16
        %v419 = vrot.slane %v417, 7
        %v420 = vshll.u32 %v363, 16
        %v422 = vor.u32 %v419, %v420
        %v424 = vshrl.u32 %v364, 16
        %v426 = vrot.slane %v424, 7
        %v427 = vshll.u32 %v364, 16
        %v429 = vor.u32 %v426, %v427
        %v431 = vshrl.u32 %v365, 16
        %v433 = vrot.slane %v431, 7
        %v434 = vshll.u32 %v365, 16
        %v436 = vor.u32 %v433, %v434
        %v438 = vshrl.u32 %v366, 16
        %v440 = vrot.slane %v438, 7
        %v441 = vshll.u32 %v366, 16
        %v443 = vor.u32 %v440, %v441
        %v445 = vshrl.u32 %v367, 16
        %v447 = vrot.slane %v445, 7
        %v448 = vshll.u32 %v367, 16
        %v450 = vor.u32 %v447, %v448
        %v452 = vshrl.u32 %v368, 16
        %v454 = vrot.slane %v452, 7
        %v455 = vshll.u32 %v368, 16
        %v457 = vor.u32 %v454, %v455
        %v459 = vshrl.u32 %v369, 16
        %v461 = vrot.slane %v459, 7
        %v462 = vshll.u32 %v369, 16
        %v464 = vor.u32 %v461, %v462
        %v466 = vshrl.u32 %v370, 16
        %v468 = vrot.slane %v466, 7
        %v469 = vshll.u32 %v370, 16
        %v471 = vor.u32 %v468, %v469
        %v473 = vshrl.u32 %v371, 16
        %v475 = vrot.slane %v473, 7
        %v476 = vshll.u32 %v371, 16
        %v478 = vor.u32 %v475, %v476
        %v480 = vshrl.u32 %v372, 16
        %v482 = vrot.slane %v480, 7
        %v483 = vshll.u32 %v372, 16
        %v485 = vor.u32 %v482, %v483
        %v487 = vshrl.u32 %v373, 16
        %v489 = vrot.slane %v487, 7
        %v490 = vshll.u32 %v373, 16
        %v492 = vor.u32 %v489, %v490
        %vm527 = vcmask 1040384
        %vm528 = vsmask.f32 256
        %vm529 = vmand %vm527, %vm528
        %v530 = vsel %vm529, 0, %v380
        %v531 = vsel %vm529, 0, %v387
        %v532 = vsel %vm529, 0, %v394
        %v533 = vsel %vm529, 0, %v401
        %v534 = vsel %vm529, 0, %v408
        %v535 = vsel %vm529, 0, %v415
        %v536 = vsel %vm529, 0, %v422
        %v537 = vsel %vm529, 0, %v429
        %v538 = vsel %vm529, 0, %v436
        %v539 = vsel %vm529, 0, %v443
        %v540 = vsel %vm529, 0, %v450
        %v541 = vsel %vm529, 0, %v457
        %v542 = vsel %vm529, 0, %v464
        %v543 = vsel %vm529, 0, %v471
        %v544 = vsel %vm529, 0, %v478
        %v545 = vsel %vm529, 0, %v485
        %v546 = vsel %vm529, 0, %v492
        %v547 = vsel %vm529, %v377, 0
        %v548 = vsel %vm529, %v384, 0
        %v549 = vsel %vm529, %v391, 0
        %v550 = vsel %vm529, %v398, 0
        %v551 = vsel %vm529, %v405, 0
        %v552 = vsel %vm529, %v412, 0
        %v553 = vsel %vm529, %v419, 0
        %v554 = vsel %vm529, %v426, 0
        %v555 = vsel %vm529, %v433, 0
        %v556 = vsel %vm529, %v440, 0
        %v557 = vsel %vm529, %v447, 0
        %v558 = vsel %vm529, %v454, 0
        %v559 = vsel %vm529, %v461, 0
        %v560 = vsel %vm529, %v468, 0
        %v561 = vsel %vm529, %v475, 0
        %v562 = vsel %vm529, %v482, 0
        %v563 = vsel %vm529, %v489, 0
        %vm564 = vsmask.f32 7424
        %v566 = vshrl.u32 %v530, 16
        %v568 = vshll.u32 %v530, 16
        %v570 = vrot.slane %v568, 1
        %v571 = vor.u32 %v566, %v570
        %v573 = vshll.u32 %v547, 16
        %v575 = vrot.slane %v573, 1
        %v576 = vsel %vm564, %v571, %v575
        %v578 = vshrl.u32 %v531, 16
        %v580 = vshll.u32 %v531, 16
        %v582 = vrot.slane %v580, 1
        %v583 = vor.u32 %v578, %v582
        %v585 = vshll.u32 %v548, 16
        %v587 = vrot.slane %v585, 1
        %v588 = vsel %vm564, %v583, %v587
        %v590 = vshrl.u32 %v532, 16
        %v592 = vshll.u32 %v532, 16
        %v594 = vrot.slane %v592, 1
        %v595 = vor.u32 %v590, %v594
        %v597 = vshll.u32 %v549, 16
        %v599 = vrot.slane %v597, 1
        %v600 = vsel %vm564, %v595, %v599
        %v602 = vshrl.u32 %v533, 16
        %v604 = vshll.u32 %v533, 16
        %v606 = vrot.slane %v604, 1
        %v607 = vor.u32 %v602, %v606
        %v609 = vshll.u32 %v550, 16
        %v611 = vrot.slane %v609, 1
        %v612 = vsel %vm564, %v607, %v611
        %v614 = vshrl.u32 %v534, 16
        %v616 = vshll.u32 %v534, 16
        %v618 = vrot.slane %v616, 1
        %v619 = vor.u32 %v614, %v618
        %v621 = vshll.u32 %v551, 16
        %v623 = vrot.slane %v621, 1
        %v624 = vsel %vm564, %v619, %v623
        %v626 = vshrl.u32 %v535, 16
        %v628 = vshll.u32 %v535, 16
        %v630 = vrot.slane %v628, 1
        %v631 = vor.u32 %v626, %v630
        %v633 = vshll.u32 %v552, 16
        %v635 = vrot.slane %v633, 1
        %v636 = vsel %vm564, %v631, %v635
        %v638 = vshrl.u32 %v536, 16
        %v640 = vshll.u32 %v536, 16
        %v642 = vrot.slane %v640, 1
        %v643 = vor.u32 %v638, %v642
        %v645 = vshll.u32 %v553, 16
        %v647 = vrot.slane %v645, 1
        %v648 = vsel %vm564, %v643, %v647
        %v650 = vshrl.u32 %v537, 16
        %v652 = vshll.u32 %v537, 16
        %v654 = vrot.slane %v652, 1
        %v655 = vor.u32 %v650, %v654
        %v657 = vshll.u32 %v554, 16
        %v659 = vrot.slane %v657, 1
        %v660 = vsel %vm564, %v655, %v659
        %v662 = vshrl.u32 %v538, 16
        %v664 = vshll.u32 %v538, 16
        %v666 = vrot.slane %v664, 1
        %v667 = vor.u32 %v662, %v666
        %v669 = vshll.u32 %v555, 16
        %v671 = vrot.slane %v669, 1
        %v672 = vsel %vm564, %v667, %v671
        %v674 = vshrl.u32 %v539, 16
        %v676 = vshll.u32 %v539, 16
        %v678 = vrot.slane %v676, 1
        %v679 = vor.u32 %v674, %v678
        %v681 = vshll.u32 %v556, 16
        %v683 = vrot.slane %v681, 1
        %v684 = vsel %vm564, %v679, %v683
        %v686 = vshrl.u32 %v540, 16
        %v688 = vshll.u32 %v540, 16
        %v690 = vrot.slane %v688, 1
        %v691 = vor.u32 %v686, %v690
        %v693 = vshll.u32 %v557, 16
        %v695 = vrot.slane %v693, 1
        %v696 = vsel %vm564, %v691, %v695
        %v698 = vshrl.u32 %v541, 16
        %v700 = vshll.u32 %v541, 16
        %v702 = vrot.slane %v700, 1
        %v703 = vor.u32 %v698, %v702
        %v705 = vshll.u32 %v558, 16
        %v707 = vrot.slane %v705, 1
        %v708 = vsel %vm564, %v703, %v707
        %v710 = vshrl.u32 %v542, 16
        %v712 = vshll.u32 %v542, 16
        %v714 = vrot.slane %v712, 1
        %v715 = vor.u32 %v710, %v714
        %v717 = vshll.u32 %v559, 16
        %v719 = vrot.slane %v717, 1
        %v720 = vsel %vm564, %v715, %v719
        %v722 = vshrl.u32 %v543, 16
        %v724 = vshll.u32 %v543, 16
        %v726 = vrot.slane %v724, 1
        %v727 = vor.u32 %v722, %v726
        %v729 = vshll.u32 %v560, 16
        %v731 = vrot.slane %v729, 1
        %v732 = vsel %vm564, %v727, %v731
        %v734 = vshrl.u32 %v544, 16
        %v736 = vshll.u32 %v544, 16
        %v738 = vrot.slane %v736, 1
        %v739 = vor.u32 %v734, %v738
        %v741 = vshll.u32 %v561, 16
        %v743 = vrot.slane %v741, 1
        %v744 = vsel %vm564, %v739, %v743
        %v746 = vshrl.u32 %v545, 16
        %v748 = vshll.u32 %v545, 16
        %v750 = vrot.slane %v748, 1
        %v751 = vor.u32 %v746, %v750
        %v753 = vshll.u32 %v562, 16
        %v755 = vrot.slane %v753, 1
        %v756 = vsel %vm564, %v751, %v755
        %vm789 = vcmask 1046528
        %v790 = vrot.slane %v530, 1
        %v791 = vrot.slane %v547, 1
        %v792 = vsel %vm789, %v790, %v791
        %v793 = vrot.slane %v531, 1
        %v794 = vrot.slane %v548, 1
        %v795 = vsel %vm789, %v793, %v794
        %v796 = vrot.slane %v532, 1
        %v797 = vrot.slane %v549, 1
        %v798 = vsel %vm789, %v796, %v797
        %v799 = vrot.slane %v533, 1
        %v800 = vrot.slane %v550, 1
        %v801 = vsel %vm789, %v799, %v800
        %v802 = vrot.slane %v534, 1
        %v803 = vrot.slane %v551, 1
        %v804 = vsel %vm789, %v802, %v803
        %v805 = vrot.slane %v535, 1
        %v806 = vrot.slane %v552, 1
        %v807 = vsel %vm789, %v805, %v806
        %v808 = vrot.slane %v536, 1
        %v809 = vrot.slane %v553, 1
        %v810 = vsel %vm789, %v808, %v809
        %v811 = vrot.slane %v537, 1
        %v812 = vrot.slane %v554, 1
        %v813 = vsel %vm789, %v811, %v812
        %v814 = vrot.slane %v538, 1
        %v815 = vrot.slane %v555, 1
        %v816 = vsel %vm789, %v814, %v815
        %v817 = vrot.slane %v539, 1
        %v818 = vrot.slane %v556, 1
        %v819 = vsel %vm789, %v817, %v818
        %v820 = vrot.slane %v540, 1
        %v821 = vrot.slane %v557, 1
        %v822 = vsel %vm789, %v820, %v821
        %v823 = vrot.slane %v541, 1
        %v824 = vrot.slane %v558, 1
        %v825 = vsel %vm789, %v823, %v824
        %v826 = vrot.slane %v542, 1
        %v827 = vrot.slane %v559, 1
        %v828 = vsel %vm789, %v826, %v827
        %v829 = vrot.slane %v543, 1
        %v830 = vrot.slane %v560, 1
        %v831 = vsel %vm789, %v829, %v830
        %v832 = vrot.slane %v544, 1
        %v833 = vrot.slane %v561, 1
        %v834 = vsel %vm789, %v832, %v833
        %v835 = vrot.slane %v545, 1
        %v836 = vrot.slane %v562, 1
        %v837 = vsel %vm789, %v835, %v836
        %v839 = vshrl.u32 %v546, 16
        %v841 = vshll.u32 %v546, 16
        %v843 = vrot.slane %v841, 1
        %v844 = vor.u32 %v839, %v843
        %v846 = vshll.u32 %v563, 16
        %v848 = vrot.slane %v846, 1
        %v849 = vsel %vm564, %v844, %v848
        %v852 = vrot.slane %v546, 1
        %v853 = vrot.slane %v563, 1
        %v854 = vsel %vm789, %v852, %v853
        %855 = vrot.lane.b32.xlu0 %v576, 4
        %v856 = vpop.permute.xlu0 %855
        %857 = vrot.lane.b32.xlu0 %v588, 4
        %v858 = vpop.permute.xlu0 %857
        %859 = vrot.lane.b32.xlu0 %v600, 4
        %v860 = vpop.permute.xlu0 %859
        %861 = vrot.lane.b32.xlu0 %v612, 4
        %v862 = vpop.permute.xlu0 %861
        %863 = vrot.lane.b32.xlu0 %v624, 4
        %v864 = vpop.permute.xlu0 %863
        %865 = vrot.lane.b32.xlu0 %v636, 4
        %v866 = vpop.permute.xlu0 %865
        %867 = vrot.lane.b32.xlu0 %v648, 4
        %v868 = vpop.permute.xlu0 %867
        %869 = vrot.lane.b32.xlu0 %v660, 4
        %v870 = vpop.permute.xlu0 %869
        %871 = vrot.lane.b32.xlu0 %v672, 4
        %v872 = vpop.permute.xlu0 %871
        %873 = vrot.lane.b32.xlu0 %v684, 4
        %v874 = vpop.permute.xlu0 %873
        %875 = vrot.lane.b32.xlu0 %v696, 4
        %v876 = vpop.permute.xlu0 %875
        %877 = vrot.lane.b32.xlu0 %v708, 4
        %v878 = vpop.permute.xlu0 %877
        %879 = vrot.lane.b32.xlu0 %v720, 4
        %v880 = vpop.permute.xlu0 %879
        %881 = vrot.lane.b32.xlu0 %v732, 4
        %v882 = vpop.permute.xlu0 %881
        %883 = vrot.lane.b32.xlu0 %v744, 4
        %v884 = vpop.permute.xlu0 %883
        %885 = vrot.lane.b32.xlu0 %v756, 4
        %v886 = vpop.permute.xlu0 %885
        %887 = vrot.lane.b32.xlu0 %v792, 8
        %v888 = vpop.permute.xlu0 %887
        %889 = vrot.lane.b32.xlu0 %v795, 8
        %v890 = vpop.permute.xlu0 %889
        %891 = vrot.lane.b32.xlu0 %v798, 8
        %v892 = vpop.permute.xlu0 %891
        %893 = vrot.lane.b32.xlu0 %v801, 8
        %v894 = vpop.permute.xlu0 %893
        %895 = vrot.lane.b32.xlu0 %v804, 8
        %v896 = vpop.permute.xlu0 %895
        %897 = vrot.lane.b32.xlu0 %v807, 8
        %v898 = vpop.permute.xlu0 %897
        %899 = vrot.lane.b32.xlu0 %v810, 8
        %v900 = vpop.permute.xlu0 %899
        %901 = vrot.lane.b32.xlu0 %v813, 8
        %v902 = vpop.permute.xlu0 %901
        %903 = vrot.lane.b32.xlu0 %v816, 8
        %v904 = vpop.permute.xlu0 %903
        %905 = vrot.lane.b32.xlu0 %v819, 8
        %v906 = vpop.permute.xlu0 %905
        %907 = vrot.lane.b32.xlu0 %v822, 8
        %v908 = vpop.permute.xlu0 %907
        %909 = vrot.lane.b32.xlu0 %v825, 8
        %v910 = vpop.permute.xlu0 %909
        %911 = vrot.lane.b32.xlu0 %v828, 8
        %v912 = vpop.permute.xlu0 %911
        %913 = vrot.lane.b32.xlu0 %v831, 8
        %v914 = vpop.permute.xlu0 %913
        %915 = vrot.lane.b32.xlu0 %v834, 8
        %v916 = vpop.permute.xlu0 %915
        %917 = vrot.lane.b32.xlu0 %v837, 8
        %v918 = vpop.permute.xlu0 %917
        %919 = vrot.lane.b32.xlu0 %v531, 12
        %v920 = vpop.permute.xlu0 %919
        %921 = vrot.lane.b32.xlu0 %v532, 12
        %v922 = vpop.permute.xlu0 %921
        %923 = vrot.lane.b32.xlu0 %v533, 12
        %v924 = vpop.permute.xlu0 %923
        %925 = vrot.lane.b32.xlu0 %v534, 12
        %v926 = vpop.permute.xlu0 %925
        %927 = vrot.lane.b32.xlu0 %v535, 12
        %v928 = vpop.permute.xlu0 %927
        %929 = vrot.lane.b32.xlu0 %v536, 12
        %v930 = vpop.permute.xlu0 %929
        %931 = vrot.lane.b32.xlu0 %v537, 12
        %v932 = vpop.permute.xlu0 %931
        %933 = vrot.lane.b32.xlu0 %v538, 12
        %v934 = vpop.permute.xlu0 %933
        %935 = vrot.lane.b32.xlu0 %v539, 12
        %v936 = vpop.permute.xlu0 %935
        %937 = vrot.lane.b32.xlu0 %v540, 12
        %v938 = vpop.permute.xlu0 %937
        %939 = vrot.lane.b32.xlu0 %v541, 12
        %v940 = vpop.permute.xlu0 %939
        %941 = vrot.lane.b32.xlu0 %v542, 12
        %v942 = vpop.permute.xlu0 %941
        %943 = vrot.lane.b32.xlu0 %v543, 12
        %v944 = vpop.permute.xlu0 %943
        %945 = vrot.lane.b32.xlu0 %v544, 12
        %v946 = vpop.permute.xlu0 %945
        %947 = vrot.lane.b32.xlu0 %v545, 12
        %v948 = vpop.permute.xlu0 %947
        %949 = vrot.lane.b32.xlu0 %v546, 12
        %v950 = vpop.permute.xlu0 %949
        %951 = vrot.lane.b32.xlu0 %v588, 16
        %v952 = vpop.permute.xlu0 %951
        %953 = vrot.lane.b32.xlu0 %v600, 16
        %v954 = vpop.permute.xlu0 %953
        %955 = vrot.lane.b32.xlu0 %v612, 16
        %v956 = vpop.permute.xlu0 %955
        %957 = vrot.lane.b32.xlu0 %v624, 16
        %v958 = vpop.permute.xlu0 %957
        %959 = vrot.lane.b32.xlu0 %v636, 16
        %v960 = vpop.permute.xlu0 %959
        %961 = vrot.lane.b32.xlu0 %v648, 16
        %v962 = vpop.permute.xlu0 %961
        %963 = vrot.lane.b32.xlu0 %v660, 16
        %v964 = vpop.permute.xlu0 %963
        %965 = vrot.lane.b32.xlu0 %v672, 16
        %v966 = vpop.permute.xlu0 %965
        %967 = vrot.lane.b32.xlu0 %v684, 16
        %v968 = vpop.permute.xlu0 %967
        %969 = vrot.lane.b32.xlu0 %v696, 16
        %v970 = vpop.permute.xlu0 %969
        %971 = vrot.lane.b32.xlu0 %v708, 16
        %v972 = vpop.permute.xlu0 %971
        %973 = vrot.lane.b32.xlu0 %v720, 16
        %v974 = vpop.permute.xlu0 %973
        %975 = vrot.lane.b32.xlu0 %v732, 16
        %v976 = vpop.permute.xlu0 %975
        %977 = vrot.lane.b32.xlu0 %v744, 16
        %v978 = vpop.permute.xlu0 %977
        %979 = vrot.lane.b32.xlu0 %v756, 16
        %v980 = vpop.permute.xlu0 %979
        %981 = vrot.lane.b32.xlu0 %v849, 16
        %v982 = vpop.permute.xlu0 %981
        %983 = vrot.lane.b32.xlu0 %v795, 20
        %v984 = vpop.permute.xlu0 %983
        %985 = vrot.lane.b32.xlu0 %v798, 20
        %v986 = vpop.permute.xlu0 %985
        %987 = vrot.lane.b32.xlu0 %v801, 20
        %v988 = vpop.permute.xlu0 %987
        %989 = vrot.lane.b32.xlu0 %v804, 20
        %v990 = vpop.permute.xlu0 %989
        %991 = vrot.lane.b32.xlu0 %v807, 20
        %v992 = vpop.permute.xlu0 %991
        %993 = vrot.lane.b32.xlu0 %v810, 20
        %v994 = vpop.permute.xlu0 %993
        %995 = vrot.lane.b32.xlu0 %v813, 20
        %v996 = vpop.permute.xlu0 %995
        %997 = vrot.lane.b32.xlu0 %v816, 20
        %v998 = vpop.permute.xlu0 %997
        %999 = vrot.lane.b32.xlu0 %v819, 20
        %v1000 = vpop.permute.xlu0 %999
        %1001 = vrot.lane.b32.xlu0 %v822, 20
        %v1002 = vpop.permute.xlu0 %1001
        %1003 = vrot.lane.b32.xlu0 %v825, 20
        %v1004 = vpop.permute.xlu0 %1003
        %1005 = vrot.lane.b32.xlu0 %v828, 20
        %v1006 = vpop.permute.xlu0 %1005
        %1007 = vrot.lane.b32.xlu0 %v831, 20
        %v1008 = vpop.permute.xlu0 %1007
        %1009 = vrot.lane.b32.xlu0 %v834, 20
        %v1010 = vpop.permute.xlu0 %1009
        %1011 = vrot.lane.b32.xlu0 %v837, 20
        %v1012 = vpop.permute.xlu0 %1011
        %1013 = vrot.lane.b32.xlu0 %v854, 20
        %v1014 = vpop.permute.xlu0 %1013
        %1015 = vrot.lane.b32.xlu0 %v532, 24
        %v1016 = vpop.permute.xlu0 %1015
        %1017 = vrot.lane.b32.xlu0 %v533, 24
        %v1018 = vpop.permute.xlu0 %1017
        %1019 = vrot.lane.b32.xlu0 %v534, 24
        %v1020 = vpop.permute.xlu0 %1019
        %1021 = vrot.lane.b32.xlu0 %v535, 24
        %v1022 = vpop.permute.xlu0 %1021
        %1023 = vrot.lane.b32.xlu0 %v536, 24
        %v1024 = vpop.permute.xlu0 %1023
        %1025 = vrot.lane.b32.xlu0 %v537, 24
        %v1026 = vpop.permute.xlu0 %1025
        %1027 = vrot.lane.b32.xlu0 %v538, 24
        %v1028 = vpop.permute.xlu0 %1027
        %1029 = vrot.lane.b32.xlu0 %v539, 24
        %v1030 = vpop.permute.xlu0 %1029
        %1031 = vrot.lane.b32.xlu0 %v540, 24
        %v1032 = vpop.permute.xlu0 %1031
        %1033 = vrot.lane.b32.xlu0 %v541, 24
        %v1034 = vpop.permute.xlu0 %1033
        %1035 = vrot.lane.b32.xlu0 %v542, 24
        %v1036 = vpop.permute.xlu0 %1035
        %1037 = vrot.lane.b32.xlu0 %v543, 24
        %v1038 = vpop.permute.xlu0 %1037
        %1039 = vrot.lane.b32.xlu0 %v544, 24
        %v1040 = vpop.permute.xlu0 %1039
        %1041 = vrot.lane.b32.xlu0 %v545, 24
        %v1042 = vpop.permute.xlu0 %1041
        %1043 = vrot.lane.b32.xlu0 %v546, 24
        %v1044 = vpop.permute.xlu0 %1043
        %1045 = vrot.lane.b32.xlu0 %v530, 24
        %v1046 = vpop.permute.xlu0 %1045
        %1047 = vrot.lane.b32.xlu0 %v600, 28
        %v1048 = vpop.permute.xlu0 %1047
        %1049 = vrot.lane.b32.xlu0 %v612, 28
        %v1050 = vpop.permute.xlu0 %1049
        %1051 = vrot.lane.b32.xlu0 %v624, 28
        %v1052 = vpop.permute.xlu0 %1051
        %1053 = vrot.lane.b32.xlu0 %v636, 28
        %v1054 = vpop.permute.xlu0 %1053
        %1055 = vrot.lane.b32.xlu0 %v648, 28
        %v1056 = vpop.permute.xlu0 %1055
        %1057 = vrot.lane.b32.xlu0 %v660, 28
        %v1058 = vpop.permute.xlu0 %1057
        %1059 = vrot.lane.b32.xlu0 %v672, 28
        %v1060 = vpop.permute.xlu0 %1059
        %1061 = vrot.lane.b32.xlu0 %v684, 28
        %v1062 = vpop.permute.xlu0 %1061
        %1063 = vrot.lane.b32.xlu0 %v696, 28
        %v1064 = vpop.permute.xlu0 %1063
        %1065 = vrot.lane.b32.xlu0 %v708, 28
        %v1066 = vpop.permute.xlu0 %1065
        %1067 = vrot.lane.b32.xlu0 %v720, 28
        %v1068 = vpop.permute.xlu0 %1067
        %1069 = vrot.lane.b32.xlu0 %v732, 28
        %v1070 = vpop.permute.xlu0 %1069
        %1071 = vrot.lane.b32.xlu0 %v744, 28
        %v1072 = vpop.permute.xlu0 %1071
        %1073 = vrot.lane.b32.xlu0 %v756, 28
        %v1074 = vpop.permute.xlu0 %1073
        %1075 = vrot.lane.b32.xlu0 %v849, 28
        %v1076 = vpop.permute.xlu0 %1075
        %1077 = vrot.lane.b32.xlu0 %v576, 28
        %v1078 = vpop.permute.xlu0 %1077
        %1079 = vrot.lane.b32.xlu0 %v798, 32
        %v1080 = vpop.permute.xlu0 %1079
        %1081 = vrot.lane.b32.xlu0 %v801, 32
        %v1082 = vpop.permute.xlu0 %1081
        %1083 = vrot.lane.b32.xlu0 %v804, 32
        %v1084 = vpop.permute.xlu0 %1083
        %1085 = vrot.lane.b32.xlu0 %v807, 32
        %v1086 = vpop.permute.xlu0 %1085
        %1087 = vrot.lane.b32.xlu0 %v810, 32
        %v1088 = vpop.permute.xlu0 %1087
        %1089 = vrot.lane.b32.xlu0 %v813, 32
        %v1090 = vpop.permute.xlu0 %1089
        %1091 = vrot.lane.b32.xlu0 %v816, 32
        %v1092 = vpop.permute.xlu0 %1091
        %1093 = vrot.lane.b32.xlu0 %v819, 32
        %v1094 = vpop.permute.xlu0 %1093
        %1095 = vrot.lane.b32.xlu0 %v822, 32
        %v1096 = vpop.permute.xlu0 %1095
        %1097 = vrot.lane.b32.xlu0 %v825, 32
        %v1098 = vpop.permute.xlu0 %1097
        %1099 = vrot.lane.b32.xlu0 %v828, 32
        %v1100 = vpop.permute.xlu0 %1099
        %1101 = vrot.lane.b32.xlu0 %v831, 32
        %v1102 = vpop.permute.xlu0 %1101
        %1103 = vrot.lane.b32.xlu0 %v834, 32
        %v1104 = vpop.permute.xlu0 %1103
        %1105 = vrot.lane.b32.xlu0 %v837, 32
        %v1106 = vpop.permute.xlu0 %1105
        %1107 = vrot.lane.b32.xlu0 %v854, 32
        %v1108 = vpop.permute.xlu0 %1107
        %1109 = vrot.lane.b32.xlu0 %v792, 32
        %v1110 = vpop.permute.xlu0 %1109
        %vm1111 = vcmask 31744
        %v1113 = vsel %vm1111, %v530, %v856
        %v1115 = vsel %vm1111, %v531, %v858
        %v1117 = vsel %vm1111, %v532, %v860
        %v1119 = vsel %vm1111, %v533, %v862
        %v1121 = vsel %vm1111, %v534, %v864
        %v1123 = vsel %vm1111, %v535, %v866
        %v1125 = vsel %vm1111, %v536, %v868
        %v1127 = vsel %vm1111, %v537, %v870
        %v1129 = vsel %vm1111, %v538, %v872
        %v1131 = vsel %vm1111, %v539, %v874
        %v1133 = vsel %vm1111, %v540, %v876
        %v1135 = vsel %vm1111, %v541, %v878
        %v1137 = vsel %vm1111, %v542, %v880
        %v1139 = vsel %vm1111, %v543, %v882
        %v1141 = vsel %vm1111, %v544, %v884
        %v1143 = vsel %vm1111, %v545, %v886
        %vm1144 = vcmask 64512
        %v1146 = vsel %vm1144, %v1113, %v888
        %v1148 = vsel %vm1144, %v1115, %v890
        %v1150 = vsel %vm1144, %v1117, %v892
        %v1152 = vsel %vm1144, %v1119, %v894
        %v1154 = vsel %vm1144, %v1121, %v896
        %v1156 = vsel %vm1144, %v1123, %v898
        %v1158 = vsel %vm1144, %v1125, %v900
        %v1160 = vsel %vm1144, %v1127, %v902
        %v1162 = vsel %vm1144, %v1129, %v904
        %v1164 = vsel %vm1144, %v1131, %v906
        %v1166 = vsel %vm1144, %v1133, %v908
        %v1168 = vsel %vm1144, %v1135, %v910
        %v1170 = vsel %vm1144, %v1137, %v912
        %v1172 = vsel %vm1144, %v1139, %v914
        %v1174 = vsel %vm1144, %v1141, %v916
        %v1176 = vsel %vm1144, %v1143, %v918
        %vm1177 = vcmask 97280
        %v1179 = vsel %vm1177, %v1146, %v920
        %v1181 = vsel %vm1177, %v1148, %v922
        %v1183 = vsel %vm1177, %v1150, %v924
        %v1185 = vsel %vm1177, %v1152, %v926
        %v1187 = vsel %vm1177, %v1154, %v928
        %v1189 = vsel %vm1177, %v1156, %v930
        %v1191 = vsel %vm1177, %v1158, %v932
        %v1193 = vsel %vm1177, %v1160, %v934
        %v1195 = vsel %vm1177, %v1162, %v936
        %v1197 = vsel %vm1177, %v1164, %v938
        %v1199 = vsel %vm1177, %v1166, %v940
        %v1201 = vsel %vm1177, %v1168, %v942
        %v1203 = vsel %vm1177, %v1170, %v944
        %v1205 = vsel %vm1177, %v1172, %v946
        %v1207 = vsel %vm1177, %v1174, %v948
        %v1209 = vsel %vm1177, %v1176, %v950
        %vm1210 = vcmask 130048
        %v1212 = vsel %vm1210, %v1179, %v952
        %v1214 = vsel %vm1210, %v1181, %v954
        %v1216 = vsel %vm1210, %v1183, %v956
        %v1218 = vsel %vm1210, %v1185, %v958
        %v1220 = vsel %vm1210, %v1187, %v960
        %v1222 = vsel %vm1210, %v1189, %v962
        %v1224 = vsel %vm1210, %v1191, %v964
        %v1226 = vsel %vm1210, %v1193, %v966
        %v1228 = vsel %vm1210, %v1195, %v968
        %v1230 = vsel %vm1210, %v1197, %v970
        %v1232 = vsel %vm1210, %v1199, %v972
        %v1234 = vsel %vm1210, %v1201, %v974
        %v1236 = vsel %vm1210, %v1203, %v976
        %v1238 = vsel %vm1210, %v1205, %v978
        %v1240 = vsel %vm1210, %v1207, %v980
        %v1242 = vsel %vm1210, %v1209, %v982
        %vm1243 = vcmask 162816
        %v1245 = vsel %vm1243, %v1212, %v984
        %v1247 = vsel %vm1243, %v1214, %v986
        %v1249 = vsel %vm1243, %v1216, %v988
        %v1251 = vsel %vm1243, %v1218, %v990
        %v1253 = vsel %vm1243, %v1220, %v992
        %v1255 = vsel %vm1243, %v1222, %v994
        %v1257 = vsel %vm1243, %v1224, %v996
        %v1259 = vsel %vm1243, %v1226, %v998
        %v1261 = vsel %vm1243, %v1228, %v1000
        %v1263 = vsel %vm1243, %v1230, %v1002
        %v1265 = vsel %vm1243, %v1232, %v1004
        %v1267 = vsel %vm1243, %v1234, %v1006
        %v1269 = vsel %vm1243, %v1236, %v1008
        %v1271 = vsel %vm1243, %v1238, %v1010
        %v1273 = vsel %vm1243, %v1240, %v1012
        %v1275 = vsel %vm1243, %v1242, %v1014
        %vm1276 = vcmask 195584
        %v1278 = vsel %vm1276, %v1245, %v1016
        %v1280 = vsel %vm1276, %v1247, %v1018
        %v1282 = vsel %vm1276, %v1249, %v1020
        %v1284 = vsel %vm1276, %v1251, %v1022
        %v1286 = vsel %vm1276, %v1253, %v1024
        %v1288 = vsel %vm1276, %v1255, %v1026
        %v1290 = vsel %vm1276, %v1257, %v1028
        %v1292 = vsel %vm1276, %v1259, %v1030
        %v1294 = vsel %vm1276, %v1261, %v1032
        %v1296 = vsel %vm1276, %v1263, %v1034
        %v1298 = vsel %vm1276, %v1265, %v1036
        %v1300 = vsel %vm1276, %v1267, %v1038
        %v1302 = vsel %vm1276, %v1269, %v1040
        %v1304 = vsel %vm1276, %v1271, %v1042
        %v1306 = vsel %vm1276, %v1273, %v1044
        %v1308 = vsel %vm1276, %v1275, %v1046
        %vm1309 = vcmask 228352
        %v1311 = vsel %vm1309, %v1278, %v1048
        %v1313 = vsel %vm1309, %v1280, %v1050
        %v1315 = vsel %vm1309, %v1282, %v1052
        %v1317 = vsel %vm1309, %v1284, %v1054
        %v1319 = vsel %vm1309, %v1286, %v1056
        %v1321 = vsel %vm1309, %v1288, %v1058
        %v1323 = vsel %vm1309, %v1290, %v1060
        %v1325 = vsel %vm1309, %v1292, %v1062
        %v1327 = vsel %vm1309, %v1294, %v1064
        %v1329 = vsel %vm1309, %v1296, %v1066
        %v1331 = vsel %vm1309, %v1298, %v1068
        %v1333 = vsel %vm1309, %v1300, %v1070
        %v1335 = vsel %vm1309, %v1302, %v1072
        %v1337 = vsel %vm1309, %v1304, %v1074
        %v1339 = vsel %vm1309, %v1306, %v1076
        %v1341 = vsel %vm1309, %v1308, %v1078
        %vm1342 = vcmask 261120
        %v1344 = vsel %vm1342, %v1311, %v1080
        %v1346 = vsel %vm1342, %v1313, %v1082
        %v1348 = vsel %vm1342, %v1315, %v1084
        %v1350 = vsel %vm1342, %v1317, %v1086
        %v1352 = vsel %vm1342, %v1319, %v1088
        %v1354 = vsel %vm1342, %v1321, %v1090
        %v1356 = vsel %vm1342, %v1323, %v1092
        %v1358 = vsel %vm1342, %v1325, %v1094
        %v1360 = vsel %vm1342, %v1327, %v1096
        %v1362 = vsel %vm1342, %v1329, %v1098
        %v1364 = vsel %vm1342, %v1331, %v1100
        %v1366 = vsel %vm1342, %v1333, %v1102
        %v1368 = vsel %vm1342, %v1335, %v1104
        %v1370 = vsel %vm1342, %v1337, %v1106
        %v1372 = vsel %vm1342, %v1339, %v1108
        %v1374 = vsel %vm1342, %v1341, %v1110
        %v1375 = vld [vmem:[%s1] sm:$0xf]
        %v1376 = vld [vmem:[%s1 + $0x4] sm:$0xf]
        %v1377 = vld [vmem:[%s1 + $0x8] sm:$0xf]
        %v1378 = vld [vmem:[%s1 + $0xc] sm:$0xf]
        %v1379 = vld [vmem:[%s1 + $0x10] sm:$0x3]
        %v1385 = vunpack.c.l.b16 %v1375
        %v1386 = vunpack.c.l.b16 %v1376
        %v1387 = vunpack.c.l.b16 %v1377
        %v1388 = vunpack.c.l.b16 %v1378
        %v1389 = vunpack.c.l.b16 %v1379
        %v1390 = vpack.c.b16 %v1386, %v1385
        %v1391 = vpack.c.b16 %v1388, %v1387
        %v1392 = vpack.c.b16 %v1389, %v1389
        %vm1395 = vcmask 293888
        %v1396 = vsel %vm1395, %v1344, 0
        %v1398 = vsel %vm1395, %v1346, 0
        %v1400 = vsel %vm1395, %v1348, 0
        %v1402 = vsel %vm1395, %v1350, 0
        %v1404 = vsel %vm1395, %v1352, 0
        %v1406 = vsel %vm1395, %v1354, 0
        %v1408 = vsel %vm1395, %v1356, 0
        %v1410 = vsel %vm1395, %v1358, 0
        %v1412 = vsel %vm1395, %v1360, 0
        %v1414 = vsel %vm1395, %v1362, 0
        %v1416 = vsel %vm1395, %v1364, 0
        %v1418 = vsel %vm1395, %v1366, 0
        %v1420 = vsel %vm1395, %v1368, 0
        %v1422 = vsel %vm1395, %v1370, 0
        %v1424 = vsel %vm1395, %v1372, 0
        %v1426 = vsel %vm1395, %v1374, 0
        %vm1428 = vcmask 1041408
        %v1430 = vsel %vm1428, %v1392, 0
        %1432 = vmatpush.bf16.msra.mxu0 0
        %1433 = vmatpush.bf16.msra.mxu0 0
        %1434 = vmatpush.bf16.msra.mxu0 0
        %1435 = vmatpush.bf16.msra.mxu0 0
        %1436 = vmatpush.bf16.msra.mxu0 0
        %1437 = vmatpush.bf16.msra.mxu0 %v1430
        %1438 = vmatpush.bf16.msra.mxu0 %v1391
        %1439 = vmatpush.bf16.msra.mxu0 %v1390
        %1440 = vmatmul.bf16.gmra.mxu0 %v1396
        %v1441 = vpop.f32.mrf.mxu0
        %v1442 = vadd.f32 0.0, %v1441
        %v1443 = vpop.f32.mrf.mxu0
        %v1444 = vadd.f32 0.0, %v1443
        %1445 = vmatmul.bf16.gmra.mxu0 %v1398
        %v1446 = vpop.f32.mrf.mxu0
        %v1447 = vadd.f32 0.0, %v1446
        %v1448 = vpop.f32.mrf.mxu0
        %v1449 = vadd.f32 0.0, %v1448
        %1450 = vmatmul.bf16.gmra.mxu0 %v1400
        %v1451 = vpop.f32.mrf.mxu0
        %v1452 = vadd.f32 0.0, %v1451
        %v1453 = vpop.f32.mrf.mxu0
        %v1454 = vadd.f32 0.0, %v1453
        %1455 = vmatmul.bf16.gmra.mxu0 %v1402
        %v1456 = vpop.f32.mrf.mxu0
        %v1457 = vadd.f32 0.0, %v1456
        %v1458 = vpop.f32.mrf.mxu0
        %v1459 = vadd.f32 0.0, %v1458
        %1460 = vmatmul.bf16.gmra.mxu0 %v1404
        %v1461 = vpop.f32.mrf.mxu0
        %v1462 = vadd.f32 0.0, %v1461
        %v1463 = vpop.f32.mrf.mxu0
        %v1464 = vadd.f32 0.0, %v1463
        %1465 = vmatmul.bf16.gmra.mxu0 %v1406
        %v1466 = vpop.f32.mrf.mxu0
        %v1467 = vadd.f32 0.0, %v1466
        %v1468 = vpop.f32.mrf.mxu0
        %v1469 = vadd.f32 0.0, %v1468
        %1470 = vmatmul.bf16.gmra.mxu0 %v1408
        %v1471 = vpop.f32.mrf.mxu0
        %v1472 = vadd.f32 0.0, %v1471
        %v1473 = vpop.f32.mrf.mxu0
        %v1474 = vadd.f32 0.0, %v1473
        %1475 = vmatmul.bf16.gmra.mxu0 %v1410
        %v1476 = vpop.f32.mrf.mxu0
        %v1477 = vadd.f32 0.0, %v1476
        %v1478 = vpop.f32.mrf.mxu0
        %v1479 = vadd.f32 0.0, %v1478
        %1480 = vmatmul.bf16.gmra.mxu0 %v1412
        %v1481 = vpop.f32.mrf.mxu0
        %v1482 = vadd.f32 0.0, %v1481
        %v1483 = vpop.f32.mrf.mxu0
        %v1484 = vadd.f32 0.0, %v1483
        %1485 = vmatmul.bf16.gmra.mxu0 %v1414
        %v1486 = vpop.f32.mrf.mxu0
        %v1487 = vadd.f32 0.0, %v1486
        %v1488 = vpop.f32.mrf.mxu0
        %v1489 = vadd.f32 0.0, %v1488
        %1490 = vmatmul.bf16.gmra.mxu0 %v1416
        %v1491 = vpop.f32.mrf.mxu0
        %v1492 = vadd.f32 0.0, %v1491
        %v1493 = vpop.f32.mrf.mxu0
        %v1494 = vadd.f32 0.0, %v1493
        %1495 = vmatmul.bf16.gmra.mxu0 %v1418
        %v1496 = vpop.f32.mrf.mxu0
        %v1497 = vadd.f32 0.0, %v1496
        %v1498 = vpop.f32.mrf.mxu0
        %v1499 = vadd.f32 0.0, %v1498
        %1500 = vmatmul.bf16.gmra.mxu0 %v1420
        %v1501 = vpop.f32.mrf.mxu0
        %v1502 = vadd.f32 0.0, %v1501
        %v1503 = vpop.f32.mrf.mxu0
        %v1504 = vadd.f32 0.0, %v1503
        %1505 = vmatmul.bf16.gmra.mxu0 %v1422
        %v1506 = vpop.f32.mrf.mxu0
        %v1507 = vadd.f32 0.0, %v1506
        %v1508 = vpop.f32.mrf.mxu0
        %v1509 = vadd.f32 0.0, %v1508
        %1510 = vmatmul.bf16.gmra.mxu0 %v1424
        %v1511 = vpop.f32.mrf.mxu0
        %v1512 = vadd.f32 0.0, %v1511
        %v1513 = vpop.f32.mrf.mxu0
        %v1514 = vadd.f32 0.0, %v1513
        %1515 = vmatmul.bf16.gmra.mxu0 %v1426
        %v1516 = vpop.f32.mrf.mxu0
        %v1517 = vadd.f32 0.0, %v1516
        %v1518 = vpop.f32.mrf.mxu0
        %v1519 = vadd.f32 0.0, %v1518
        %1520 = vdwg.mxu0
        %v1521 = vld [vmem:[%s2] sm:$0x3]
        %v1522 = vperm.slane %v1521, 0
        %v1523 = vmul.f32 %v1442, %v1522
        %v1524 = vmul.f32 %v1444, %v1522
        %v1525 = vmul.f32 %v1447, %v1522
        %v1526 = vmul.f32 %v1449, %v1522
        %v1527 = vmul.f32 %v1452, %v1522
        %v1528 = vmul.f32 %v1454, %v1522
        %v1529 = vmul.f32 %v1457, %v1522
        %v1530 = vmul.f32 %v1459, %v1522
        %v1531 = vmul.f32 %v1462, %v1522
        %v1532 = vmul.f32 %v1464, %v1522
        %v1533 = vmul.f32 %v1467, %v1522
        %v1534 = vmul.f32 %v1469, %v1522
        %v1535 = vmul.f32 %v1472, %v1522
        %v1536 = vmul.f32 %v1474, %v1522
        %v1537 = vmul.f32 %v1477, %v1522
        %v1538 = vmul.f32 %v1479, %v1522
        %v1539 = vmul.f32 %v1482, %v1522
        %v1540 = vmul.f32 %v1484, %v1522
        %v1541 = vmul.f32 %v1487, %v1522
        %v1542 = vmul.f32 %v1489, %v1522
        %v1543 = vmul.f32 %v1492, %v1522
        %v1544 = vmul.f32 %v1494, %v1522
        %v1545 = vmul.f32 %v1497, %v1522
        %v1546 = vmul.f32 %v1499, %v1522
        %v1547 = vmul.f32 %v1502, %v1522
        %v1548 = vmul.f32 %v1504, %v1522
        %v1549 = vmul.f32 %v1507, %v1522
        %v1550 = vmul.f32 %v1509, %v1522
        %v1551 = vmul.f32 %v1512, %v1522
        %v1552 = vmul.f32 %v1514, %v1522
        %v1553 = vmul.f32 %v1517, %v1522
        %v1554 = vmul.f32 %v1519, %v1522
        %v1555 = vperm.slane %v1521, 1
        %v1556 = vadd.f32 %v1523, %v1555
        %v1557 = vadd.f32 %v1524, %v1555
        %v1558 = vadd.f32 %v1525, %v1555
        %v1559 = vadd.f32 %v1526, %v1555
        %v1560 = vadd.f32 %v1527, %v1555
        %v1561 = vadd.f32 %v1528, %v1555
        %v1562 = vadd.f32 %v1529, %v1555
        %v1563 = vadd.f32 %v1530, %v1555
        %v1564 = vadd.f32 %v1531, %v1555
        %v1565 = vadd.f32 %v1532, %v1555
        %v1566 = vadd.f32 %v1533, %v1555
        %v1567 = vadd.f32 %v1534, %v1555
        %v1568 = vadd.f32 %v1535, %v1555
        %v1569 = vadd.f32 %v1536, %v1555
        %v1570 = vadd.f32 %v1537, %v1555
        %v1571 = vadd.f32 %v1538, %v1555
        %v1572 = vadd.f32 %v1539, %v1555
        %v1573 = vadd.f32 %v1540, %v1555
        %v1574 = vadd.f32 %v1541, %v1555
        %v1575 = vadd.f32 %v1542, %v1555
        %v1576 = vadd.f32 %v1543, %v1555
        %v1577 = vadd.f32 %v1544, %v1555
        %v1578 = vadd.f32 %v1545, %v1555
        %v1579 = vadd.f32 %v1546, %v1555
        %v1580 = vadd.f32 %v1547, %v1555
        %v1581 = vadd.f32 %v1548, %v1555
        %v1582 = vadd.f32 %v1549, %v1555
        %v1583 = vadd.f32 %v1550, %v1555
        %v1584 = vadd.f32 %v1551, %v1555
        %v1585 = vadd.f32 %v1552, %v1555
        %v1586 = vadd.f32 %v1553, %v1555
        %v1587 = vadd.f32 %v1554, %v1555
        %v1588 = vmax.f32 %v1556, 0.0
        %v1589 = vmax.f32 %v1557, 0.0
        %v1590 = vmax.f32 %v1558, 0.0
        %v1591 = vmax.f32 %v1559, 0.0
        %v1592 = vmax.f32 %v1560, 0.0
        %v1593 = vmax.f32 %v1561, 0.0
        %v1594 = vmax.f32 %v1562, 0.0
        %v1595 = vmax.f32 %v1563, 0.0
        %v1596 = vmax.f32 %v1564, 0.0
        %v1597 = vmax.f32 %v1565, 0.0
        %v1598 = vmax.f32 %v1566, 0.0
        %v1599 = vmax.f32 %v1567, 0.0
        %v1600 = vmax.f32 %v1568, 0.0
        %v1601 = vmax.f32 %v1569, 0.0
        %v1602 = vmax.f32 %v1570, 0.0
        %v1603 = vmax.f32 %v1571, 0.0
        %v1604 = vmax.f32 %v1572, 0.0
        %v1605 = vmax.f32 %v1573, 0.0
        %v1606 = vmax.f32 %v1574, 0.0
        %v1607 = vmax.f32 %v1575, 0.0
        %v1608 = vmax.f32 %v1576, 0.0
        %v1609 = vmax.f32 %v1577, 0.0
        %v1610 = vmax.f32 %v1578, 0.0
        %v1611 = vmax.f32 %v1579, 0.0
        %v1612 = vmax.f32 %v1580, 0.0
        %v1613 = vmax.f32 %v1581, 0.0
        %v1614 = vmax.f32 %v1582, 0.0
        %v1615 = vmax.f32 %v1583, 0.0
        %v1616 = vmax.f32 %v1584, 0.0
        %v1617 = vmax.f32 %v1585, 0.0
        %v1618 = vmax.f32 %v1586, 0.0
        %v1619 = vmax.f32 %v1587, 0.0
        %v1620 = vpack.c.bf16 %v1588, %v1588
        %v1621 = vpack.c.bf16 %v1589, %v1589
        %v1622 = vpack.c.bf16 %v1590, %v1590
        %v1623 = vpack.c.bf16 %v1591, %v1591
        %v1624 = vpack.c.bf16 %v1592, %v1592
        %v1625 = vpack.c.bf16 %v1593, %v1593
        %v1626 = vpack.c.bf16 %v1594, %v1594
        %v1627 = vpack.c.bf16 %v1595, %v1595
        %v1628 = vpack.c.bf16 %v1596, %v1596
        %v1629 = vpack.c.bf16 %v1597, %v1597
        %v1630 = vpack.c.bf16 %v1598, %v1598
        %v1631 = vpack.c.bf16 %v1599, %v1599
        %v1632 = vpack.c.bf16 %v1600, %v1600
        %v1633 = vpack.c.bf16 %v1601, %v1601
        %v1634 = vpack.c.bf16 %v1602, %v1602
        %v1635 = vpack.c.bf16 %v1603, %v1603
        %v1636 = vpack.c.bf16 %v1604, %v1604
        %v1637 = vpack.c.bf16 %v1605, %v1605
        %v1638 = vpack.c.bf16 %v1606, %v1606
        %v1639 = vpack.c.bf16 %v1607, %v1607
        %v1640 = vpack.c.bf16 %v1608, %v1608
        %v1641 = vpack.c.bf16 %v1609, %v1609
        %v1642 = vpack.c.bf16 %v1610, %v1610
        %v1643 = vpack.c.bf16 %v1611, %v1611
        %v1644 = vpack.c.bf16 %v1612, %v1612
        %v1645 = vpack.c.bf16 %v1613, %v1613
        %v1646 = vpack.c.bf16 %v1614, %v1614
        %v1647 = vpack.c.bf16 %v1615, %v1615
        %v1648 = vpack.c.bf16 %v1616, %v1616
        %v1649 = vpack.c.bf16 %v1617, %v1617
        %v1650 = vpack.c.bf16 %v1618, %v1618
        %v1651 = vpack.c.bf16 %v1619, %v1619
        %v1684 = vunpack.c.l.b16 %v1620
        %v1685 = vunpack.c.l.b16 %v1621
        %v1686 = vunpack.c.l.b16 %v1622
        %v1687 = vunpack.c.l.b16 %v1623
        %v1688 = vunpack.c.l.b16 %v1624
        %v1689 = vunpack.c.l.b16 %v1625
        %v1690 = vunpack.c.l.b16 %v1626
        %v1691 = vunpack.c.l.b16 %v1627
        %v1692 = vunpack.c.l.b16 %v1628
        %v1693 = vunpack.c.l.b16 %v1629
        %v1694 = vunpack.c.l.b16 %v1630
        %v1695 = vunpack.c.l.b16 %v1631
        %v1696 = vunpack.c.l.b16 %v1632
        %v1697 = vunpack.c.l.b16 %v1633
        %v1698 = vunpack.c.l.b16 %v1634
        %v1699 = vunpack.c.l.b16 %v1635
        %v1700 = vunpack.c.l.b16 %v1636
        %v1701 = vunpack.c.l.b16 %v1637
        %v1702 = vunpack.c.l.b16 %v1638
        %v1703 = vunpack.c.l.b16 %v1639
        %v1704 = vunpack.c.l.b16 %v1640
        %v1705 = vunpack.c.l.b16 %v1641
        %v1706 = vunpack.c.l.b16 %v1642
        %v1707 = vunpack.c.l.b16 %v1643
        %v1708 = vunpack.c.l.b16 %v1644
        %v1709 = vunpack.c.l.b16 %v1645
        %v1710 = vunpack.c.l.b16 %v1646
        %v1711 = vunpack.c.l.b16 %v1647
        %v1712 = vunpack.c.l.b16 %v1648
        %v1713 = vunpack.c.l.b16 %v1649
        %v1714 = vunpack.c.l.b16 %v1650
        %v1715 = vunpack.c.l.b16 %v1651
        %v1716 = vpack.c.b16 %v1685, %v1684
        %v1717 = vpack.c.b16 %v1687, %v1686
        %v1718 = vpack.c.b16 %v1689, %v1688
        %v1719 = vpack.c.b16 %v1691, %v1690
        %v1720 = vpack.c.b16 %v1693, %v1692
        %v1721 = vpack.c.b16 %v1695, %v1694
        %v1722 = vpack.c.b16 %v1697, %v1696
        %v1723 = vpack.c.b16 %v1699, %v1698
        %v1724 = vpack.c.b16 %v1701, %v1700
        %v1725 = vpack.c.b16 %v1703, %v1702
        %v1726 = vpack.c.b16 %v1705, %v1704
        %v1727 = vpack.c.b16 %v1707, %v1706
        %v1728 = vpack.c.b16 %v1709, %v1708
        %v1729 = vpack.c.b16 %v1711, %v1710
        %v1730 = vpack.c.b16 %v1713, %v1712
        %v1731 = vpack.c.b16 %v1715, %v1714
        %v1733 = vshrl.u32 %v1716, 16
        %v1735 = vrot.slane %v1733, 7
        %v1736 = vshll.u32 %v1716, 16
        %v1738 = vor.u32 %v1735, %v1736
        %v1740 = vshrl.u32 %v1717, 16
        %v1742 = vrot.slane %v1740, 7
        %v1743 = vshll.u32 %v1717, 16
        %v1745 = vor.u32 %v1742, %v1743
        %v1747 = vshrl.u32 %v1718, 16
        %v1749 = vrot.slane %v1747, 7
        %v1750 = vshll.u32 %v1718, 16
        %v1752 = vor.u32 %v1749, %v1750
        %v1754 = vshrl.u32 %v1719, 16
        %v1756 = vrot.slane %v1754, 7
        %v1757 = vshll.u32 %v1719, 16
        %v1759 = vor.u32 %v1756, %v1757
        %v1761 = vshrl.u32 %v1720, 16
        %v1763 = vrot.slane %v1761, 7
        %v1764 = vshll.u32 %v1720, 16
        %v1766 = vor.u32 %v1763, %v1764
        %v1768 = vshrl.u32 %v1721, 16
        %v1770 = vrot.slane %v1768, 7
        %v1771 = vshll.u32 %v1721, 16
        %v1773 = vor.u32 %v1770, %v1771
        %v1775 = vshrl.u32 %v1722, 16
        %v1777 = vrot.slane %v1775, 7
        %v1778 = vshll.u32 %v1722, 16
        %v1780 = vor.u32 %v1777, %v1778
        %v1782 = vshrl.u32 %v1723, 16
        %v1784 = vrot.slane %v1782, 7
        %v1785 = vshll.u32 %v1723, 16
        %v1787 = vor.u32 %v1784, %v1785
        %v1789 = vshrl.u32 %v1724, 16
        %v1791 = vrot.slane %v1789, 7
        %v1792 = vshll.u32 %v1724, 16
        %v1794 = vor.u32 %v1791, %v1792
        %v1796 = vshrl.u32 %v1725, 16
        %v1798 = vrot.slane %v1796, 7
        %v1799 = vshll.u32 %v1725, 16
        %v1801 = vor.u32 %v1798, %v1799
        %v1803 = vshrl.u32 %v1726, 16
        %v1805 = vrot.slane %v1803, 7
        %v1806 = vshll.u32 %v1726, 16
        %v1808 = vor.u32 %v1805, %v1806
        %v1810 = vshrl.u32 %v1727, 16
        %v1812 = vrot.slane %v1810, 7
        %v1813 = vshll.u32 %v1727, 16
        %v1815 = vor.u32 %v1812, %v1813
        %v1817 = vshrl.u32 %v1728, 16
        %v1819 = vrot.slane %v1817, 7
        %v1820 = vshll.u32 %v1728, 16
        %v1822 = vor.u32 %v1819, %v1820
        %v1824 = vshrl.u32 %v1729, 16
        %v1826 = vrot.slane %v1824, 7
        %v1827 = vshll.u32 %v1729, 16
        %v1829 = vor.u32 %v1826, %v1827
        %v1831 = vshrl.u32 %v1730, 16
        %v1833 = vrot.slane %v1831, 7
        %v1834 = vshll.u32 %v1730, 16
        %v1836 = vor.u32 %v1833, %v1834
        %v1838 = vshrl.u32 %v1731, 16
        %v1840 = vrot.slane %v1838, 7
        %v1841 = vshll.u32 %v1731, 16
        %v1843 = vor.u32 %v1840, %v1841
        %v1876 = vsel %vm529, 0, %v1738
        %v1877 = vsel %vm529, 0, %v1745
        %v1878 = vsel %vm529, 0, %v1752
        %v1879 = vsel %vm529, 0, %v1759
        %v1880 = vsel %vm529, 0, %v1766
        %v1881 = vsel %vm529, 0, %v1773
        %v1882 = vsel %vm529, 0, %v1780
        %v1883 = vsel %vm529, 0, %v1787
        %v1884 = vsel %vm529, 0, %v1794
        %v1885 = vsel %vm529, 0, %v1801
        %v1886 = vsel %vm529, 0, %v1808
        %v1887 = vsel %vm529, 0, %v1815
        %v1888 = vsel %vm529, 0, %v1822
        %v1889 = vsel %vm529, 0, %v1829
        %v1890 = vsel %vm529, 0, %v1836
        %v1891 = vsel %vm529, 0, %v1843
        %v1892 = vsel %vm529, %v1735, 0
        %v1893 = vsel %vm529, %v1742, 0
        %v1894 = vsel %vm529, %v1749, 0
        %v1895 = vsel %vm529, %v1756, 0
        %v1896 = vsel %vm529, %v1763, 0
        %v1897 = vsel %vm529, %v1770, 0
        %v1898 = vsel %vm529, %v1777, 0
        %v1899 = vsel %vm529, %v1784, 0
        %v1900 = vsel %vm529, %v1791, 0
        %v1901 = vsel %vm529, %v1798, 0
        %v1902 = vsel %vm529, %v1805, 0
        %v1903 = vsel %vm529, %v1812, 0
        %v1904 = vsel %vm529, %v1819, 0
        %v1905 = vsel %vm529, %v1826, 0
        %v1906 = vsel %vm529, %v1833, 0
        %v1907 = vsel %vm529, %v1840, 0
        %v1909 = vshrl.u32 %v1876, 16
        %v1911 = vshll.u32 %v1876, 16
        %v1913 = vrot.slane %v1911, 1
        %v1914 = vor.u32 %v1909, %v1913
        %v1916 = vshll.u32 %v1892, 16
        %v1918 = vrot.slane %v1916, 1
        %v1919 = vsel %vm564, %v1914, %v1918
        %v1921 = vshrl.u32 %v1877, 16
        %v1923 = vshll.u32 %v1877, 16
        %v1925 = vrot.slane %v1923, 1
        %v1926 = vor.u32 %v1921, %v1925
        %v1928 = vshll.u32 %v1893, 16
        %v1930 = vrot.slane %v1928, 1
        %v1931 = vsel %vm564, %v1926, %v1930
        %v1933 = vshrl.u32 %v1878, 16
        %v1935 = vshll.u32 %v1878, 16
        %v1937 = vrot.slane %v1935, 1
        %v1938 = vor.u32 %v1933, %v1937
        %v1940 = vshll.u32 %v1894, 16
        %v1942 = vrot.slane %v1940, 1
        %v1943 = vsel %vm564, %v1938, %v1942
        %v1945 = vshrl.u32 %v1879, 16
        %v1947 = vshll.u32 %v1879, 16
        %v1949 = vrot.slane %v1947, 1
        %v1950 = vor.u32 %v1945, %v1949
        %v1952 = vshll.u32 %v1895, 16
        %v1954 = vrot.slane %v1952, 1
        %v1955 = vsel %vm564, %v1950, %v1954
        %v1957 = vshrl.u32 %v1880, 16
        %v1959 = vshll.u32 %v1880, 16
        %v1961 = vrot.slane %v1959, 1
        %v1962 = vor.u32 %v1957, %v1961
        %v1964 = vshll.u32 %v1896, 16
        %v1966 = vrot.slane %v1964, 1
        %v1967 = vsel %vm564, %v1962, %v1966
        %v1969 = vshrl.u32 %v1881, 16
        %v1971 = vshll.u32 %v1881, 16
        %v1973 = vrot.slane %v1971, 1
        %v1974 = vor.u32 %v1969, %v1973
        %v1976 = vshll.u32 %v1897, 16
        %v1978 = vrot.slane %v1976, 1
        %v1979 = vsel %vm564, %v1974, %v1978
        %v1981 = vshrl.u32 %v1882, 16
        %v1983 = vshll.u32 %v1882, 16
        %v1985 = vrot.slane %v1983, 1
        %v1986 = vor.u32 %v1981, %v1985
        %v1988 = vshll.u32 %v1898, 16
        %v1990 = vrot.slane %v1988, 1
        %v1991 = vsel %vm564, %v1986, %v1990
        %v1993 = vshrl.u32 %v1883, 16
        %v1995 = vshll.u32 %v1883, 16
        %v1997 = vrot.slane %v1995, 1
        %v1998 = vor.u32 %v1993, %v1997
        %v2000 = vshll.u32 %v1899, 16
        %v2002 = vrot.slane %v2000, 1
        %v2003 = vsel %vm564, %v1998, %v2002
        %v2005 = vshrl.u32 %v1884, 16
        %v2007 = vshll.u32 %v1884, 16
        %v2009 = vrot.slane %v2007, 1
        %v2010 = vor.u32 %v2005, %v2009
        %v2012 = vshll.u32 %v1900, 16
        %v2014 = vrot.slane %v2012, 1
        %v2015 = vsel %vm564, %v2010, %v2014
        %v2017 = vshrl.u32 %v1885, 16
        %v2019 = vshll.u32 %v1885, 16
        %v2021 = vrot.slane %v2019, 1
        %v2022 = vor.u32 %v2017, %v2021
        %v2024 = vshll.u32 %v1901, 16
        %v2026 = vrot.slane %v2024, 1
        %v2027 = vsel %vm564, %v2022, %v2026
        %v2029 = vshrl.u32 %v1886, 16
        %v2031 = vshll.u32 %v1886, 16
        %v2033 = vrot.slane %v2031, 1
        %v2034 = vor.u32 %v2029, %v2033
        %v2036 = vshll.u32 %v1902, 16
        %v2038 = vrot.slane %v2036, 1
        %v2039 = vsel %vm564, %v2034, %v2038
        %v2041 = vshrl.u32 %v1887, 16
        %v2043 = vshll.u32 %v1887, 16
        %v2045 = vrot.slane %v2043, 1
        %v2046 = vor.u32 %v2041, %v2045
        %v2048 = vshll.u32 %v1903, 16
        %v2050 = vrot.slane %v2048, 1
        %v2051 = vsel %vm564, %v2046, %v2050
        %v2053 = vshrl.u32 %v1888, 16
        %v2055 = vshll.u32 %v1888, 16
        %v2057 = vrot.slane %v2055, 1
        %v2058 = vor.u32 %v2053, %v2057
        %v2060 = vshll.u32 %v1904, 16
        %v2062 = vrot.slane %v2060, 1
        %v2063 = vsel %vm564, %v2058, %v2062
        %v2065 = vshrl.u32 %v1889, 16
        %v2067 = vshll.u32 %v1889, 16
        %v2069 = vrot.slane %v2067, 1
        %v2070 = vor.u32 %v2065, %v2069
        %v2072 = vshll.u32 %v1905, 16
        %v2074 = vrot.slane %v2072, 1
        %v2075 = vsel %vm564, %v2070, %v2074
        %v2077 = vshrl.u32 %v1890, 16
        %v2079 = vshll.u32 %v1890, 16
        %v2081 = vrot.slane %v2079, 1
        %v2082 = vor.u32 %v2077, %v2081
        %v2084 = vshll.u32 %v1906, 16
        %v2086 = vrot.slane %v2084, 1
        %v2087 = vsel %vm564, %v2082, %v2086
        %v2118 = vrot.slane %v1876, 1
        %v2119 = vrot.slane %v1892, 1
        %v2120 = vsel %vm789, %v2118, %v2119
        %v2121 = vrot.slane %v1877, 1
        %v2122 = vrot.slane %v1893, 1
        %v2123 = vsel %vm789, %v2121, %v2122
        %v2124 = vrot.slane %v1878, 1
        %v2125 = vrot.slane %v1894, 1
        %v2126 = vsel %vm789, %v2124, %v2125
        %v2127 = vrot.slane %v1879, 1
        %v2128 = vrot.slane %v1895, 1
        %v2129 = vsel %vm789, %v2127, %v2128
        %v2130 = vrot.slane %v1880, 1
        %v2131 = vrot.slane %v1896, 1
        %v2132 = vsel %vm789, %v2130, %v2131
        %v2133 = vrot.slane %v1881, 1
        %v2134 = vrot.slane %v1897, 1
        %v2135 = vsel %vm789, %v2133, %v2134
        %v2136 = vrot.slane %v1882, 1
        %v2137 = vrot.slane %v1898, 1
        %v2138 = vsel %vm789, %v2136, %v2137
        %v2139 = vrot.slane %v1883, 1
        %v2140 = vrot.slane %v1899, 1
        %v2141 = vsel %vm789, %v2139, %v2140
        %v2142 = vrot.slane %v1884, 1
        %v2143 = vrot.slane %v1900, 1
        %v2144 = vsel %vm789, %v2142, %v2143
        %v2145 = vrot.slane %v1885, 1
        %v2146 = vrot.slane %v1901, 1
        %v2147 = vsel %vm789, %v2145, %v2146
        %v2148 = vrot.slane %v1886, 1
        %v2149 = vrot.slane %v1902, 1
        %v2150 = vsel %vm789, %v2148, %v2149
        %v2151 = vrot.slane %v1887, 1
        %v2152 = vrot.slane %v1903, 1
        %v2153 = vsel %vm789, %v2151, %v2152
        %v2154 = vrot.slane %v1888, 1
        %v2155 = vrot.slane %v1904, 1
        %v2156 = vsel %vm789, %v2154, %v2155
        %v2157 = vrot.slane %v1889, 1
        %v2158 = vrot.slane %v1905, 1
        %v2159 = vsel %vm789, %v2157, %v2158
        %v2160 = vrot.slane %v1890, 1
        %v2161 = vrot.slane %v1906, 1
        %v2162 = vsel %vm789, %v2160, %v2161
        %v2164 = vshrl.u32 %v1891, 16
        %v2166 = vshll.u32 %v1891, 16
        %v2168 = vrot.slane %v2166, 1
        %v2169 = vor.u32 %v2164, %v2168
        %v2171 = vshll.u32 %v1907, 16
        %v2173 = vrot.slane %v2171, 1
        %v2174 = vsel %vm564, %v2169, %v2173
        %v2177 = vrot.slane %v1891, 1
        %v2178 = vrot.slane %v1907, 1
        %v2179 = vsel %vm789, %v2177, %v2178
        %2180 = vrot.lane.b32.xlu0 %v576, 64
        %v2181 = vpop.permute.xlu0 %2180
        %2182 = vrot.lane.b32.xlu0 %v1919, 64
        %v2183 = vpop.permute.xlu0 %2182
        %2184 = vrot.lane.b32.xlu0 %v1931, 64
        %v2185 = vpop.permute.xlu0 %2184
        %2186 = vrot.lane.b32.xlu0 %v1943, 64
        %v2187 = vpop.permute.xlu0 %2186
        %2188 = vrot.lane.b32.xlu0 %v1955, 64
        %v2189 = vpop.permute.xlu0 %2188
        %2190 = vrot.lane.b32.xlu0 %v1967, 64
        %v2191 = vpop.permute.xlu0 %2190
        %2192 = vrot.lane.b32.xlu0 %v1979, 64
        %v2193 = vpop.permute.xlu0 %2192
        %2194 = vrot.lane.b32.xlu0 %v1991, 64
        %v2195 = vpop.permute.xlu0 %2194
        %2196 = vrot.lane.b32.xlu0 %v2003, 64
        %v2197 = vpop.permute.xlu0 %2196
        %2198 = vrot.lane.b32.xlu0 %v2015, 64
        %v2199 = vpop.permute.xlu0 %2198
        %2200 = vrot.lane.b32.xlu0 %v2027, 64
        %v2201 = vpop.permute.xlu0 %2200
        %2202 = vrot.lane.b32.xlu0 %v2039, 64
        %v2203 = vpop.permute.xlu0 %2202
        %2204 = vrot.lane.b32.xlu0 %v2051, 64
        %v2205 = vpop.permute.xlu0 %2204
        %2206 = vrot.lane.b32.xlu0 %v2063, 64
        %v2207 = vpop.permute.xlu0 %2206
        %2208 = vrot.lane.b32.xlu0 %v2075, 64
        %v2209 = vpop.permute.xlu0 %2208
        %2210 = vrot.lane.b32.xlu0 %v2087, 64
        %v2211 = vpop.permute.xlu0 %2210
        %2212 = vrot.lane.b32.xlu0 %v1876, 64
        %v2213 = vpop.permute.xlu0 %2212
        %2214 = vrot.lane.b32.xlu0 %v1877, 64
        %v2215 = vpop.permute.xlu0 %2214
        %2216 = vrot.lane.b32.xlu0 %v1878, 64
        %v2217 = vpop.permute.xlu0 %2216
        %2218 = vrot.lane.b32.xlu0 %v1879, 64
        %v2219 = vpop.permute.xlu0 %2218
        %2220 = vrot.lane.b32.xlu0 %v1880, 64
        %v2221 = vpop.permute.xlu0 %2220
        %2222 = vrot.lane.b32.xlu0 %v1881, 64
        %v2223 = vpop.permute.xlu0 %2222
        %2224 = vrot.lane.b32.xlu0 %v1882, 64
        %v2225 = vpop.permute.xlu0 %2224
        %2226 = vrot.lane.b32.xlu0 %v1883, 64
        %v2227 = vpop.permute.xlu0 %2226
        %2228 = vrot.lane.b32.xlu0 %v1884, 64
        %v2229 = vpop.permute.xlu0 %2228
        %2230 = vrot.lane.b32.xlu0 %v1885, 64
        %v2231 = vpop.permute.xlu0 %2230
        %2232 = vrot.lane.b32.xlu0 %v1886, 64
        %v2233 = vpop.permute.xlu0 %2232
        %2234 = vrot.lane.b32.xlu0 %v1887, 64
        %v2235 = vpop.permute.xlu0 %2234
        %2236 = vrot.lane.b32.xlu0 %v1888, 64
        %v2237 = vpop.permute.xlu0 %2236
        %2238 = vrot.lane.b32.xlu0 %v1889, 64
        %v2239 = vpop.permute.xlu0 %2238
        %2240 = vrot.lane.b32.xlu0 %v1890, 64
        %v2241 = vpop.permute.xlu0 %2240
        %2242 = vrot.lane.b32.xlu0 %v1891, 64
        %v2243 = vpop.permute.xlu0 %2242
        %2244 = vrot.lane.b32.xlu0 %v2120, 64
        %v2245 = vpop.permute.xlu0 %2244
        %2246 = vrot.lane.b32.xlu0 %v2123, 64
        %v2247 = vpop.permute.xlu0 %2246
        %2248 = vrot.lane.b32.xlu0 %v2126, 64
        %v2249 = vpop.permute.xlu0 %2248
        %2250 = vrot.lane.b32.xlu0 %v2129, 64
        %v2251 = vpop.permute.xlu0 %2250
        %2252 = vrot.lane.b32.xlu0 %v2132, 64
        %v2253 = vpop.permute.xlu0 %2252
        %2254 = vrot.lane.b32.xlu0 %v2135, 64
        %v2255 = vpop.permute.xlu0 %2254
        %2256 = vrot.lane.b32.xlu0 %v2138, 64
        %v2257 = vpop.permute.xlu0 %2256
        %2258 = vrot.lane.b32.xlu0 %v2141, 64
        %v2259 = vpop.permute.xlu0 %2258
        %2260 = vrot.lane.b32.xlu0 %v2144, 64
        %v2261 = vpop.permute.xlu0 %2260
        %2262 = vrot.lane.b32.xlu0 %v2147, 64
        %v2263 = vpop.permute.xlu0 %2262
        %2264 = vrot.lane.b32.xlu0 %v2150, 64
        %v2265 = vpop.permute.xlu0 %2264
        %2266 = vrot.lane.b32.xlu0 %v2153, 64
        %v2267 = vpop.permute.xlu0 %2266
        %2268 = vrot.lane.b32.xlu0 %v2156, 64
        %v2269 = vpop.permute.xlu0 %2268
        %2270 = vrot.lane.b32.xlu0 %v2159, 64
        %v2271 = vpop.permute.xlu0 %2270
        %2272 = vrot.lane.b32.xlu0 %v2162, 64
        %v2273 = vpop.permute.xlu0 %2272
        %2274 = vrot.lane.b32.xlu0 %v2179, 64
        %v2275 = vpop.permute.xlu0 %2274
        %2276 = vrot.lane.b32.xlu0 %v2174, 64
        %v2277 = vpop.permute.xlu0 %2276
        %vm2278 = vcmask 523264
        %v2280 = vsel %vm2278, %v530, %v2181
        %v2283 = vsel %vm2278, %v1876, %v2183
        %v2286 = vsel %vm2278, %v1877, %v2185
        %v2289 = vsel %vm2278, %v1878, %v2187
        %v2292 = vsel %vm2278, %v1879, %v2189
        %v2295 = vsel %vm2278, %v1880, %v2191
        %v2298 = vsel %vm2278, %v1881, %v2193
        %v2301 = vsel %vm2278, %v1882, %v2195
        %v2304 = vsel %vm2278, %v1883, %v2197
        %v2307 = vsel %vm2278, %v1884, %v2199
        %v2310 = vsel %vm2278, %v1885, %v2201
        %v2313 = vsel %vm2278, %v1886, %v2203
        %v2316 = vsel %vm2278, %v1887, %v2205
        %v2319 = vsel %vm2278, %v1888, %v2207
        %v2322 = vsel %vm2278, %v1889, %v2209
        %v2325 = vsel %vm2278, %v1890, %v2211
        %v2329 = vsel %vm2278, %v792, %v2213
        %v2333 = vsel %vm2278, %v2120, %v2215
        %v2337 = vsel %vm2278, %v2123, %v2217
        %v2341 = vsel %vm2278, %v2126, %v2219
        %v2345 = vsel %vm2278, %v2129, %v2221
        %v2349 = vsel %vm2278, %v2132, %v2223
        %v2353 = vsel %vm2278, %v2135, %v2225
        %v2357 = vsel %vm2278, %v2138, %v2227
        %v2361 = vsel %vm2278, %v2141, %v2229
        %v2365 = vsel %vm2278, %v2144, %v2231
        %v2369 = vsel %vm2278, %v2147, %v2233
        %v2373 = vsel %vm2278, %v2150, %v2235
        %v2377 = vsel %vm2278, %v2153, %v2237
        %v2381 = vsel %vm2278, %v2156, %v2239
        %v2385 = vsel %vm2278, %v2159, %v2241
        %v2389 = vsel %vm2278, %v2162, %v2243
        %v2393 = vsel %vm2278, %v1919, %v2245
        %v2397 = vsel %vm2278, %v1931, %v2247
        %v2401 = vsel %vm2278, %v1943, %v2249
        %v2405 = vsel %vm2278, %v1955, %v2251
        %v2409 = vsel %vm2278, %v1967, %v2253
        %v2413 = vsel %vm2278, %v1979, %v2255
        %v2417 = vsel %vm2278, %v1991, %v2257
        %v2421 = vsel %vm2278, %v2003, %v2259
        %v2425 = vsel %vm2278, %v2015, %v2261
        %v2429 = vsel %vm2278, %v2027, %v2263
        %v2433 = vsel %vm2278, %v2039, %v2265
        %v2437 = vsel %vm2278, %v2051, %v2267
        %v2441 = vsel %vm2278, %v2063, %v2269
        %v2445 = vsel %vm2278, %v2075, %v2271
        %v2449 = vsel %vm2278, %v2087, %v2273
        %v2453 = vsel %vm2278, %v2174, %v2275
        %v2456 = vsel %vm2278, %v1891, %v2277
        %v2458 = vld [vmem:[%s3] sm:$0xf]
        %v2459 = vld [vmem:[%s3 + $0x4] sm:$0xf]
        %v2460 = vld [vmem:[%s3 + $0x8] sm:$0xf]
        %v2461 = vld [vmem:[%s3 + $0xc] sm:$0xf]
        %v2462 = vld [vmem:[%s3 + $0x10] sm:$0xf]
        %v2463 = vld [vmem:[%s3 + $0x14] sm:$0xf]
        %v2464 = vld [vmem:[%s3 + $0x18] sm:$0xf]
        %v2465 = vld [vmem:[%s3 + $0x1c] sm:$0xf]
        %v2466 = vld [vmem:[%s3 + $0x20] sm:$0xf]
        %v2467 = vld [vmem:[%s3 + $0x24] sm:$0xf]
        %v2468 = vld [vmem:[%s3 + $0x28] sm:$0xf]
        %v2469 = vld [vmem:[%s3 + $0x2c] sm:$0xf]
        %v2470 = vld [vmem:[%s3 + $0x30] sm:$0xf]
        %v2471 = vld [vmem:[%s3 + $0x34] sm:$0xf]
        %v2472 = vld [vmem:[%s3 + $0x38] sm:$0xf]
        %v2473 = vld [vmem:[%s3 + $0x3c] sm:$0xf]
        %v2474 = vld [vmem:[%s3 + $0x40] sm:$0xf]
        %v2475 = vld [vmem:[%s3 + $0x44] sm:$0xf]
        %v2476 = vld [vmem:[%s3 + $0x48] sm:$0xf]
        %v2477 = vld [vmem:[%s3 + $0x4c] sm:$0xf]
        %v2478 = vld [vmem:[%s3 + $0x50] sm:$0xf]
        %v2479 = vld [vmem:[%s3 + $0x54] sm:$0xf]
        %v2480 = vld [vmem:[%s3 + $0x58] sm:$0xf]
        %v2481 = vld [vmem:[%s3 + $0x5c] sm:$0xf]
        %v2482 = vld [vmem:[%s3 + $0x60] sm:$0xf]
        %v2483 = vld [vmem:[%s3 + $0x64] sm:$0xf]
        %v2484 = vld [vmem:[%s3 + $0x68] sm:$0xf]
        %v2485 = vld [vmem:[%s3 + $0x6c] sm:$0xf]
        %v2486 = vld [vmem:[%s3 + $0x70] sm:$0xf]
        %v2487 = vld [vmem:[%s3 + $0x74] sm:$0xf]
        %v2488 = vld [vmem:[%s3 + $0x78] sm:$0xf]
        %v2489 = vld [vmem:[%s3 + $0x7c] sm:$0xf]
        %v2490 = vld [vmem:[%s3 + $0x80] sm:$0xf]
        %v2491 = vld [vmem:[%s3 + $0x84] sm:$0xf]
        %v2492 = vld [vmem:[%s3 + $0x88] sm:$0xf]
        %v2493 = vld [vmem:[%s3 + $0x8c] sm:$0xf]
        %v2494 = vld [vmem:[%s3 + $0x90] sm:$0xf]
        %v2495 = vld [vmem:[%s3 + $0x94] sm:$0xf]
        %v2496 = vld [vmem:[%s3 + $0x98] sm:$0xf]
        %v2497 = vld [vmem:[%s3 + $0x9c] sm:$0xf]
        %v2498 = vld [vmem:[%s3 + $0xa0] sm:$0xf]
        %v2499 = vld [vmem:[%s3 + $0xa4] sm:$0xf]
        %v2500 = vld [vmem:[%s3 + $0xa8] sm:$0xf]
        %v2501 = vld [vmem:[%s3 + $0xac] sm:$0xf]
        %v2502 = vld [vmem:[%s3 + $0xb0] sm:$0xf]
        %v2503 = vld [vmem:[%s3 + $0xb4] sm:$0xf]
        %v2504 = vld [vmem:[%s3 + $0xb8] sm:$0xf]
        %v2505 = vld [vmem:[%s3 + $0xbc] sm:$0xf]
        %v2506 = vld [vmem:[%s3 + $0xc0] sm:$0xf]
        %v2507 = vld [vmem:[%s3 + $0xc4] sm:$0xf]
        %v2508 = vld [vmem:[%s3 + $0xc8] sm:$0xf]
        %v2509 = vld [vmem:[%s3 + $0xcc] sm:$0xf]
        %v2510 = vld [vmem:[%s3 + $0xd0] sm:$0xf]
        %v2511 = vld [vmem:[%s3 + $0xd4] sm:$0xf]
        %v2512 = vld [vmem:[%s3 + $0xd8] sm:$0xf]
        %v2513 = vld [vmem:[%s3 + $0xdc] sm:$0xf]
        %v2514 = vld [vmem:[%s3 + $0xe0] sm:$0xf]
        %v2515 = vld [vmem:[%s3 + $0xe4] sm:$0xf]
        %v2516 = vld [vmem:[%s3 + $0xe8] sm:$0xf]
        %v2517 = vld [vmem:[%s3 + $0xec] sm:$0xf]
        %v2518 = vld [vmem:[%s3 + $0xf0] sm:$0xf]
        %v2519 = vld [vmem:[%s3 + $0xf4] sm:$0xf]
        %v2520 = vld [vmem:[%s3 + $0xf8] sm:$0xf]
        %v2521 = vld [vmem:[%s3 + $0xfc] sm:$0xf]
        %v2522 = vld [vmem:[%s3 + $0x100] sm:$0xf]
        %v2523 = vld [vmem:[%s3 + $0x104] sm:$0xf]
        %v2524 = vld [vmem:[%s3 + $0x108] sm:$0xf]
        %v2525 = vld [vmem:[%s3 + $0x10c] sm:$0xf]
        %v2526 = vld [vmem:[%s3 + $0x110] sm:$0xf]
        %v2527 = vld [vmem:[%s3 + $0x114] sm:$0xf]
        %v2528 = vld [vmem:[%s3 + $0x118] sm:$0xf]
        %v2529 = vld [vmem:[%s3 + $0x11c] sm:$0xf]
        %v2602 = vunpack.c.l.b16 %v2458
        %v2603 = vunpack.c.l.b16 %v2459
        %v2604 = vunpack.c.l.b16 %v2460
        %v2605 = vunpack.c.l.b16 %v2461
        %v2606 = vunpack.c.l.b16 %v2462
        %v2607 = vunpack.c.l.b16 %v2463
        %v2608 = vunpack.c.l.b16 %v2464
        %v2609 = vunpack.c.l.b16 %v2465
        %v2610 = vunpack.c.l.b16 %v2466
        %v2611 = vunpack.c.l.b16 %v2467
        %v2612 = vunpack.c.l.b16 %v2468
        %v2613 = vunpack.c.l.b16 %v2469
        %v2614 = vunpack.c.l.b16 %v2470
        %v2615 = vunpack.c.l.b16 %v2471
        %v2616 = vunpack.c.l.b16 %v2472
        %v2617 = vunpack.c.l.b16 %v2473
        %v2618 = vunpack.c.l.b16 %v2474
        %v2619 = vunpack.c.l.b16 %v2475
        %v2620 = vunpack.c.l.b16 %v2476
        %v2621 = vunpack.c.l.b16 %v2477
        %v2622 = vunpack.c.l.b16 %v2478
        %v2623 = vunpack.c.l.b16 %v2479
        %v2624 = vunpack.c.l.b16 %v2480
        %v2625 = vunpack.c.l.b16 %v2481
        %v2626 = vunpack.c.l.b16 %v2482
        %v2627 = vunpack.c.l.b16 %v2483
        %v2628 = vunpack.c.l.b16 %v2484
        %v2629 = vunpack.c.l.b16 %v2485
        %v2630 = vunpack.c.l.b16 %v2486
        %v2631 = vunpack.c.l.b16 %v2487
        %v2632 = vunpack.c.l.b16 %v2488
        %v2633 = vunpack.c.l.b16 %v2489
        %v2634 = vunpack.c.l.b16 %v2490
        %v2635 = vunpack.c.l.b16 %v2491
        %v2636 = vunpack.c.l.b16 %v2492
        %v2637 = vunpack.c.l.b16 %v2493
        %v2638 = vunpack.c.l.b16 %v2494
        %v2639 = vunpack.c.l.b16 %v2495
        %v2640 = vunpack.c.l.b16 %v2496
        %v2641 = vunpack.c.l.b16 %v2497
        %v2642 = vunpack.c.l.b16 %v2498
        %v2643 = vunpack.c.l.b16 %v2499
        %v2644 = vunpack.c.l.b16 %v2500
        %v2645 = vunpack.c.l.b16 %v2501
        %v2646 = vunpack.c.l.b16 %v2502
        %v2647 = vunpack.c.l.b16 %v2503
        %v2648 = vunpack.c.l.b16 %v2504
        %v2649 = vunpack.c.l.b16 %v2505
        %v2650 = vunpack.c.l.b16 %v2506
        %v2651 = vunpack.c.l.b16 %v2507
        %v2652 = vunpack.c.l.b16 %v2508
        %v2653 = vunpack.c.l.b16 %v2509
        %v2654 = vunpack.c.l.b16 %v2510
        %v2655 = vunpack.c.l.b16 %v2511
        %v2656 = vunpack.c.l.b16 %v2512
        %v2657 = vunpack.c.l.b16 %v2513
        %v2658 = vunpack.c.l.b16 %v2514
        %v2659 = vunpack.c.l.b16 %v2515
        %v2660 = vunpack.c.l.b16 %v2516
        %v2661 = vunpack.c.l.b16 %v2517
        %v2662 = vunpack.c.l.b16 %v2518
        %v2663 = vunpack.c.l.b16 %v2519
        %v2664 = vunpack.c.l.b16 %v2520
        %v2665 = vunpack.c.l.b16 %v2521
        %v2666 = vunpack.c.l.b16 %v2522
        %v2667 = vunpack.c.l.b16 %v2523
        %v2668 = vunpack.c.l.b16 %v2524
        %v2669 = vunpack.c.l.b16 %v2525
        %v2670 = vunpack.c.l.b16 %v2526
        %v2671 = vunpack.c.l.b16 %v2527
        %v2672 = vunpack.c.l.b16 %v2528
        %v2673 = vunpack.c.l.b16 %v2529
        %v2674 = vpack.c.b16 %v2603, %v2602
        %v2675 = vpack.c.b16 %v2605, %v2604
        %v2676 = vpack.c.b16 %v2607, %v2606
        %v2677 = vpack.c.b16 %v2609, %v2608
        %v2678 = vpack.c.b16 %v2611, %v2610
        %v2679 = vpack.c.b16 %v2613, %v2612
        %v2680 = vpack.c.b16 %v2615, %v2614
        %v2681 = vpack.c.b16 %v2617, %v2616
        %v2682 = vpack.c.b16 %v2619, %v2618
        %v2683 = vpack.c.b16 %v2621, %v2620
        %v2684 = vpack.c.b16 %v2623, %v2622
        %v2685 = vpack.c.b16 %v2625, %v2624
        %v2686 = vpack.c.b16 %v2627, %v2626
        %v2687 = vpack.c.b16 %v2629, %v2628
        %v2688 = vpack.c.b16 %v2631, %v2630
        %v2689 = vpack.c.b16 %v2633, %v2632
        %v2690 = vpack.c.b16 %v2635, %v2634
        %v2691 = vpack.c.b16 %v2637, %v2636
        %v2692 = vpack.c.b16 %v2639, %v2638
        %v2693 = vpack.c.b16 %v2641, %v2640
        %v2694 = vpack.c.b16 %v2643, %v2642
        %v2695 = vpack.c.b16 %v2645, %v2644
        %v2696 = vpack.c.b16 %v2647, %v2646
        %v2697 = vpack.c.b16 %v2649, %v2648
        %v2698 = vpack.c.b16 %v2651, %v2650
        %v2699 = vpack.c.b16 %v2653, %v2652
        %v2700 = vpack.c.b16 %v2655, %v2654
        %v2701 = vpack.c.b16 %v2657, %v2656
        %v2702 = vpack.c.b16 %v2659, %v2658
        %v2703 = vpack.c.b16 %v2661, %v2660
        %v2704 = vpack.c.b16 %v2663, %v2662
        %v2705 = vpack.c.b16 %v2665, %v2664
        %v2706 = vpack.c.b16 %v2667, %v2666
        %v2707 = vpack.c.b16 %v2669, %v2668
        %v2708 = vpack.c.b16 %v2671, %v2670
        %v2709 = vpack.c.b16 %v2673, %v2672
        %v2746 = vsel %vm2278, %v2123, 0
        %v2748 = vsel %vm2278, %v2126, 0
        %v2750 = vsel %vm2278, %v2129, 0
        %v2752 = vsel %vm2278, %v2132, 0
        %v2754 = vsel %vm2278, %v2135, 0
        %v2756 = vsel %vm2278, %v2138, 0
        %v2758 = vsel %vm2278, %v2141, 0
        %v2760 = vsel %vm2278, %v2144, 0
        %v2762 = vsel %vm2278, %v2147, 0
        %v2764 = vsel %vm2278, %v2150, 0
        %v2766 = vsel %vm2278, %v2153, 0
        %v2768 = vsel %vm2278, %v2156, 0
        %v2770 = vsel %vm2278, %v2159, 0
        %v2772 = vsel %vm2278, %v2162, 0
        %v2775 = vsel %vm2278, %v2179, 0
        %v2777 = vsel %vm2278, %v792, 0
        %2779 = vmatpush.bf16.msra.mxu0 %v2681
        %2780 = vmatpush.bf16.msra.mxu0 %v2680
        %2781 = vmatpush.bf16.msra.mxu0 %v2679
        %2782 = vmatpush.bf16.msra.mxu0 %v2678
        %2783 = vmatpush.bf16.msra.mxu0 %v2677
        %2784 = vmatpush.bf16.msra.mxu0 %v2676
        %2785 = vmatpush.bf16.msra.mxu0 %v2675
        %2786 = vmatpush.bf16.msra.mxu0 %v2674
        %2787 = vmatmul.bf16.gmra.mxu0 %v2280
        %v2788 = vpop.f32.mrf.mxu0
        %v2789 = vadd.f32 0.0, %v2788
        %v2790 = vpop.f32.mrf.mxu0
        %v2791 = vadd.f32 0.0, %v2790
        %2792 = vmatmul.bf16.gmra.mxu0 %v2283
        %v2793 = vpop.f32.mrf.mxu0
        %v2794 = vadd.f32 0.0, %v2793
        %v2795 = vpop.f32.mrf.mxu0
        %v2796 = vadd.f32 0.0, %v2795
        %2797 = vmatmul.bf16.gmra.mxu0 %v2286
        %v2798 = vpop.f32.mrf.mxu0
        %v2799 = vadd.f32 0.0, %v2798
        %v2800 = vpop.f32.mrf.mxu0
        %v2801 = vadd.f32 0.0, %v2800
        %2802 = vmatmul.bf16.gmra.mxu0 %v2289
        %v2803 = vpop.f32.mrf.mxu0
        %v2804 = vadd.f32 0.0, %v2803
        %v2805 = vpop.f32.mrf.mxu0
        %v2806 = vadd.f32 0.0, %v2805
        %2807 = vmatmul.bf16.gmra.mxu0 %v2292
        %v2808 = vpop.f32.mrf.mxu0
        %v2809 = vadd.f32 0.0, %v2808
        %v2810 = vpop.f32.mrf.mxu0
        %v2811 = vadd.f32 0.0, %v2810
        %2812 = vmatmul.bf16.gmra.mxu0 %v2295
        %v2813 = vpop.f32.mrf.mxu0
        %v2814 = vadd.f32 0.0, %v2813
        %v2815 = vpop.f32.mrf.mxu0
        %v2816 = vadd.f32 0.0, %v2815
        %2817 = vmatmul.bf16.gmra.mxu0 %v2298
        %v2818 = vpop.f32.mrf.mxu0
        %v2819 = vadd.f32 0.0, %v2818
        %v2820 = vpop.f32.mrf.mxu0
        %v2821 = vadd.f32 0.0, %v2820
        %2822 = vmatmul.bf16.gmra.mxu0 %v2301
        %v2823 = vpop.f32.mrf.mxu0
        %v2824 = vadd.f32 0.0, %v2823
        %v2825 = vpop.f32.mrf.mxu0
        %v2826 = vadd.f32 0.0, %v2825
        %2827 = vmatmul.bf16.gmra.mxu0 %v2304
        %v2828 = vpop.f32.mrf.mxu0
        %v2829 = vadd.f32 0.0, %v2828
        %v2830 = vpop.f32.mrf.mxu0
        %v2831 = vadd.f32 0.0, %v2830
        %2832 = vmatmul.bf16.gmra.mxu0 %v2307
        %v2833 = vpop.f32.mrf.mxu0
        %v2834 = vadd.f32 0.0, %v2833
        %v2835 = vpop.f32.mrf.mxu0
        %v2836 = vadd.f32 0.0, %v2835
        %2837 = vmatmul.bf16.gmra.mxu0 %v2310
        %v2838 = vpop.f32.mrf.mxu0
        %v2839 = vadd.f32 0.0, %v2838
        %v2840 = vpop.f32.mrf.mxu0
        %v2841 = vadd.f32 0.0, %v2840
        %2842 = vmatmul.bf16.gmra.mxu0 %v2313
        %v2843 = vpop.f32.mrf.mxu0
        %v2844 = vadd.f32 0.0, %v2843
        %v2845 = vpop.f32.mrf.mxu0
        %v2846 = vadd.f32 0.0, %v2845
        %2847 = vmatmul.bf16.gmra.mxu0 %v2316
        %v2848 = vpop.f32.mrf.mxu0
        %v2849 = vadd.f32 0.0, %v2848
        %v2850 = vpop.f32.mrf.mxu0
        %v2851 = vadd.f32 0.0, %v2850
        %2852 = vmatmul.bf16.gmra.mxu0 %v2319
        %v2853 = vpop.f32.mrf.mxu0
        %v2854 = vadd.f32 0.0, %v2853
        %v2855 = vpop.f32.mrf.mxu0
        %v2856 = vadd.f32 0.0, %v2855
        %2857 = vmatmul.bf16.gmra.mxu0 %v2322
        %v2858 = vpop.f32.mrf.mxu0
        %v2859 = vadd.f32 0.0, %v2858
        %v2860 = vpop.f32.mrf.mxu0
        %v2861 = vadd.f32 0.0, %v2860
        %2862 = vmatmul.bf16.gmra.mxu0 %v2325
        %v2863 = vpop.f32.mrf.mxu0
        %v2864 = vadd.f32 0.0, %v2863
        %v2865 = vpop.f32.mrf.mxu0
        %v2866 = vadd.f32 0.0, %v2865
        %2867 = vdwg.mxu0
        %2868 = vmatpush.bf16.msra.mxu0 %v2689
        %2869 = vmatpush.bf16.msra.mxu0 %v2688
        %2870 = vmatpush.bf16.msra.mxu0 %v2687
        %2871 = vmatpush.bf16.msra.mxu0 %v2686
        %2872 = vmatpush.bf16.msra.mxu0 %v2685
        %2873 = vmatpush.bf16.msra.mxu0 %v2684
        %2874 = vmatpush.bf16.msra.mxu0 %v2683
        %2875 = vmatpush.bf16.msra.mxu0 %v2682
        %2876 = vmatmul.bf16.gmra.mxu0 %v2329
        %v2877 = vpop.f32.mrf.mxu0
        %v2878 = vadd.f32 %v2789, %v2877
        %v2879 = vpop.f32.mrf.mxu0
        %v2880 = vadd.f32 %v2791, %v2879
        %2881 = vmatmul.bf16.gmra.mxu0 %v2333
        %v2882 = vpop.f32.mrf.mxu0
        %v2883 = vadd.f32 %v2794, %v2882
        %v2884 = vpop.f32.mrf.mxu0
        %v2885 = vadd.f32 %v2796, %v2884
        %2886 = vmatmul.bf16.gmra.mxu0 %v2337
        %v2887 = vpop.f32.mrf.mxu0
        %v2888 = vadd.f32 %v2799, %v2887
        %v2889 = vpop.f32.mrf.mxu0
        %v2890 = vadd.f32 %v2801, %v2889
        %2891 = vmatmul.bf16.gmra.mxu0 %v2341
        %v2892 = vpop.f32.mrf.mxu0
        %v2893 = vadd.f32 %v2804, %v2892
        %v2894 = vpop.f32.mrf.mxu0
        %v2895 = vadd.f32 %v2806, %v2894
        %2896 = vmatmul.bf16.gmra.mxu0 %v2345
        %v2897 = vpop.f32.mrf.mxu0
        %v2898 = vadd.f32 %v2809, %v2897
        %v2899 = vpop.f32.mrf.mxu0
        %v2900 = vadd.f32 %v2811, %v2899
        %2901 = vmatmul.bf16.gmra.mxu0 %v2349
        %v2902 = vpop.f32.mrf.mxu0
        %v2903 = vadd.f32 %v2814, %v2902
        %v2904 = vpop.f32.mrf.mxu0
        %v2905 = vadd.f32 %v2816, %v2904
        %2906 = vmatmul.bf16.gmra.mxu0 %v2353
        %v2907 = vpop.f32.mrf.mxu0
        %v2908 = vadd.f32 %v2819, %v2907
        %v2909 = vpop.f32.mrf.mxu0
        %v2910 = vadd.f32 %v2821, %v2909
        %2911 = vmatmul.bf16.gmra.mxu0 %v2357
        %v2912 = vpop.f32.mrf.mxu0
        %v2913 = vadd.f32 %v2824, %v2912
        %v2914 = vpop.f32.mrf.mxu0
        %v2915 = vadd.f32 %v2826, %v2914
        %2916 = vmatmul.bf16.gmra.mxu0 %v2361
        %v2917 = vpop.f32.mrf.mxu0
        %v2918 = vadd.f32 %v2829, %v2917
        %v2919 = vpop.f32.mrf.mxu0
        %v2920 = vadd.f32 %v2831, %v2919
        %2921 = vmatmul.bf16.gmra.mxu0 %v2365
        %v2922 = vpop.f32.mrf.mxu0
        %v2923 = vadd.f32 %v2834, %v2922
        %v2924 = vpop.f32.mrf.mxu0
        %v2925 = vadd.f32 %v2836, %v2924
        %2926 = vmatmul.bf16.gmra.mxu0 %v2369
        %v2927 = vpop.f32.mrf.mxu0
        %v2928 = vadd.f32 %v2839, %v2927
        %v2929 = vpop.f32.mrf.mxu0
        %v2930 = vadd.f32 %v2841, %v2929
        %2931 = vmatmul.bf16.gmra.mxu0 %v2373
        %v2932 = vpop.f32.mrf.mxu0
        %v2933 = vadd.f32 %v2844, %v2932
        %v2934 = vpop.f32.mrf.mxu0
        %v2935 = vadd.f32 %v2846, %v2934
        %2936 = vmatmul.bf16.gmra.mxu0 %v2377
        %v2937 = vpop.f32.mrf.mxu0
        %v2938 = vadd.f32 %v2849, %v2937
        %v2939 = vpop.f32.mrf.mxu0
        %v2940 = vadd.f32 %v2851, %v2939
        %2941 = vmatmul.bf16.gmra.mxu0 %v2381
        %v2942 = vpop.f32.mrf.mxu0
        %v2943 = vadd.f32 %v2854, %v2942
        %v2944 = vpop.f32.mrf.mxu0
        %v2945 = vadd.f32 %v2856, %v2944
        %2946 = vmatmul.bf16.gmra.mxu0 %v2385
        %v2947 = vpop.f32.mrf.mxu0
        %v2948 = vadd.f32 %v2859, %v2947
        %v2949 = vpop.f32.mrf.mxu0
        %v2950 = vadd.f32 %v2861, %v2949
        %2951 = vmatmul.bf16.gmra.mxu0 %v2389
        %v2952 = vpop.f32.mrf.mxu0
        %v2953 = vadd.f32 %v2864, %v2952
        %v2954 = vpop.f32.mrf.mxu0
        %v2955 = vadd.f32 %v2866, %v2954
        %2956 = vdwg.mxu0
        %2957 = vmatpush.bf16.msra.mxu0 %v2697
        %2958 = vmatpush.bf16.msra.mxu0 %v2696
        %2959 = vmatpush.bf16.msra.mxu0 %v2695
        %2960 = vmatpush.bf16.msra.mxu0 %v2694
        %2961 = vmatpush.bf16.msra.mxu0 %v2693
        %2962 = vmatpush.bf16.msra.mxu0 %v2692
        %2963 = vmatpush.bf16.msra.mxu0 %v2691
        %2964 = vmatpush.bf16.msra.mxu0 %v2690
        %2965 = vmatmul.bf16.gmra.mxu0 %v2393
        %v2966 = vpop.f32.mrf.mxu0
        %v2967 = vadd.f32 %v2878, %v2966
        %v2968 = vpop.f32.mrf.mxu0
        %v2969 = vadd.f32 %v2880, %v2968
        %2970 = vmatmul.bf16.gmra.mxu0 %v2397
        %v2971 = vpop.f32.mrf.mxu0
        %v2972 = vadd.f32 %v2883, %v2971
        %v2973 = vpop.f32.mrf.mxu0
        %v2974 = vadd.f32 %v2885, %v2973
        %2975 = vmatmul.bf16.gmra.mxu0 %v2401
        %v2976 = vpop.f32.mrf.mxu0
        %v2977 = vadd.f32 %v2888, %v2976
        %v2978 = vpop.f32.mrf.mxu0
        %v2979 = vadd.f32 %v2890, %v2978
        %2980 = vmatmul.bf16.gmra.mxu0 %v2405
        %v2981 = vpop.f32.mrf.mxu0
        %v2982 = vadd.f32 %v2893, %v2981
        %v2983 = vpop.f32.mrf.mxu0
        %v2984 = vadd.f32 %v2895, %v2983
        %2985 = vmatmul.bf16.gmra.mxu0 %v2409
        %v2986 = vpop.f32.mrf.mxu0
        %v2987 = vadd.f32 %v2898, %v2986
        %v2988 = vpop.f32.mrf.mxu0
        %v2989 = vadd.f32 %v2900, %v2988
        %2990 = vmatmul.bf16.gmra.mxu0 %v2413
        %v2991 = vpop.f32.mrf.mxu0
        %v2992 = vadd.f32 %v2903, %v2991
        %v2993 = vpop.f32.mrf.mxu0
        %v2994 = vadd.f32 %v2905, %v2993
        %2995 = vmatmul.bf16.gmra.mxu0 %v2417
        %v2996 = vpop.f32.mrf.mxu0
        %v2997 = vadd.f32 %v2908, %v2996
        %v2998 = vpop.f32.mrf.mxu0
        %v2999 = vadd.f32 %v2910, %v2998
        %3000 = vmatmul.bf16.gmra.mxu0 %v2421
        %v3001 = vpop.f32.mrf.mxu0
        %v3002 = vadd.f32 %v2913, %v3001
        %v3003 = vpop.f32.mrf.mxu0
        %v3004 = vadd.f32 %v2915, %v3003
        %3005 = vmatmul.bf16.gmra.mxu0 %v2425
        %v3006 = vpop.f32.mrf.mxu0
        %v3007 = vadd.f32 %v2918, %v3006
        %v3008 = vpop.f32.mrf.mxu0
        %v3009 = vadd.f32 %v2920, %v3008
        %3010 = vmatmul.bf16.gmra.mxu0 %v2429
        %v3011 = vpop.f32.mrf.mxu0
        %v3012 = vadd.f32 %v2923, %v3011
        %v3013 = vpop.f32.mrf.mxu0
        %v3014 = vadd.f32 %v2925, %v3013
        %3015 = vmatmul.bf16.gmra.mxu0 %v2433
        %v3016 = vpop.f32.mrf.mxu0
        %v3017 = vadd.f32 %v2928, %v3016
        %v3018 = vpop.f32.mrf.mxu0
        %v3019 = vadd.f32 %v2930, %v3018
        %3020 = vmatmul.bf16.gmra.mxu0 %v2437
        %v3021 = vpop.f32.mrf.mxu0
        %v3022 = vadd.f32 %v2933, %v3021
        %v3023 = vpop.f32.mrf.mxu0
        %v3024 = vadd.f32 %v2935, %v3023
        %3025 = vmatmul.bf16.gmra.mxu0 %v2441
        %v3026 = vpop.f32.mrf.mxu0
        %v3027 = vadd.f32 %v2938, %v3026
        %v3028 = vpop.f32.mrf.mxu0
        %v3029 = vadd.f32 %v2940, %v3028
        %3030 = vmatmul.bf16.gmra.mxu0 %v2445
        %v3031 = vpop.f32.mrf.mxu0
        %v3032 = vadd.f32 %v2943, %v3031
        %v3033 = vpop.f32.mrf.mxu0
        %v3034 = vadd.f32 %v2945, %v3033
        %3035 = vmatmul.bf16.gmra.mxu0 %v2449
        %v3036 = vpop.f32.mrf.mxu0
        %v3037 = vadd.f32 %v2948, %v3036
        %v3038 = vpop.f32.mrf.mxu0
        %v3039 = vadd.f32 %v2950, %v3038
        %3040 = vmatmul.bf16.gmra.mxu0 %v2453
        %v3041 = vpop.f32.mrf.mxu0
        %v3042 = vadd.f32 %v2953, %v3041
        %v3043 = vpop.f32.mrf.mxu0
        %v3044 = vadd.f32 %v2955, %v3043
        %3045 = vdwg.mxu0
        %3046 = vmatpush.bf16.msra.mxu0 %v2705
        %3047 = vmatpush.bf16.msra.mxu0 %v2704
        %3048 = vmatpush.bf16.msra.mxu0 %v2703
        %3049 = vmatpush.bf16.msra.mxu0 %v2702
        %3050 = vmatpush.bf16.msra.mxu0 %v2701
        %3051 = vmatpush.bf16.msra.mxu0 %v2700
        %3052 = vmatpush.bf16.msra.mxu0 %v2699
        %3053 = vmatpush.bf16.msra.mxu0 %v2698
        %3054 = vmatmul.bf16.gmra.mxu0 %v2286
        %v3055 = vpop.f32.mrf.mxu0
        %v3056 = vadd.f32 %v2967, %v3055
        %v3057 = vpop.f32.mrf.mxu0
        %v3058 = vadd.f32 %v2969, %v3057
        %3059 = vmatmul.bf16.gmra.mxu0 %v2289
        %v3060 = vpop.f32.mrf.mxu0
        %v3061 = vadd.f32 %v2972, %v3060
        %v3062 = vpop.f32.mrf.mxu0
        %v3063 = vadd.f32 %v2974, %v3062
        %3064 = vmatmul.bf16.gmra.mxu0 %v2292
        %v3065 = vpop.f32.mrf.mxu0
        %v3066 = vadd.f32 %v2977, %v3065
        %v3067 = vpop.f32.mrf.mxu0
        %v3068 = vadd.f32 %v2979, %v3067
        %3069 = vmatmul.bf16.gmra.mxu0 %v2295
        %v3070 = vpop.f32.mrf.mxu0
        %v3071 = vadd.f32 %v2982, %v3070
        %v3072 = vpop.f32.mrf.mxu0
        %v3073 = vadd.f32 %v2984, %v3072
        %3074 = vmatmul.bf16.gmra.mxu0 %v2298
        %v3075 = vpop.f32.mrf.mxu0
        %v3076 = vadd.f32 %v2987, %v3075
        %v3077 = vpop.f32.mrf.mxu0
        %v3078 = vadd.f32 %v2989, %v3077
        %3079 = vmatmul.bf16.gmra.mxu0 %v2301
        %v3080 = vpop.f32.mrf.mxu0
        %v3081 = vadd.f32 %v2992, %v3080
        %v3082 = vpop.f32.mrf.mxu0
        %v3083 = vadd.f32 %v2994, %v3082
        %3084 = vmatmul.bf16.gmra.mxu0 %v2304
        %v3085 = vpop.f32.mrf.mxu0
        %v3086 = vadd.f32 %v2997, %v3085
        %v3087 = vpop.f32.mrf.mxu0
        %v3088 = vadd.f32 %v2999, %v3087
        %3089 = vmatmul.bf16.gmra.mxu0 %v2307
        %v3090 = vpop.f32.mrf.mxu0
        %v3091 = vadd.f32 %v3002, %v3090
        %v3092 = vpop.f32.mrf.mxu0
        %v3093 = vadd.f32 %v3004, %v3092
        %3094 = vmatmul.bf16.gmra.mxu0 %v2310
        %v3095 = vpop.f32.mrf.mxu0
        %v3096 = vadd.f32 %v3007, %v3095
        %v3097 = vpop.f32.mrf.mxu0
        %v3098 = vadd.f32 %v3009, %v3097
        %3099 = vmatmul.bf16.gmra.mxu0 %v2313
        %v3100 = vpop.f32.mrf.mxu0
        %v3101 = vadd.f32 %v3012, %v3100
        %v3102 = vpop.f32.mrf.mxu0
        %v3103 = vadd.f32 %v3014, %v3102
        %3104 = vmatmul.bf16.gmra.mxu0 %v2316
        %v3105 = vpop.f32.mrf.mxu0
        %v3106 = vadd.f32 %v3017, %v3105
        %v3107 = vpop.f32.mrf.mxu0
        %v3108 = vadd.f32 %v3019, %v3107
        %3109 = vmatmul.bf16.gmra.mxu0 %v2319
        %v3110 = vpop.f32.mrf.mxu0
        %v3111 = vadd.f32 %v3022, %v3110
        %v3112 = vpop.f32.mrf.mxu0
        %v3113 = vadd.f32 %v3024, %v3112
        %3114 = vmatmul.bf16.gmra.mxu0 %v2322
        %v3115 = vpop.f32.mrf.mxu0
        %v3116 = vadd.f32 %v3027, %v3115
        %v3117 = vpop.f32.mrf.mxu0
        %v3118 = vadd.f32 %v3029, %v3117
        %3119 = vmatmul.bf16.gmra.mxu0 %v2325
        %v3120 = vpop.f32.mrf.mxu0
        %v3121 = vadd.f32 %v3032, %v3120
        %v3122 = vpop.f32.mrf.mxu0
        %v3123 = vadd.f32 %v3034, %v3122
        %3124 = vmatmul.bf16.gmra.mxu0 %v2456
        %v3125 = vpop.f32.mrf.mxu0
        %v3126 = vadd.f32 %v3037, %v3125
        %v3127 = vpop.f32.mrf.mxu0
        %v3128 = vadd.f32 %v3039, %v3127
        %3129 = vmatmul.bf16.gmra.mxu0 %v2280
        %v3130 = vpop.f32.mrf.mxu0
        %v3131 = vadd.f32 %v3042, %v3130
        %v3132 = vpop.f32.mrf.mxu0
        %v3133 = vadd.f32 %v3044, %v3132
        %3134 = vdwg.mxu0
        %3135 = vmatpush.bf16.msra.mxu0 0
        %3136 = vmatpush.bf16.msra.mxu0 0
        %3137 = vmatpush.bf16.msra.mxu0 0
        %3138 = vmatpush.bf16.msra.mxu0 0
        %3139 = vmatpush.bf16.msra.mxu0 %v2709
        %3140 = vmatpush.bf16.msra.mxu0 %v2708
        %3141 = vmatpush.bf16.msra.mxu0 %v2707
        %3142 = vmatpush.bf16.msra.mxu0 %v2706
        %3143 = vmatmul.bf16.gmra.mxu0 %v2746
        %v3144 = vpop.f32.mrf.mxu0
        %v3145 = vadd.f32 %v3056, %v3144
        %v3146 = vpop.f32.mrf.mxu0
        %v3147 = vadd.f32 %v3058, %v3146
        %3148 = vmatmul.bf16.gmra.mxu0 %v2748
        %v3149 = vpop.f32.mrf.mxu0
        %v3150 = vadd.f32 %v3061, %v3149
        %v3151 = vpop.f32.mrf.mxu0
        %v3152 = vadd.f32 %v3063, %v3151
        %3153 = vmatmul.bf16.gmra.mxu0 %v2750
        %v3154 = vpop.f32.mrf.mxu0
        %v3155 = vadd.f32 %v3066, %v3154
        %v3156 = vpop.f32.mrf.mxu0
        %v3157 = vadd.f32 %v3068, %v3156
        %3158 = vmatmul.bf16.gmra.mxu0 %v2752
        %v3159 = vpop.f32.mrf.mxu0
        %v3160 = vadd.f32 %v3071, %v3159
        %v3161 = vpop.f32.mrf.mxu0
        %v3162 = vadd.f32 %v3073, %v3161
        %3163 = vmatmul.bf16.gmra.mxu0 %v2754
        %v3164 = vpop.f32.mrf.mxu0
        %v3165 = vadd.f32 %v3076, %v3164
        %v3166 = vpop.f32.mrf.mxu0
        %v3167 = vadd.f32 %v3078, %v3166
        %3168 = vmatmul.bf16.gmra.mxu0 %v2756
        %v3169 = vpop.f32.mrf.mxu0
        %v3170 = vadd.f32 %v3081, %v3169
        %v3171 = vpop.f32.mrf.mxu0
        %v3172 = vadd.f32 %v3083, %v3171
        %3173 = vmatmul.bf16.gmra.mxu0 %v2758
        %v3174 = vpop.f32.mrf.mxu0
        %v3175 = vadd.f32 %v3086, %v3174
        %v3176 = vpop.f32.mrf.mxu0
        %v3177 = vadd.f32 %v3088, %v3176
        %3178 = vmatmul.bf16.gmra.mxu0 %v2760
        %v3179 = vpop.f32.mrf.mxu0
        %v3180 = vadd.f32 %v3091, %v3179
        %v3181 = vpop.f32.mrf.mxu0
        %v3182 = vadd.f32 %v3093, %v3181
        %3183 = vmatmul.bf16.gmra.mxu0 %v2762
        %v3184 = vpop.f32.mrf.mxu0
        %v3185 = vadd.f32 %v3096, %v3184
        %v3186 = vpop.f32.mrf.mxu0
        %v3187 = vadd.f32 %v3098, %v3186
        %3188 = vmatmul.bf16.gmra.mxu0 %v2764
        %v3189 = vpop.f32.mrf.mxu0
        %v3190 = vadd.f32 %v3101, %v3189
        %v3191 = vpop.f32.mrf.mxu0
        %v3192 = vadd.f32 %v3103, %v3191
        %3193 = vmatmul.bf16.gmra.mxu0 %v2766
        %v3194 = vpop.f32.mrf.mxu0
        %v3195 = vadd.f32 %v3106, %v3194
        %v3196 = vpop.f32.mrf.mxu0
        %v3197 = vadd.f32 %v3108, %v3196
        %3198 = vmatmul.bf16.gmra.mxu0 %v2768
        %v3199 = vpop.f32.mrf.mxu0
        %v3200 = vadd.f32 %v3111, %v3199
        %v3201 = vpop.f32.mrf.mxu0
        %v3202 = vadd.f32 %v3113, %v3201
        %3203 = vmatmul.bf16.gmra.mxu0 %v2770
        %v3204 = vpop.f32.mrf.mxu0
        %v3205 = vadd.f32 %v3116, %v3204
        %v3206 = vpop.f32.mrf.mxu0
        %v3207 = vadd.f32 %v3118, %v3206
        %3208 = vmatmul.bf16.gmra.mxu0 %v2772
        %v3209 = vpop.f32.mrf.mxu0
        %v3210 = vadd.f32 %v3121, %v3209
        %v3211 = vpop.f32.mrf.mxu0
        %v3212 = vadd.f32 %v3123, %v3211
        %3213 = vmatmul.bf16.gmra.mxu0 %v2775
        %v3214 = vpop.f32.mrf.mxu0
        %v3215 = vadd.f32 %v3126, %v3214
        %v3216 = vpop.f32.mrf.mxu0
        %v3217 = vadd.f32 %v3128, %v3216
        %3218 = vmatmul.bf16.gmra.mxu0 %v2777
        %v3219 = vpop.f32.mrf.mxu0
        %v3220 = vadd.f32 %v3131, %v3219
        %v3221 = vpop.f32.mrf.mxu0
        %v3222 = vadd.f32 %v3133, %v3221
        %3223 = vdwg.mxu0
        %v3224 = vld [vmem:[%s4] sm:$0x3]
        %v3225 = vperm.slane %v3224, 0
        %v3226 = vmul.f32 %v3145, %v3225
        %v3227 = vmul.f32 %v3147, %v3225
        %v3228 = vmul.f32 %v3150, %v3225
        %v3229 = vmul.f32 %v3152, %v3225
        %v3230 = vmul.f32 %v3155, %v3225
        %v3231 = vmul.f32 %v3157, %v3225
        %v3232 = vmul.f32 %v3160, %v3225
        %v3233 = vmul.f32 %v3162, %v3225
        %v3234 = vmul.f32 %v3165, %v3225
        %v3235 = vmul.f32 %v3167, %v3225
        %v3236 = vmul.f32 %v3170, %v3225
        %v3237 = vmul.f32 %v3172, %v3225
        %v3238 = vmul.f32 %v3175, %v3225
        %v3239 = vmul.f32 %v3177, %v3225
        %v3240 = vmul.f32 %v3180, %v3225
        %v3241 = vmul.f32 %v3182, %v3225
        %v3242 = vmul.f32 %v3185, %v3225
        %v3243 = vmul.f32 %v3187, %v3225
        %v3244 = vmul.f32 %v3190, %v3225
        %v3245 = vmul.f32 %v3192, %v3225
        %v3246 = vmul.f32 %v3195, %v3225
        %v3247 = vmul.f32 %v3197, %v3225
        %v3248 = vmul.f32 %v3200, %v3225
        %v3249 = vmul.f32 %v3202, %v3225
        %v3250 = vmul.f32 %v3205, %v3225
        %v3251 = vmul.f32 %v3207, %v3225
        %v3252 = vmul.f32 %v3210, %v3225
        %v3253 = vmul.f32 %v3212, %v3225
        %v3254 = vmul.f32 %v3215, %v3225
        %v3255 = vmul.f32 %v3217, %v3225
        %v3256 = vmul.f32 %v3220, %v3225
        %v3257 = vmul.f32 %v3222, %v3225
        %v3258 = vperm.slane %v3224, 1
        %v3259 = vadd.f32 %v3226, %v3258
        %v3260 = vadd.f32 %v3227, %v3258
        %v3261 = vadd.f32 %v3228, %v3258
        %v3262 = vadd.f32 %v3229, %v3258
        %v3263 = vadd.f32 %v3230, %v3258
        %v3264 = vadd.f32 %v3231, %v3258
        %v3265 = vadd.f32 %v3232, %v3258
        %v3266 = vadd.f32 %v3233, %v3258
        %v3267 = vadd.f32 %v3234, %v3258
        %v3268 = vadd.f32 %v3235, %v3258
        %v3269 = vadd.f32 %v3236, %v3258
        %v3270 = vadd.f32 %v3237, %v3258
        %v3271 = vadd.f32 %v3238, %v3258
        %v3272 = vadd.f32 %v3239, %v3258
        %v3273 = vadd.f32 %v3240, %v3258
        %v3274 = vadd.f32 %v3241, %v3258
        %v3275 = vadd.f32 %v3242, %v3258
        %v3276 = vadd.f32 %v3243, %v3258
        %v3277 = vadd.f32 %v3244, %v3258
        %v3278 = vadd.f32 %v3245, %v3258
        %v3279 = vadd.f32 %v3246, %v3258
        %v3280 = vadd.f32 %v3247, %v3258
        %v3281 = vadd.f32 %v3248, %v3258
        %v3282 = vadd.f32 %v3249, %v3258
        %v3283 = vadd.f32 %v3250, %v3258
        %v3284 = vadd.f32 %v3251, %v3258
        %v3285 = vadd.f32 %v3252, %v3258
        %v3286 = vadd.f32 %v3253, %v3258
        %v3287 = vadd.f32 %v3254, %v3258
        %v3288 = vadd.f32 %v3255, %v3258
        %v3289 = vadd.f32 %v3256, %v3258
        %v3290 = vadd.f32 %v3257, %v3258
        %v3291 = vmax.f32 %v3259, 0.0
        %v3292 = vmax.f32 %v3260, 0.0
        %v3293 = vmax.f32 %v3261, 0.0
        %v3294 = vmax.f32 %v3262, 0.0
        %v3295 = vmax.f32 %v3263, 0.0
        %v3296 = vmax.f32 %v3264, 0.0
        %v3297 = vmax.f32 %v3265, 0.0
        %v3298 = vmax.f32 %v3266, 0.0
        %v3299 = vmax.f32 %v3267, 0.0
        %v3300 = vmax.f32 %v3268, 0.0
        %v3301 = vmax.f32 %v3269, 0.0
        %v3302 = vmax.f32 %v3270, 0.0
        %v3303 = vmax.f32 %v3271, 0.0
        %v3304 = vmax.f32 %v3272, 0.0
        %v3305 = vmax.f32 %v3273, 0.0
        %v3306 = vmax.f32 %v3274, 0.0
        %v3307 = vmax.f32 %v3275, 0.0
        %v3308 = vmax.f32 %v3276, 0.0
        %v3309 = vmax.f32 %v3277, 0.0
        %v3310 = vmax.f32 %v3278, 0.0
        %v3311 = vmax.f32 %v3279, 0.0
        %v3312 = vmax.f32 %v3280, 0.0
        %v3313 = vmax.f32 %v3281, 0.0
        %v3314 = vmax.f32 %v3282, 0.0
        %v3315 = vmax.f32 %v3283, 0.0
        %v3316 = vmax.f32 %v3284, 0.0
        %v3317 = vmax.f32 %v3285, 0.0
        %v3318 = vmax.f32 %v3286, 0.0
        %v3319 = vmax.f32 %v3287, 0.0
        %v3320 = vmax.f32 %v3288, 0.0
        %v3321 = vmax.f32 %v3289, 0.0
        %v3322 = vmax.f32 %v3290, 0.0
        %3323 = vst.msk [vmem:[%s248] sm:$0xff] %vm2278, %v3291
        %3324 = vst.msk [vmem:[%s248 + $0x8] sm:$0xff] %vm2278, %v3292
        %3325 = vst.msk [vmem:[%s248 + $0x10] sm:$0xff] %vm2278, %v3293
        %3326 = vst.msk [vmem:[%s248 + $0x18] sm:$0xff] %vm2278, %v3294
        %3327 = vst.msk [vmem:[%s248 + $0x20] sm:$0xff] %vm2278, %v3295
        %3328 = vst.msk [vmem:[%s248 + $0x28] sm:$0xff] %vm2278, %v3296
        %3329 = vst.msk [vmem:[%s248 + $0x30] sm:$0xff] %vm2278, %v3297
        %3330 = vst.msk [vmem:[%s248 + $0x38] sm:$0xff] %vm2278, %v3298
        %3331 = vst.msk [vmem:[%s248 + $0x40] sm:$0xff] %vm2278, %v3299
        %3332 = vst.msk [vmem:[%s248 + $0x48] sm:$0xff] %vm2278, %v3300
        %3333 = vst.msk [vmem:[%s248 + $0x50] sm:$0xff] %vm2278, %v3301
        %3334 = vst.msk [vmem:[%s248 + $0x58] sm:$0xff] %vm2278, %v3302
        %3335 = vst.msk [vmem:[%s248 + $0x60] sm:$0xff] %vm2278, %v3303
        %3336 = vst.msk [vmem:[%s248 + $0x68] sm:$0xff] %vm2278, %v3304
        %3337 = vst.msk [vmem:[%s248 + $0x70] sm:$0xff] %vm2278, %v3305
        %3338 = vst.msk [vmem:[%s248 + $0x78] sm:$0xff] %vm2278, %v3306
        %3339 = vst.msk [vmem:[%s248 + $0x80] sm:$0xff] %vm2278, %v3307
        %3340 = vst.msk [vmem:[%s248 + $0x88] sm:$0xff] %vm2278, %v3308
        %3341 = vst.msk [vmem:[%s248 + $0x90] sm:$0xff] %vm2278, %v3309
        %3342 = vst.msk [vmem:[%s248 + $0x98] sm:$0xff] %vm2278, %v3310
        %3343 = vst.msk [vmem:[%s248 + $0xa0] sm:$0xff] %vm2278, %v3311
        %3344 = vst.msk [vmem:[%s248 + $0xa8] sm:$0xff] %vm2278, %v3312
        %3345 = vst.msk [vmem:[%s248 + $0xb0] sm:$0xff] %vm2278, %v3313
        %3346 = vst.msk [vmem:[%s248 + $0xb8] sm:$0xff] %vm2278, %v3314
        %3347 = vst.msk [vmem:[%s248 + $0xc0] sm:$0xff] %vm2278, %v3315
        %3348 = vst.msk [vmem:[%s248 + $0xc8] sm:$0xff] %vm2278, %v3316
        %3349 = vst.msk [vmem:[%s248 + $0xd0] sm:$0xff] %vm2278, %v3317
        %3350 = vst.msk [vmem:[%s248 + $0xd8] sm:$0xff] %vm2278, %v3318
        %3351 = vst.msk [vmem:[%s248 + $0xe0] sm:$0xff] %vm2278, %v3319
        %3352 = vst.msk [vmem:[%s248 + $0xe8] sm:$0xff] %vm2278, %v3320
        %3353 = vst.msk [vmem:[%s248 + $0xf0] sm:$0xff] %vm2278, %v3321
        %3354 = vst.msk [vmem:[%s248 + $0xf8] sm:$0xff] %vm2278, %v3322
        %v3355 = vmax.f32 %v3291, %v3293
        %v3356 = vmax.f32 %v3292, %v3294
        %v3357 = vmax.f32 %v3295, %v3297
        %v3358 = vmax.f32 %v3296, %v3298
        %v3359 = vmax.f32 %v3299, %v3301
        %v3360 = vmax.f32 %v3300, %v3302
        %v3361 = vmax.f32 %v3303, %v3305
        %v3362 = vmax.f32 %v3304, %v3306
        %v3363 = vmax.f32 %v3307, %v3309
        %v3364 = vmax.f32 %v3308, %v3310
        %v3365 = vmax.f32 %v3311, %v3313
        %v3366 = vmax.f32 %v3312, %v3314
        %v3367 = vmax.f32 %v3315, %v3317
        %v3368 = vmax.f32 %v3316, %v3318
        %v3369 = vmax.f32 %v3319, %v3321
        %v3370 = vmax.f32 %v3320, %v3322
        %v3387 = vrot.slane %v3355, 2
        %v3388 = vrot.slane %v3355, 4
        %v3389 = vrot.slane %v3355, 6
        %v3390 = vrot.slane %v3356, 2
        %v3391 = vrot.slane %v3356, 4
        %v3392 = vrot.slane %v3356, 6
        %v3393 = vrot.slane %v3357, 2
        %v3394 = vrot.slane %v3357, 4
        %v3395 = vrot.slane %v3357, 6
        %v3396 = vrot.slane %v3358, 2
        %v3397 = vrot.slane %v3358, 4
        %v3398 = vrot.slane %v3358, 6
        %v3399 = vrot.slane %v3359, 2
        %v3400 = vrot.slane %v3359, 4
        %v3401 = vrot.slane %v3359, 6
        %v3402 = vrot.slane %v3360, 2
        %v3403 = vrot.slane %v3360, 4
        %v3404 = vrot.slane %v3360, 6
        %v3405 = vrot.slane %v3361, 2
        %v3406 = vrot.slane %v3361, 4
        %v3407 = vrot.slane %v3361, 6
        %v3408 = vrot.slane %v3362, 2
        %v3409 = vrot.slane %v3362, 4
        %v3410 = vrot.slane %v3362, 6
        %v3411 = vrot.slane %v3363, 2
        %v3412 = vrot.slane %v3363, 4
        %v3413 = vrot.slane %v3363, 6
        %v3414 = vrot.slane %v3364, 2
        %v3415 = vrot.slane %v3364, 4
        %v3416 = vrot.slane %v3364, 6
        %v3417 = vrot.slane %v3365, 2
        %v3418 = vrot.slane %v3365, 4
        %v3419 = vrot.slane %v3365, 6
        %v3420 = vrot.slane %v3366, 2
        %v3421 = vrot.slane %v3366, 4
        %v3422 = vrot.slane %v3366, 6
        %v3423 = vrot.slane %v3367, 2
        %v3424 = vrot.slane %v3367, 4
        %v3425 = vrot.slane %v3367, 6
        %v3426 = vrot.slane %v3368, 2
        %v3427 = vrot.slane %v3368, 4
        %v3428 = vrot.slane %v3368, 6
        %v3429 = vrot.slane %v3369, 2
        %v3430 = vrot.slane %v3369, 4
        %v3431 = vrot.slane %v3369, 6
        %v3432 = vrot.slane %v3370, 2
        %v3433 = vrot.slane %v3370, 4
        %v3434 = vrot.slane %v3370, 6
        %v3483 = vrot.slane %v3355, 7
        %v3484 = vrot.slane %v3483, 2
        %v3485 = vrot.slane %v3387, 7
        %v3486 = vrot.slane %v3485, 2
        %v3487 = vrot.slane %v3388, 7
        %v3488 = vrot.slane %v3487, 2
        %v3489 = vrot.slane %v3389, 7
        %v3490 = vrot.slane %v3489, 2
        %v3491 = vrot.slane %v3356, 7
        %v3492 = vrot.slane %v3491, 2
        %v3493 = vrot.slane %v3390, 7
        %v3494 = vrot.slane %v3493, 2
        %v3495 = vrot.slane %v3391, 7
        %v3496 = vrot.slane %v3495, 2
        %v3497 = vrot.slane %v3392, 7
        %v3498 = vrot.slane %v3497, 2
        %v3499 = vrot.slane %v3357, 7
        %v3500 = vrot.slane %v3499, 2
        %v3501 = vrot.slane %v3393, 7
        %v3502 = vrot.slane %v3501, 2
        %v3503 = vrot.slane %v3394, 7
        %v3504 = vrot.slane %v3503, 2
        %v3505 = vrot.slane %v3395, 7
        %v3506 = vrot.slane %v3505, 2
        %v3507 = vrot.slane %v3358, 7
        %v3508 = vrot.slane %v3507, 2
        %v3509 = vrot.slane %v3396, 7
        %v3510 = vrot.slane %v3509, 2
        %v3511 = vrot.slane %v3397, 7
        %v3512 = vrot.slane %v3511, 2
        %v3513 = vrot.slane %v3398, 7
        %v3514 = vrot.slane %v3513, 2
        %v3515 = vrot.slane %v3359, 7
        %v3516 = vrot.slane %v3515, 2
        %v3517 = vrot.slane %v3399, 7
        %v3518 = vrot.slane %v3517, 2
        %v3519 = vrot.slane %v3400, 7
        %v3520 = vrot.slane %v3519, 2
        %v3521 = vrot.slane %v3401, 7
        %v3522 = vrot.slane %v3521, 2
        %v3523 = vrot.slane %v3360, 7
        %v3524 = vrot.slane %v3523, 2
        %v3525 = vrot.slane %v3402, 7
        %v3526 = vrot.slane %v3525, 2
        %v3527 = vrot.slane %v3403, 7
        %v3528 = vrot.slane %v3527, 2
        %v3529 = vrot.slane %v3404, 7
        %v3530 = vrot.slane %v3529, 2
        %v3531 = vrot.slane %v3361, 7
        %v3532 = vrot.slane %v3531, 2
        %v3533 = vrot.slane %v3405, 7
        %v3534 = vrot.slane %v3533, 2
        %v3535 = vrot.slane %v3406, 7
        %v3536 = vrot.slane %v3535, 2
        %v3537 = vrot.slane %v3407, 7
        %v3538 = vrot.slane %v3537, 2
        %v3539 = vrot.slane %v3362, 7
        %v3540 = vrot.slane %v3539, 2
        %v3541 = vrot.slane %v3408, 7
        %v3542 = vrot.slane %v3541, 2
        %v3543 = vrot.slane %v3409, 7
        %v3544 = vrot.slane %v3543, 2
        %v3545 = vrot.slane %v3410, 7
        %v3546 = vrot.slane %v3545, 2
        %v3547 = vrot.slane %v3363, 7
        %v3548 = vrot.slane %v3547, 2
        %v3549 = vrot.slane %v3411, 7
        %v3550 = vrot.slane %v3549, 2
        %v3551 = vrot.slane %v3412, 7
        %v3552 = vrot.slane %v3551, 2
        %v3553 = vrot.slane %v3413, 7
        %v3554 = vrot.slane %v3553, 2
        %v3555 = vrot.slane %v3364, 7
        %v3556 = vrot.slane %v3555, 2
        %v3557 = vrot.slane %v3414, 7
        %v3558 = vrot.slane %v3557, 2
        %v3559 = vrot.slane %v3415, 7
        %v3560 = vrot.slane %v3559, 2
        %v3561 = vrot.slane %v3416, 7
        %v3562 = vrot.slane %v3561, 2
        %v3563 = vrot.slane %v3365, 7
        %v3564 = vrot.slane %v3563, 2
        %v3565 = vrot.slane %v3417, 7
        %v3566 = vrot.slane %v3565, 2
        %v3567 = vrot.slane %v3418, 7
        %v3568 = vrot.slane %v3567, 2
        %v3569 = vrot.slane %v3419, 7
        %v3570 = vrot.slane %v3569, 2
        %v3571 = vrot.slane %v3366, 7
        %v3572 = vrot.slane %v3571, 2
        %v3573 = vrot.slane %v3420, 7
        %v3574 = vrot.slane %v3573, 2
        %v3575 = vrot.slane %v3421, 7
        %v3576 = vrot.slane %v3575, 2
        %v3577 = vrot.slane %v3422, 7
        %v3578 = vrot.slane %v3577, 2
        %v3579 = vrot.slane %v3367, 7
        %v3580 = vrot.slane %v3579, 2
        %v3581 = vrot.slane %v3423, 7
        %v3582 = vrot.slane %v3581, 2
        %v3583 = vrot.slane %v3424, 7
        %v3584 = vrot.slane %v3583, 2
        %v3585 = vrot.slane %v3425, 7
        %v3586 = vrot.slane %v3585, 2
        %v3587 = vrot.slane %v3368, 7
        %v3588 = vrot.slane %v3587, 2
        %v3589 = vrot.slane %v3426, 7
        %v3590 = vrot.slane %v3589, 2
        %v3591 = vrot.slane %v3427, 7
        %v3592 = vrot.slane %v3591, 2
        %v3593 = vrot.slane %v3428, 7
        %v3594 = vrot.slane %v3593, 2
        %v3595 = vrot.slane %v3369, 7
        %v3596 = vrot.slane %v3595, 2
        %v3597 = vrot.slane %v3429, 7
        %v3598 = vrot.slane %v3597, 2
        %v3599 = vrot.slane %v3430, 7
        %v3600 = vrot.slane %v3599, 2
        %v3601 = vrot.slane %v3431, 7
        %v3602 = vrot.slane %v3601, 2
        %v3603 = vrot.slane %v3370, 7
        %v3604 = vrot.slane %v3603, 2
        %v3605 = vrot.slane %v3432, 7
        %v3606 = vrot.slane %v3605, 2
        %v3607 = vrot.slane %v3433, 7
        %v3608 = vrot.slane %v3607, 2
        %v3609 = vrot.slane %v3434, 7
        %v3610 = vrot.slane %v3609, 2
        %v3675 = vmax.f32 %v3355, %v3484
        %v3676 = vmax.f32 %v3387, %v3486
        %v3677 = vmax.f32 %v3388, %v3488
        %v3678 = vmax.f32 %v3389, %v3490
        %v3679 = vmax.f32 %v3356, %v3492
        %v3680 = vmax.f32 %v3390, %v3494
        %v3681 = vmax.f32 %v3391, %v3496
        %v3682 = vmax.f32 %v3392, %v3498
        %v3683 = vmax.f32 %v3357, %v3500
        %v3684 = vmax.f32 %v3393, %v3502
        %v3685 = vmax.f32 %v3394, %v3504
        %v3686 = vmax.f32 %v3395, %v3506
        %v3687 = vmax.f32 %v3358, %v3508
        %v3688 = vmax.f32 %v3396, %v3510
        %v3689 = vmax.f32 %v3397, %v3512
        %v3690 = vmax.f32 %v3398, %v3514
        %v3691 = vmax.f32 %v3359, %v3516
        %v3692 = vmax.f32 %v3399, %v3518
        %v3693 = vmax.f32 %v3400, %v3520
        %v3694 = vmax.f32 %v3401, %v3522
        %v3695 = vmax.f32 %v3360, %v3524
        %v3696 = vmax.f32 %v3402, %v3526
        %v3697 = vmax.f32 %v3403, %v3528
        %v3698 = vmax.f32 %v3404, %v3530
        %v3699 = vmax.f32 %v3361, %v3532
        %v3700 = vmax.f32 %v3405, %v3534
        %v3701 = vmax.f32 %v3406, %v3536
        %v3702 = vmax.f32 %v3407, %v3538
        %v3703 = vmax.f32 %v3362, %v3540
        %v3704 = vmax.f32 %v3408, %v3542
        %v3705 = vmax.f32 %v3409, %v3544
        %v3706 = vmax.f32 %v3410, %v3546
        %v3707 = vmax.f32 %v3363, %v3548
        %v3708 = vmax.f32 %v3411, %v3550
        %v3709 = vmax.f32 %v3412, %v3552
        %v3710 = vmax.f32 %v3413, %v3554
        %v3711 = vmax.f32 %v3364, %v3556
        %v3712 = vmax.f32 %v3414, %v3558
        %v3713 = vmax.f32 %v3415, %v3560
        %v3714 = vmax.f32 %v3416, %v3562
        %v3715 = vmax.f32 %v3365, %v3564
        %v3716 = vmax.f32 %v3417, %v3566
        %v3717 = vmax.f32 %v3418, %v3568
        %v3718 = vmax.f32 %v3419, %v3570
        %v3719 = vmax.f32 %v3366, %v3572
        %v3720 = vmax.f32 %v3420, %v3574
        %v3721 = vmax.f32 %v3421, %v3576
        %v3722 = vmax.f32 %v3422, %v3578
        %v3723 = vmax.f32 %v3367, %v3580
        %v3724 = vmax.f32 %v3423, %v3582
        %v3725 = vmax.f32 %v3424, %v3584
        %v3726 = vmax.f32 %v3425, %v3586
        %v3727 = vmax.f32 %v3368, %v3588
        %v3728 = vmax.f32 %v3426, %v3590
        %v3729 = vmax.f32 %v3427, %v3592
        %v3730 = vmax.f32 %v3428, %v3594
        %v3731 = vmax.f32 %v3369, %v3596
        %v3732 = vmax.f32 %v3429, %v3598
        %v3733 = vmax.f32 %v3430, %v3600
        %v3734 = vmax.f32 %v3431, %v3602
        %v3735 = vmax.f32 %v3370, %v3604
        %v3736 = vmax.f32 %v3432, %v3606
        %v3737 = vmax.f32 %v3433, %v3608
        %v3738 = vmax.f32 %v3434, %v3610
        %v3739 = vpack.c.bf16 %v3675, %v3675
        %v3740 = vpack.c.bf16 %v3676, %v3676
        %v3741 = vpack.c.bf16 %v3677, %v3677
        %v3742 = vpack.c.bf16 %v3678, %v3678
        %v3743 = vpack.c.bf16 %v3679, %v3679
        %v3744 = vpack.c.bf16 %v3680, %v3680
        %v3745 = vpack.c.bf16 %v3681, %v3681
        %v3746 = vpack.c.bf16 %v3682, %v3682
        %v3747 = vpack.c.bf16 %v3683, %v3683
        %v3748 = vpack.c.bf16 %v3684, %v3684
        %v3749 = vpack.c.bf16 %v3685, %v3685
        %v3750 = vpack.c.bf16 %v3686, %v3686
        %v3751 = vpack.c.bf16 %v3687, %v3687
        %v3752 = vpack.c.bf16 %v3688, %v3688
        %v3753 = vpack.c.bf16 %v3689, %v3689
        %v3754 = vpack.c.bf16 %v3690, %v3690
        %v3755 = vpack.c.bf16 %v3691, %v3691
        %v3756 = vpack.c.bf16 %v3692, %v3692
        %v3757 = vpack.c.bf16 %v3693, %v3693
        %v3758 = vpack.c.bf16 %v3694, %v3694
        %v3759 = vpack.c.bf16 %v3695, %v3695
        %v3760 = vpack.c.bf16 %v3696, %v3696
        %v3761 = vpack.c.bf16 %v3697, %v3697
        %v3762 = vpack.c.bf16 %v3698, %v3698
        %v3763 = vpack.c.bf16 %v3699, %v3699
        %v3764 = vpack.c.bf16 %v3700, %v3700
        %v3765 = vpack.c.bf16 %v3701, %v3701
        %v3766 = vpack.c.bf16 %v3702, %v3702
        %v3767 = vpack.c.bf16 %v3703, %v3703
        %v3768 = vpack.c.bf16 %v3704, %v3704
        %v3769 = vpack.c.bf16 %v3705, %v3705
        %v3770 = vpack.c.bf16 %v3706, %v3706
        %v3771 = vpack.c.bf16 %v3707, %v3707
        %v3772 = vpack.c.bf16 %v3708, %v3708
        %v3773 = vpack.c.bf16 %v3709, %v3709
        %v3774 = vpack.c.bf16 %v3710, %v3710
        %v3775 = vpack.c.bf16 %v3711, %v3711
        %v3776 = vpack.c.bf16 %v3712, %v3712
        %v3777 = vpack.c.bf16 %v3713, %v3713
        %v3778 = vpack.c.bf16 %v3714, %v3714
        %v3779 = vpack.c.bf16 %v3715, %v3715
        %v3780 = vpack.c.bf16 %v3716, %v3716
        %v3781 = vpack.c.bf16 %v3717, %v3717
        %v3782 = vpack.c.bf16 %v3718, %v3718
        %v3783 = vpack.c.bf16 %v3719, %v3719
        %v3784 = vpack.c.bf16 %v3720, %v3720
        %v3785 = vpack.c.bf16 %v3721, %v3721
        %v3786 = vpack.c.bf16 %v3722, %v3722
        %v3787 = vpack.c.bf16 %v3723, %v3723
        %v3788 = vpack.c.bf16 %v3724, %v3724
        %v3789 = vpack.c.bf16 %v3725, %v3725
        %v3790 = vpack.c.bf16 %v3726, %v3726
        %v3791 = vpack.c.bf16 %v3727, %v3727
        %v3792 = vpack.c.bf16 %v3728, %v3728
        %v3793 = vpack.c.bf16 %v3729, %v3729
        %v3794 = vpack.c.bf16 %v3730, %v3730
        %v3795 = vpack.c.bf16 %v3731, %v3731
        %v3796 = vpack.c.bf16 %v3732, %v3732
        %v3797 = vpack.c.bf16 %v3733, %v3733
        %v3798 = vpack.c.bf16 %v3734, %v3734
        %v3799 = vpack.c.bf16 %v3735, %v3735
        %v3800 = vpack.c.bf16 %v3736, %v3736
        %v3801 = vpack.c.bf16 %v3737, %v3737
        %v3802 = vpack.c.bf16 %v3738, %v3738
        %v3867 = vunpack.c.l.b16 %v3739
        %v3868 = vunpack.c.l.b16 %v3740
        %v3869 = vunpack.c.l.b16 %v3741
        %v3870 = vunpack.c.l.b16 %v3742
        %v3871 = vunpack.c.l.b16 %v3743
        %v3872 = vunpack.c.l.b16 %v3744
        %v3873 = vunpack.c.l.b16 %v3745
        %v3874 = vunpack.c.l.b16 %v3746
        %v3875 = vunpack.c.l.b16 %v3747
        %v3876 = vunpack.c.l.b16 %v3748
        %v3877 = vunpack.c.l.b16 %v3749
        %v3878 = vunpack.c.l.b16 %v3750
        %v3879 = vunpack.c.l.b16 %v3751
        %v3880 = vunpack.c.l.b16 %v3752
        %v3881 = vunpack.c.l.b16 %v3753
        %v3882 = vunpack.c.l.b16 %v3754
        %v3883 = vunpack.c.l.b16 %v3755
        %v3884 = vunpack.c.l.b16 %v3756
        %v3885 = vunpack.c.l.b16 %v3757
        %v3886 = vunpack.c.l.b16 %v3758
        %v3887 = vunpack.c.l.b16 %v3759
        %v3888 = vunpack.c.l.b16 %v3760
        %v3889 = vunpack.c.l.b16 %v3761
        %v3890 = vunpack.c.l.b16 %v3762
        %v3891 = vunpack.c.l.b16 %v3763
        %v3892 = vunpack.c.l.b16 %v3764
        %v3893 = vunpack.c.l.b16 %v3765
        %v3894 = vunpack.c.l.b16 %v3766
        %v3895 = vunpack.c.l.b16 %v3767
        %v3896 = vunpack.c.l.b16 %v3768
        %v3897 = vunpack.c.l.b16 %v3769
        %v3898 = vunpack.c.l.b16 %v3770
        %v3899 = vunpack.c.l.b16 %v3771
        %v3900 = vunpack.c.l.b16 %v3772
        %v3901 = vunpack.c.l.b16 %v3773
        %v3902 = vunpack.c.l.b16 %v3774
        %v3903 = vunpack.c.l.b16 %v3775
        %v3904 = vunpack.c.l.b16 %v3776
        %v3905 = vunpack.c.l.b16 %v3777
        %v3906 = vunpack.c.l.b16 %v3778
        %v3907 = vunpack.c.l.b16 %v3779
        %v3908 = vunpack.c.l.b16 %v3780
        %v3909 = vunpack.c.l.b16 %v3781
        %v3910 = vunpack.c.l.b16 %v3782
        %v3911 = vunpack.c.l.b16 %v3783
        %v3912 = vunpack.c.l.b16 %v3784
        %v3913 = vunpack.c.l.b16 %v3785
        %v3914 = vunpack.c.l.b16 %v3786
        %v3915 = vunpack.c.l.b16 %v3787
        %v3916 = vunpack.c.l.b16 %v3788
        %v3917 = vunpack.c.l.b16 %v3789
        %v3918 = vunpack.c.l.b16 %v3790
        %v3919 = vunpack.c.l.b16 %v3791
        %v3920 = vunpack.c.l.b16 %v3792
        %v3921 = vunpack.c.l.b16 %v3793
        %v3922 = vunpack.c.l.b16 %v3794
        %v3923 = vunpack.c.l.b16 %v3795
        %v3924 = vunpack.c.l.b16 %v3796
        %v3925 = vunpack.c.l.b16 %v3797
        %v3926 = vunpack.c.l.b16 %v3798
        %v3927 = vunpack.c.l.b16 %v3799
        %v3928 = vunpack.c.l.b16 %v3800
        %v3929 = vunpack.c.l.b16 %v3801
        %v3930 = vunpack.c.l.b16 %v3802
        %v3931 = vrot.slane %v3868, 7
        %vm3932 = vcmask 1041409
        %v3933 = vsel %vm3932, %v3931, %v3867
        %v3934 = vrot.slane %v3869, 6
        %vm3935 = vcmask 1042434
        %v3936 = vsel %vm3935, %v3934, %v3933
        %v3937 = vrot.slane %v3870, 5
        %vm3938 = vcmask 1043459
        %v3939 = vsel %vm3938, %v3937, %v3936
        %v3940 = vrot.slane %v3871, 4
        %vm3941 = vcmask 1044484
        %v3942 = vsel %vm3941, %v3940, %v3939
        %v3943 = vrot.slane %v3872, 3
        %vm3944 = vcmask 1045509
        %v3945 = vsel %vm3944, %v3943, %v3942
        %v3946 = vrot.slane %v3873, 2
        %vm3947 = vcmask 1046534
        %v3948 = vsel %vm3947, %v3946, %v3945
        %v3949 = vrot.slane %v3874, 1
        %vm3950 = vcmask 1047559
        %v3951 = vsel %vm3950, %v3949, %v3948
        %v3952 = vrot.slane %v3876, 7
        %v3953 = vsel %vm3932, %v3952, %v3875
        %v3954 = vrot.slane %v3877, 6
        %v3955 = vsel %vm3935, %v3954, %v3953
        %v3956 = vrot.slane %v3878, 5
        %v3957 = vsel %vm3938, %v3956, %v3955
        %v3958 = vrot.slane %v3879, 4
        %v3959 = vsel %vm3941, %v3958, %v3957
        %v3960 = vrot.slane %v3880, 3
        %v3961 = vsel %vm3944, %v3960, %v3959
        %v3962 = vrot.slane %v3881, 2
        %v3963 = vsel %vm3947, %v3962, %v3961
        %v3964 = vrot.slane %v3882, 1
        %v3965 = vsel %vm3950, %v3964, %v3963
        %v3966 = vrot.slane %v3884, 7
        %v3967 = vsel %vm3932, %v3966, %v3883
        %v3968 = vrot.slane %v3885, 6
        %v3969 = vsel %vm3935, %v3968, %v3967
        %v3970 = vrot.slane %v3886, 5
        %v3971 = vsel %vm3938, %v3970, %v3969
        %v3972 = vrot.slane %v3887, 4
        %v3973 = vsel %vm3941, %v3972, %v3971
        %v3974 = vrot.slane %v3888, 3
        %v3975 = vsel %vm3944, %v3974, %v3973
        %v3976 = vrot.slane %v3889, 2
        %v3977 = vsel %vm3947, %v3976, %v3975
        %v3978 = vrot.slane %v3890, 1
        %v3979 = vsel %vm3950, %v3978, %v3977
        %v3980 = vrot.slane %v3892, 7
        %v3981 = vsel %vm3932, %v3980, %v3891
        %v3982 = vrot.slane %v3893, 6
        %v3983 = vsel %vm3935, %v3982, %v3981
        %v3984 = vrot.slane %v3894, 5
        %v3985 = vsel %vm3938, %v3984, %v3983
        %v3986 = vrot.slane %v3895, 4
        %v3987 = vsel %vm3941, %v3986, %v3985
        %v3988 = vrot.slane %v3896, 3
        %v3989 = vsel %vm3944, %v3988, %v3987
        %v3990 = vrot.slane %v3897, 2
        %v3991 = vsel %vm3947, %v3990, %v3989
        %v3992 = vrot.slane %v3898, 1
        %v3993 = vsel %vm3950, %v3992, %v3991
        %v3994 = vrot.slane %v3900, 7
        %v3995 = vsel %vm3932, %v3994, %v3899
        %v3996 = vrot.slane %v3901, 6
        %v3997 = vsel %vm3935, %v3996, %v3995
        %v3998 = vrot.slane %v3902, 5
        %v3999 = vsel %vm3938, %v3998, %v3997
        %v4000 = vrot.slane %v3903, 4
        %v4001 = vsel %vm3941, %v4000, %v3999
        %v4002 = vrot.slane %v3904, 3
        %v4003 = vsel %vm3944, %v4002, %v4001
        %v4004 = vrot.slane %v3905, 2
        %v4005 = vsel %vm3947, %v4004, %v4003
        %v4006 = vrot.slane %v3906, 1
        %v4007 = vsel %vm3950, %v4006, %v4005
        %v4008 = vrot.slane %v3908, 7
        %v4009 = vsel %vm3932, %v4008, %v3907
        %v4010 = vrot.slane %v3909, 6
        %v4011 = vsel %vm3935, %v4010, %v4009
        %v4012 = vrot.slane %v3910, 5
        %v4013 = vsel %vm3938, %v4012, %v4011
        %v4014 = vrot.slane %v3911, 4
        %v4015 = vsel %vm3941, %v4014, %v4013
        %v4016 = vrot.slane %v3912, 3
        %v4017 = vsel %vm3944, %v4016, %v4015
        %v4018 = vrot.slane %v3913, 2
        %v4019 = vsel %vm3947, %v4018, %v4017
        %v4020 = vrot.slane %v3914, 1
        %v4021 = vsel %vm3950, %v4020, %v4019
        %v4022 = vrot.slane %v3916, 7
        %v4023 = vsel %vm3932, %v4022, %v3915
        %v4024 = vrot.slane %v3917, 6
        %v4025 = vsel %vm3935, %v4024, %v4023
        %v4026 = vrot.slane %v3918, 5
        %v4027 = vsel %vm3938, %v4026, %v4025
        %v4028 = vrot.slane %v3919, 4
        %v4029 = vsel %vm3941, %v4028, %v4027
        %v4030 = vrot.slane %v3920, 3
        %v4031 = vsel %vm3944, %v4030, %v4029
        %v4032 = vrot.slane %v3921, 2
        %v4033 = vsel %vm3947, %v4032, %v4031
        %v4034 = vrot.slane %v3922, 1
        %v4035 = vsel %vm3950, %v4034, %v4033
        %v4036 = vrot.slane %v3924, 7
        %v4037 = vsel %vm3932, %v4036, %v3923
        %v4038 = vrot.slane %v3925, 6
        %v4039 = vsel %vm3935, %v4038, %v4037
        %v4040 = vrot.slane %v3926, 5
        %v4041 = vsel %vm3938, %v4040, %v4039
        %v4042 = vrot.slane %v3927, 4
        %v4043 = vsel %vm3941, %v4042, %v4041
        %v4044 = vrot.slane %v3928, 3
        %v4045 = vsel %vm3944, %v4044, %v4043
        %v4046 = vrot.slane %v3929, 2
        %v4047 = vsel %vm3947, %v4046, %v4045
        %v4048 = vrot.slane %v3930, 1
        %v4049 = vsel %vm3950, %v4048, %v4047
        %v4050 = vpack.c.b16 %v3951, %v3951
        %v4051 = vpack.c.b16 %v3965, %v3965
        %v4052 = vpack.c.b16 %v3979, %v3979
        %v4053 = vpack.c.b16 %v3993, %v3993
        %v4054 = vpack.c.b16 %v4007, %v4007
        %v4055 = vpack.c.b16 %v4021, %v4021
        %v4056 = vpack.c.b16 %v4035, %v4035
        %v4057 = vpack.c.b16 %v4049, %v4049
        %vm4066 = vcmask 519168
        %4067 = vst.msk [vmem:[%s255] sm:$0xf] %vm4066, %v4050
        %4068 = vst.msk [vmem:[%s255 + $0x4] sm:$0xf] %vm4066, %v4051
        %4069 = vst.msk [vmem:[%s255 + $0x8] sm:$0xf] %vm4066, %v4052
        %4070 = vst.msk [vmem:[%s255 + $0xc] sm:$0xf] %vm4066, %v4053
        %4071 = vst.msk [vmem:[%s255 + $0x10] sm:$0xf] %vm4066, %v4054
        %4072 = vst.msk [vmem:[%s255 + $0x14] sm:$0xf] %vm4066, %v4055
        %4073 = vst.msk [vmem:[%s255 + $0x18] sm:$0xf] %vm4066, %v4056
        %4074 = vst.msk [vmem:[%s255 + $0x1c] sm:$0xf] %vm4066, %v4057
        %s4075 = sand.u32 %s142, 1
        %s4076 = scalar_lea.sflag [#allocation3], %s4075
        %s4077 = sand.u32 %s142, 1
        %s4078 = smul.addr %s4077, 256
        %s4079 = scalar_lea.vmem [#allocation2], %s4078
        %s4080 = sand.u32 %s168, 1
        %s4081 = scalar_lea.sflag [#allocation5], %s4080
        %s4082 = sand.u32 %s168, 1
        %s4083 = smul.addr %s4082, 32
        %s4084 = scalar_lea.vmem [#allocation4], %s4083
        // Predicated region
        $region41: #{tpu_custom_call.1} parent=39 // pred_check
          %p4085 = pneg %p152
        $region42: #{tpu_custom_call.1} parent=39 // pred_check_branch
          %4087 = sbr.rel (%p4085) target = $region44
        $region43: #{tpu_custom_call.1} parent=39 // pred_region
          %4089 = vsyncadd %s4076, 0
          %s4090 = smul.addr %s24, 32
          %s4091 = smul.addr %s4090, 8
          %s4092 = scalar_lea.hbm %s5, %s4091
          %s4093 = sshll.u32 %s4079, 4
          %s4094 = int_to_ptr.vmem [resolvable:$true] %s4093
          %s4095 = sshll.u32 %s4092, 4
          %s4096 = int_to_ptr.hbm [resolvable:$true] %s4095
          %4101 = dma.vmem_to_hbm [thread:$0]  %s4094, 4096, %s4096, %s4076, 128, 128, 8
        $region44: #{tpu_custom_call.1} parent=39 // pred_fallthru
          _
        // Predicated region
        $region45: #{tpu_custom_call.1} parent=39 // pred_check
          %p4102 = pneg %p178
        $region46: #{tpu_custom_call.1} parent=39 // pred_check_branch
          %4104 = sbr.rel (%p4102) target = $region48
        $region47: #{tpu_custom_call.1} parent=39 // pred_region
          %4106 = vsyncadd %s4081, 0
          %s4107 = smul.addr %s24, 8
          %s4108 = smul.addr %s4107, 4
          %s4109 = scalar_lea.hbm %s6, %s4108
          %s4110 = sshll.u32 %s4084, 4
          %s4111 = int_to_ptr.vmem [resolvable:$true] %s4110
          %s4112 = sshll.u32 %s4109, 4
          %s4113 = int_to_ptr.hbm [resolvable:$true] %s4112
          %4118 = dma.vmem_to_hbm [thread:$0]  %s4111, 512, %s4113, %s4081, 64, 64, 4
        $region48: #{tpu_custom_call.1} parent=39 // pred_fallthru
          _
      $region40: #{tpu_custom_call.1} parent=5 // pred_fallthru
        _
      %p4119 = scmp.le.s32.totalorder 2, %s19
      // Predicated region
      $region49: #{tpu_custom_call.1} parent=5 // pred_check
        %p4120 = pneg %p4119
      $region50: #{tpu_custom_call.1} parent=5 // pred_check_branch
        %4122 = sbr.rel (%p4120) target = $region52
      $region51: #{tpu_custom_call.1} parent=5 // pred_region
        %s4123 = ssub.s32 %s19, 2
        // Predicated region
        $region53: #{tpu_custom_call.1} parent=51 // pred_check
          %p4124 = pneg %p158
        $region54: #{tpu_custom_call.1} parent=51 // pred_check_branch
          %4126 = sbr.rel (%p4124) target = $region56
        $region55: #{tpu_custom_call.1} parent=51 // pred_region
          %s4127 = sand.u32 %s143, 1
          %s4128 = scalar_lea.sflag [#allocation3], %s4127
          %s4129 = sand.u32 %s143, 1
          %s4130 = smul.addr %s4129, 256
          %s4131 = scalar_lea.vmem [#allocation2], %s4130
          %4133 = dma.done %s4128, 4096
        $region56: #{tpu_custom_call.1} parent=51 // pred_fallthru
          _
        // Predicated region
        $region57: #{tpu_custom_call.1} parent=51 // pred_check
          %p4134 = pneg %p184
        $region58: #{tpu_custom_call.1} parent=51 // pred_check_branch
          %4136 = sbr.rel (%p4134) target = $region60
        $region59: #{tpu_custom_call.1} parent=51 // pred_region
          %s4137 = sand.u32 %s169, 1
          %s4138 = scalar_lea.sflag [#allocation5], %s4137
          %s4139 = sand.u32 %s169, 1
          %s4140 = smul.addr %s4139, 32
          %s4141 = scalar_lea.vmem [#allocation4], %s4140
          %4143 = dma.done %s4138, 512
        $region60: #{tpu_custom_call.1} parent=51 // pred_fallthru
          _
      $region52: #{tpu_custom_call.1} parent=5 // pred_fallthru
        _
    $region6: #{tpu_custom_call.1} parent=1 // loop_footer
      %s23 = sadd.s32 1, %s19
    $region7: #{tpu_custom_call.1} parent=1 // loop_footer_branch
      %18 = sbr.rel target = $region3
    $region8: #{tpu_custom_call.1} parent=1 // loop_exit
      _
    %4144 = vsyncpa [#allocation3], 1
    %s4145 = scalar_lea.sflag [#allocation3], 1
    %4146 = vsyncpa %s4145, 1
    %4147 = vsyncpa [#allocation5], 1
    %s4148 = scalar_lea.sflag [#allocation5], 1
    %4149 = vsyncpa %s4148, 1

</llo_original>
